<compile_context>
chip_gen: v7x
topology: tpu7x:2x2x1
jax: 0.10.0
libtpu: 0.0.40
codegen_flags: <defaults>
</compile_context>

<pallas_src>
import functools

import numpy as np
import jax
import jax.numpy as jnp
from jax import lax
from jax.experimental import pallas as pl
from jax.experimental.pallas import tpu as pltpu

# Lane-dense per-plane partial-sum tile (one (8,128) vreg tile per plane).
_OUT_SUB = 8
_OUT_LANE = 128


def _gaussian_1d(window_size, sigma=1.5):
    xs = np.arange(window_size)
    g = np.exp(-((xs - window_size // 2) ** 2) / (2.0 * sigma ** 2))
    return g / g.sum()


def _band_right(n, g):
    # M[j, i] = g[j - i + pad] for |j - i| <= pad, else 0.
    # Right-multiplication x @ M == 1-D zero-padded 'same' cross-correlation
    # of each row of x with g (matching F.conv2d padding semantics).
    ws = len(g)
    pad = ws // 2
    m = np.zeros((n, n), np.float64)
    for i in range(n):
        for dj in range(-pad, pad + 1):
            j = i + dj
            if 0 <= j < n:
                m[j, i] = g[dj + pad]
    return m


def _ssim_kernel(x1_ref, x2_ref, a_ref, b_ref, out_ref, s_ref, *, h, w):
    # x1_ref/x2_ref: (1, H, W) native dtype -> cast to f32 in-kernel (VPU).
    # a_ref: (H, H) vertical Gaussian band (conv_v(x) = a @ x).
    # b_ref: (W, W) horizontal Gaussian band (conv_h(x) = x @ b).
    # out_ref: (1, 8, 128) lane-dense per-plane partial-sum tile.
    # s_ref:  (H, 5W) VMEM scratch holding the five lane-packed conv operands.
    x1 = x1_ref[0].astype(jnp.float32)            # (H, W)
    x2 = x2_ref[0].astype(jnp.float32)            # (H, W)

    # Lane-pack the five conv operands (slice writes, no concatenate temp).
    s_ref[:, 0 * w:1 * w] = x1
    s_ref[:, 1 * w:2 * w] = x2
    s_ref[:, 2 * w:3 * w] = x1 * x1
    s_ref[:, 3 * w:4 * w] = x2 * x2
    s_ref[:, 4 * w:5 * w] = x1 * x2

    dot = functools.partial(jnp.dot,
                            preferred_element_type=jnp.float32,
                            precision=lax.Precision.HIGHEST)

    # Vertical Gaussian pass for all five operands at once: one MXU matmul
    # with lane width 5W (fills the 256-wide MXU once W >= 52).
    v = dot(a_ref[...], s_ref[...])               # (H, 5W)

    # Horizontal Gaussian pass: block-diagonal structure applied directly,
    # five small matmuls against the single shared (W, W) band.
    b = b_ref[...]
    mu1 = dot(v[:, 0 * w:1 * w], b)
    mu2 = dot(v[:, 1 * w:2 * w], b)
    e11 = dot(v[:, 2 * w:3 * w], b)
    e22 = dot(v[:, 3 * w:4 * w], b)
    e12 = dot(v[:, 4 * w:5 * w], b)

    mu1_sq = mu1 * mu1
    mu2_sq = mu2 * mu2
    mu1_mu2 = mu1 * mu2
    sigma1_sq = e11 - mu1_sq
    sigma2_sq = e22 - mu2_sq
    sigma12 = e12 - mu1_mu2

    c1 = 0.01 ** 2
    c2 = 0.03 ** 2
    num = (2.0 * mu1_mu2 + c1) * (2.0 * sigma12 + c2)
    den = (mu1_sq + mu2_sq + c1) * (sigma1_sq + sigma2_sq + c2)
    ssim_map = num / den

    plane_sum = jnp.sum(ssim_map)
    # Splat the per-plane sum across a full (8,128) tile -> unmasked store.
    out_ref[...] = jnp.full((1, _OUT_SUB, _OUT_LANE), plane_sum,
                            dtype=jnp.float32)


def ssim_pallas(img1, img2, window_size=11, size_average=True):
    assert img1.shape == img2.shape
    B, C, H, W = img1.shape
    N = B * C

    # Banded (truncated-Toeplitz) Gaussian matrices: zero 'same' padding is
    # folded in, so no image padding and no kron'ed block-diagonals needed.
    g = _gaussian_1d(window_size)
    b_mat = jnp.asarray(_band_right(W, g), jnp.float32)      # conv_h: x @ b
    a_mat = jnp.asarray(_band_right(H, g).T, jnp.float32)    # conv_v: a @ x

    # Free reshape only -- no transpose, no dtype cast in the wrapper.
    x1 = img1.reshape(N, H, W)
    x2 = img2.reshape(N, H, W)

    kernel = functools.partial(_ssim_kernel, h=H, w=W)

    flops = N * (2 * H * H * 5 * W + 5 * 2 * H * W * W)
    bytes_accessed = (2 * N * H * W * img1.dtype.itemsize
                      + (H * H + W * W) * 4
                      + N * _OUT_SUB * _OUT_LANE * 4)

    partial_sums = pl.pallas_call(
        kernel,
        out_shape=jax.ShapeDtypeStruct((N, _OUT_SUB, _OUT_LANE), jnp.float32),
        grid_spec=pltpu.PrefetchScalarGridSpec(
            num_scalar_prefetch=0,
            grid=(N,),
            in_specs=[
                pl.BlockSpec((1, H, W), lambda n: (n, 0, 0)),
                pl.BlockSpec((1, H, W), lambda n: (n, 0, 0)),
                # Constant index maps: fetched once, never re-DMA'd.
                pl.BlockSpec((H, H), lambda n: (0, 0)),
                pl.BlockSpec((W, W), lambda n: (0, 0)),
            ],
            out_specs=pl.BlockSpec((1, _OUT_SUB, _OUT_LANE),
                                   lambda n: (n, 0, 0)),
            scratch_shapes=[pltpu.VMEM((H, 5 * W), jnp.float32)],
        ),
        compiler_params=pltpu.CompilerParams(
            dimension_semantics=("parallel",)),
        cost_estimate=pl.CostEstimate(
            flops=int(flops),
            transcendentals=0,
            bytes_accessed=int(bytes_accessed)),
    )(x1, x2, a_mat, b_mat)

    plane_sums = partial_sums[:, 0, 0]                        # (N,)
    if size_average:
        return jnp.sum(plane_sums) / float(N * H * W)
    # Per-image mean: mean over (C, H, W) for each batch element.
    return jnp.sum(plane_sums.reshape(B, C), axis=1) / float(C * H * W)


def ssim_map_reference_np(img1, img2, window_size=11):
    # Exact float64 numpy reference mirroring PyTorch _ssim
    # (2-D Gaussian window, depthwise conv, 'same' zero padding).
    img1 = np.asarray(img1, np.float64)
    img2 = np.asarray(img2, np.float64)
    _, _, H, W = img1.shape
    g = _gaussian_1d(window_size)
    w2d = np.outer(g, g)
    pad = window_size // 2

    def conv(x):
        xp = np.pad(x, ((0, 0), (0, 0), (pad, pad), (pad, pad)))
        out = np.zeros_like(x)
        for dy in range(window_size):
            for dx in range(window_size):
                out += w2d[dy, dx] * xp[:, :, dy:dy + H, dx:dx + W]
        return out

    mu1, mu2 = conv(img1), conv(img2)
    mu1_sq, mu2_sq, mu1_mu2 = mu1 * mu1, mu2 * mu2, mu1 * mu2
    s1 = conv(img1 * img1) - mu1_sq
    s2 = conv(img2 * img2) - mu2_sq
    s12 = conv(img1 * img2) - mu1_mu2
    c1, c2 = 0.01 ** 2, 0.03 ** 2
    return ((2 * mu1_mu2 + c1) * (2 * s12 + c2)) / (
        (mu1_sq + mu2_sq + c1) * (s1 + s2 + c2))


if __name__ == "__main__":
    key = jax.random.PRNGKey(0)
    k1, k2 = jax.random.split(key)
    B, C, H, W = 2, 4, 16, 16
    img1 = jax.random.uniform(k1, (B, C, H, W), dtype=jnp.float32)
    img2 = jax.random.uniform(k2, (B, C, H, W), dtype=jnp.float32)

    ref_map = ssim_map_reference_np(np.asarray(img1), np.asarray(img2))

    # size_average=True (module default): global mean.
    out = jax.block_until_ready(ssim_pallas(img1, img2))
    ref = ref_map.mean()
    assert jnp.allclose(out, ref, rtol=1e-4, atol=1e-4), (float(out), float(ref))

    # size_average=False: per-image mean.
    out_b = jax.block_until_ready(ssim_pallas(img1, img2, size_average=False))
    ref_b = ref_map.mean(axis=(1, 2, 3))
    assert np.allclose(np.asarray(out_b), ref_b, rtol=1e-4, atol=1e-4), (
        np.asarray(out_b), ref_b)

    print("KERNEL_OK")
</pallas_src>

<mosaic_0001>
module attributes {stable_mosaic.version = 11 : i64} {
  func.func @_ssim_kernel(%arg0: i32, %arg1: memref<1x16x16xf32, #tpu.memory_space<vmem>>, %arg2: memref<1x16x16xf32, #tpu.memory_space<vmem>>, %arg3: memref<16x16xf32, #tpu.memory_space<vmem>>, %arg4: memref<16x16xf32, #tpu.memory_space<vmem>>, %arg5: memref<1x8x128xf32, #tpu.memory_space<vmem>>, %arg6: memref<16x80xf32, #tpu.memory_space<vmem>>) attributes {dimension_semantics = [#tpu.dimension_semantics<parallel>], iteration_bounds = array<i64: 8>, scalar_prefetch = 0 : i64, scratch_operands = 1 : i64, tpu.core_type = #tpu.core_type<tc>, window_params = [{transform_indices = @transform_0, window_bounds = array<i64: 1, 16, 16>}, {transform_indices = @transform_1, window_bounds = array<i64: 1, 16, 16>}, {pipeline_mode = #tpu.pipeline_mode<synchronous>, transform_indices = @transform_2, window_bounds = array<i64: 16, 16>}, {pipeline_mode = #tpu.pipeline_mode<synchronous>, transform_indices = @transform_3, window_bounds = array<i64: 16, 16>}, {transform_indices = @transform_4, window_bounds = array<i64: 1, 8, 128>}]} {
    %c0 = arith.constant 0 : index
    %c0_0 = arith.constant 0 : index
    %c0_1 = arith.constant 0 : index
    %0 = vector.load %arg1[%c0, %c0_0, %c0_1] : memref<1x16x16xf32, #tpu.memory_space<vmem>>, vector<1x16x16xf32>
    %1 = vector.shape_cast %0 : vector<1x16x16xf32> to vector<16x16xf32>
    %c0_2 = arith.constant 0 : index
    %c0_3 = arith.constant 0 : index
    %c0_4 = arith.constant 0 : index
    %2 = vector.load %arg2[%c0_2, %c0_3, %c0_4] : memref<1x16x16xf32, #tpu.memory_space<vmem>>, vector<1x16x16xf32>
    %3 = vector.shape_cast %2 : vector<1x16x16xf32> to vector<16x16xf32>
    %c0_5 = arith.constant 0 : index
    %c0_6 = arith.constant 0 : index
    %4 = vector.load %arg6[%c0_5, %c0_6] : memref<16x80xf32, #tpu.memory_space<vmem>>, vector<16x16xf32>
    tpu.vector_store %arg6[%c0_5, %c0_6], %1 {strides = array<i32>} : memref<16x80xf32, #tpu.memory_space<vmem>>, vector<16x16xf32>,
    %c0_7 = arith.constant 0 : index
    %c16 = arith.constant 16 : index
    %5 = vector.load %arg6[%c0_7, %c16] : memref<16x80xf32, #tpu.memory_space<vmem>>, vector<16x16xf32>
    tpu.vector_store %arg6[%c0_7, %c16], %3 {strides = array<i32>} : memref<16x80xf32, #tpu.memory_space<vmem>>, vector<16x16xf32>,
    %6 = arith.mulf %1, %1 : vector<16x16xf32>
    %c0_8 = arith.constant 0 : index
    %c32 = arith.constant 32 : index
    %7 = vector.load %arg6[%c0_8, %c32] : memref<16x80xf32, #tpu.memory_space<vmem>>, vector<16x16xf32>
    tpu.vector_store %arg6[%c0_8, %c32], %6 {strides = array<i32>} : memref<16x80xf32, #tpu.memory_space<vmem>>, vector<16x16xf32>,
    %8 = arith.mulf %3, %3 : vector<16x16xf32>
    %c0_9 = arith.constant 0 : index
    %c48 = arith.constant 48 : index
    %9 = vector.load %arg6[%c0_9, %c48] : memref<16x80xf32, #tpu.memory_space<vmem>>, vector<16x16xf32>
    tpu.vector_store %arg6[%c0_9, %c48], %8 {strides = array<i32>} : memref<16x80xf32, #tpu.memory_space<vmem>>, vector<16x16xf32>,
    %10 = arith.mulf %1, %3 : vector<16x16xf32>
    %c0_10 = arith.constant 0 : index
    %c64 = arith.constant 64 : index
    %11 = vector.load %arg6[%c0_10, %c64] : memref<16x80xf32, #tpu.memory_space<vmem>>, vector<16x16xf32>
    tpu.vector_store %arg6[%c0_10, %c64], %10 {strides = array<i32>} : memref<16x80xf32, #tpu.memory_space<vmem>>, vector<16x16xf32>,
    %c0_11 = arith.constant 0 : index
    %c0_12 = arith.constant 0 : index
    %12 = vector.load %arg3[%c0_11, %c0_12] : memref<16x16xf32, #tpu.memory_space<vmem>>, vector<16x16xf32>
    %c0_13 = arith.constant 0 : index
    %c0_14 = arith.constant 0 : index
    %13 = vector.load %arg6[%c0_13, %c0_14] : memref<16x80xf32, #tpu.memory_space<vmem>>, vector<16x80xf32>
    %cst = arith.constant dense<0.000000e+00> : vector<16x80xf32>
    %14 = tpu.matmul %12, %13, %cst {dimension_numbers = #tpu.dot_dimension_numbers<[1], [0], [0], [1], [0, 0, 1, 1], [], []>, precision = #tpu.contract_precision<fp32>} : vector<16x16xf32>, vector<16x80xf32>, vector<16x80xf32> -> vector<16x80xf32>
    %c0_15 = arith.constant 0 : index
    %c0_16 = arith.constant 0 : index
    %15 = vector.load %arg4[%c0_15, %c0_16] : memref<16x16xf32, #tpu.memory_space<vmem>>, vector<16x16xf32>
    %16 = vector.extract_strided_slice %14 {offsets = [0, 0], sizes = [16, 16], strides = [1, 1]} : vector<16x80xf32> to vector<16x16xf32>
    %cst_17 = arith.constant dense<0.000000e+00> : vector<16x16xf32>
    %17 = tpu.matmul %16, %15, %cst_17 {dimension_numbers = #tpu.dot_dimension_numbers<[1], [0], [0], [1], [0, 0, 1, 1], [], []>, precision = #tpu.contract_precision<fp32>} : vector<16x16xf32>, vector<16x16xf32>, vector<16x16xf32> -> vector<16x16xf32>
    %18 = vector.extract_strided_slice %14 {offsets = [0, 16], sizes = [16, 16], strides = [1, 1]} : vector<16x80xf32> to vector<16x16xf32>
    %cst_18 = arith.constant dense<0.000000e+00> : vector<16x16xf32>
    %19 = tpu.matmul %18, %15, %cst_18 {dimension_numbers = #tpu.dot_dimension_numbers<[1], [0], [0], [1], [0, 0, 1, 1], [], []>, precision = #tpu.contract_precision<fp32>} : vector<16x16xf32>, vector<16x16xf32>, vector<16x16xf32> -> vector<16x16xf32>
    %20 = vector.extract_strided_slice %14 {offsets = [0, 32], sizes = [16, 16], strides = [1, 1]} : vector<16x80xf32> to vector<16x16xf32>
    %cst_19 = arith.constant dense<0.000000e+00> : vector<16x16xf32>
    %21 = tpu.matmul %20, %15, %cst_19 {dimension_numbers = #tpu.dot_dimension_numbers<[1], [0], [0], [1], [0, 0, 1, 1], [], []>, precision = #tpu.contract_precision<fp32>} : vector<16x16xf32>, vector<16x16xf32>, vector<16x16xf32> -> vector<16x16xf32>
    %22 = vector.extract_strided_slice %14 {offsets = [0, 48], sizes = [16, 16], strides = [1, 1]} : vector<16x80xf32> to vector<16x16xf32>
    %cst_20 = arith.constant dense<0.000000e+00> : vector<16x16xf32>
    %23 = tpu.matmul %22, %15, %cst_20 {dimension_numbers = #tpu.dot_dimension_numbers<[1], [0], [0], [1], [0, 0, 1, 1], [], []>, precision = #tpu.contract_precision<fp32>} : vector<16x16xf32>, vector<16x16xf32>, vector<16x16xf32> -> vector<16x16xf32>
    %24 = vector.extract_strided_slice %14 {offsets = [0, 64], sizes = [16, 16], strides = [1, 1]} : vector<16x80xf32> to vector<16x16xf32>
    %cst_21 = arith.constant dense<0.000000e+00> : vector<16x16xf32>
    %25 = tpu.matmul %24, %15, %cst_21 {dimension_numbers = #tpu.dot_dimension_numbers<[1], [0], [0], [1], [0, 0, 1, 1], [], []>, precision = #tpu.contract_precision<fp32>} : vector<16x16xf32>, vector<16x16xf32>, vector<16x16xf32> -> vector<16x16xf32>
    %26 = arith.mulf %17, %17 : vector<16x16xf32>
    %27 = arith.mulf %19, %19 : vector<16x16xf32>
    %28 = arith.mulf %17, %19 : vector<16x16xf32>
    %29 = arith.subf %21, %26 : vector<16x16xf32>
    %30 = arith.subf %23, %27 : vector<16x16xf32>
    %31 = arith.subf %25, %28 : vector<16x16xf32>
    %cst_22 = arith.constant 2.000000e+00 : f32
    %32 = vector.broadcast %cst_22 : f32 to vector<16x16xf32>
    %33 = arith.mulf %32, %28 : vector<16x16xf32>
    %cst_23 = arith.constant 9.99999974E-5 : f32
    %34 = vector.broadcast %cst_23 : f32 to vector<16x16xf32>
    %35 = arith.addf %33, %34 : vector<16x16xf32>
    %cst_24 = arith.constant 2.000000e+00 : f32
    %36 = vector.broadcast %cst_24 : f32 to vector<16x16xf32>
    %37 = arith.mulf %36, %31 : vector<16x16xf32>
    %cst_25 = arith.constant 8.99999984E-4 : f32
    %38 = vector.broadcast %cst_25 : f32 to vector<16x16xf32>
    %39 = arith.addf %37, %38 : vector<16x16xf32>
    %40 = arith.mulf %35, %39 : vector<16x16xf32>
    %41 = arith.addf %26, %27 : vector<16x16xf32>
    %cst_26 = arith.constant 9.99999974E-5 : f32
    %42 = vector.broadcast %cst_26 : f32 to vector<16x16xf32>
    %43 = arith.addf %41, %42 : vector<16x16xf32>
    %44 = arith.addf %29, %30 : vector<16x16xf32>
    %cst_27 = arith.constant 8.99999984E-4 : f32
    %45 = vector.broadcast %cst_27 : f32 to vector<16x16xf32>
    %46 = arith.addf %44, %45 : vector<16x16xf32>
    %47 = arith.mulf %43, %46 : vector<16x16xf32>
    %48 = arith.divf %40, %47 : vector<16x16xf32>
    %49 = vector.shape_cast %48 : vector<16x16xf32> to vector<1x16x16xf32>
    %cst_28 = arith.constant dense<0.000000e+00> : vector<1xf32>
    %50 = vector.multi_reduction <add>, %49, %cst_28 [1, 2] : vector<1x16x16xf32> to vector<1xf32>
    %51 = vector.shape_cast %50 : vector<1xf32> to vector<1x1x1xf32>
    %52 = vector.extract %51[0, 0, 0] : f32 from vector<1x1x1xf32>
    %53 = vector.broadcast %52 : f32 to vector<1x8x128xf32>
    %c0_29 = arith.constant 0 : index
    %c0_30 = arith.constant 0 : index
    %c0_31 = arith.constant 0 : index
    %54 = vector.load %arg5[%c0_29, %c0_30, %c0_31] : memref<1x8x128xf32, #tpu.memory_space<vmem>>, vector<1x8x128xf32>
    tpu.vector_store %arg5[%c0_29, %c0_30, %c0_31], %53 {strides = array<i32>} : memref<1x8x128xf32, #tpu.memory_space<vmem>>, vector<1x8x128xf32>,
    return
  }
  func.func @transform_0(%arg0: i32) -> (i32, i32, i32) {
    %c0_i32 = arith.constant 0 : i32
    %c0_i32_0 = arith.constant 0 : i32
    %c0_i32_1 = arith.constant 0 : i32
    return %arg0, %c0_i32, %c0_i32_0 : i32, i32, i32
  }
  func.func @transform_1(%arg0: i32) -> (i32, i32, i32) {
    %c0_i32 = arith.constant 0 : i32
    %c0_i32_0 = arith.constant 0 : i32
    %c0_i32_1 = arith.constant 0 : i32
    return %arg0, %c0_i32, %c0_i32_0 : i32, i32, i32
  }
  func.func @transform_2(%arg0: i32) -> (i32, i32) {
    %c0_i32 = arith.constant 0 : i32
    %c0_i32_0 = arith.constant 0 : i32
    %c0_i32_1 = arith.constant 0 : i32
    return %c0_i32, %c0_i32_0 : i32, i32
  }
  func.func @transform_3(%arg0: i32) -> (i32, i32) {
    %c0_i32 = arith.constant 0 : i32
    %c0_i32_0 = arith.constant 0 : i32
    %c0_i32_1 = arith.constant 0 : i32
    return %c0_i32, %c0_i32_0 : i32, i32
  }
  func.func @transform_4(%arg0: i32) -> (i32, i32, i32) {
    %c0_i32 = arith.constant 0 : i32
    %c0_i32_0 = arith.constant 0 : i32
    %c0_i32_1 = arith.constant 0 : i32
    return %arg0, %c0_i32, %c0_i32_0 : i32, i32, i32
  }
}

</mosaic_0001>

<llo_original>
// kernel: tpu_custom_call.1
$region0: #{tpu_custom_call.1}
  #allocation0 [shape = 'u32[]', space=smem, size = 0x4, offset = 0x4, fixed_abs, tag = 'smem constant byte address 0x4 - core index']
  #allocation1 [shape = 'u32[144,128]{1,0:T(1,128)}', space=vmem, size = 0x12000, scoped, tag = 'internal scratch']
  #allocation2 [shape = 'f32[16,80]{1,0:T(8,128)}', space=vmem, size = 0x2000, scoped, tag = 'scratch operand']
  %s0 = inlined_call_operand.hbm [shape: f32[8,16,16], index: 0, kind: input, shape index: {}]
  %s1 = inlined_call_operand.hbm [shape: f32[8,16,16], index: 1, kind: input, shape index: {}]
  %s2 = inlined_call_operand.hbm [shape: f32[16,16], index: 2, kind: input, shape index: {}]
  %s3 = inlined_call_operand.hbm [shape: f32[16,16], index: 3, kind: input, shape index: {}]
  %s4 = inlined_call_operand.hbm [shape: f32[8,8,128], index: 4, kind: output, shape index: {}]
  %s5 = sld [smem:[#allocation0]]
  $region65: #{tpu_custom_call.1} parent=0
    _
  %s7 = ssub.s32 1, %s5
  %s8 = scalar_select 0, %s7, %s5
  $region1: #{tpu_custom_call.1} parent=0
    #allocation3 [shape = 'u8[16384]{0}', space=vmem, size = 0x4000, scoped, tag = 'input window, operand 0']
    #allocation4 [shape = 's32[2]{0}', space=sflag, size = 0x8, scoped, tag = 'scoped memory for tpu_custom_call.1']
    #allocation5 [shape = 's32[2]{0}', space=sflag, size = 0x8, scoped, tag = 'scoped memory for tpu_custom_call.1']
    #allocation6 [shape = 'u8[16384]{0}', space=vmem, size = 0x4000, scoped, tag = 'input window, operand 1']
    #allocation7 [shape = 's32[2]{0}', space=sflag, size = 0x8, scoped, tag = 'scoped memory for tpu_custom_call.1']
    #allocation8 [shape = 'u8[8192]{0}', space=vmem, size = 0x2000, scoped, tag = 'input window, operand 2, single buffered']
    #allocation9 [shape = 'u8[8192]{0}', space=vmem, size = 0x2000, scoped, tag = 'input window, operand 3, single buffered']
    #allocation10 [shape = 's32[1]{0}', space=sflag, size = 0x4, scoped, tag = 'scoped memory for tpu_custom_call.1']
    #allocation11 [shape = 'u8[8192]{0}', space=vmem, size = 0x2000, scoped, tag = 'output window, operand 0']
    %9 = vsyncpa [#allocation4], 0
    %s10 = scalar_lea.sflag [#allocation4], 1
    %11 = vsyncpa %s10, 0
    %12 = vsyncpa [#allocation7], 0
    %s13 = scalar_lea.sflag [#allocation7], 1
    %14 = vsyncpa %s13, 0
    %15 = vsyncpa [#allocation10], 0
    %16 = vsyncpa [#allocation5], 0
    %s17 = scalar_lea.sflag [#allocation5], 1
    %18 = vsyncpa %s17, 0
    loop: start=0, step=1, limit=10
    $region2: #{tpu_custom_call.1} parent=1 // loop_pre_header
      _
    $region3: #{tpu_custom_call.1} parent=1 // loop_header
      %s20 = sphi 0, %s24
      %p21 = scmp.ge.s32.totalorder %s20, 10
      %s30 = sphi 0, %s32
      %s33 = sphi 0, %s30
      %s34 = sphi 0, %s33
      %s50 = sphi 0, %s34
      %s56 = sphi 0, %s58
      %s59 = sphi 0, %s56
      %s60 = sphi 0, %s59
      %s76 = sphi 0, %s60
      %s80 = sphi 0, %s80
      %s82 = sphi 0, %s80
      %s83 = sphi 0, %s82
      %s97 = sphi 0, %s83
      %s101 = sphi 0, %s101
      %s103 = sphi 0, %s101
      %s104 = sphi 0, %s103
      %s118 = sphi 0, %s104
      %s124 = sphi 0, %s126
      %s127 = sphi 0, %s124
      %s128 = sphi 0, %s127
      %s144 = sphi 0, %s128
    $region4: #{tpu_custom_call.1} parent=1 // loop_header_branch
      %23 = sbr.rel (%p21) target = $region8
    $region5: #{tpu_custom_call.1} parent=1 // loop_body
      %s25 = ssub.s32 %s20, 1
      %s26 = ssub.s32 %s20, 2
      %s27 = sadd.s32 %s20, 1
      %s28 = ssub.s32 %s20, %s27
      %p29 = scmp.eq.s32.totalorder %s28, 0
      %s31 = sadd.s32 %s30, 1
      %s32 = scalar_select %p29, %s30, %s31
      %p35 = pneg %p29
      %p36 = scmp.eq.s32.totalorder %s20, 7
      %p37 = por %p35, %p36
      %p38 = scmp.ne.s32.totalorder %s30, %s33
      %p39 = scmp.eq.s32.totalorder %s20, 0
      %p40 = por %p38, %p39
      %p41 = scmp.ne.s32.totalorder %s30, %s33
      %p42 = scmp.eq.s32.totalorder %s25, 7
      %p43 = por %p41, %p42
      %p44 = scmp.ne.s32.totalorder %s33, %s34
      %p45 = scmp.eq.s32.totalorder %s25, 0
      %p46 = por %p44, %p45
      %p47 = scmp.ne.s32.totalorder %s33, %s34
      %p48 = scmp.eq.s32.totalorder %s26, 7
      %p49 = por %p47, %p48
      %p51 = scmp.ne.s32.totalorder %s34, %s50
      %p52 = scmp.eq.s32.totalorder %s26, 0
      %p53 = por %p51, %p52
      %s54 = ssub.s32 %s20, %s27
      %p55 = scmp.eq.s32.totalorder %s54, 0
      %s57 = sadd.s32 %s56, 1
      %s58 = scalar_select %p55, %s56, %s57
      %p61 = pneg %p55
      %p62 = scmp.eq.s32.totalorder %s20, 7
      %p63 = por %p61, %p62
      %p64 = scmp.ne.s32.totalorder %s56, %s59
      %p65 = scmp.eq.s32.totalorder %s20, 0
      %p66 = por %p64, %p65
      %p67 = scmp.ne.s32.totalorder %s56, %s59
      %p68 = scmp.eq.s32.totalorder %s25, 7
      %p69 = por %p67, %p68
      %p70 = scmp.ne.s32.totalorder %s59, %s60
      %p71 = scmp.eq.s32.totalorder %s25, 0
      %p72 = por %p70, %p71
      %p73 = scmp.ne.s32.totalorder %s59, %s60
      %p74 = scmp.eq.s32.totalorder %s26, 7
      %p75 = por %p73, %p74
      %p77 = scmp.ne.s32.totalorder %s60, %s76
      %p78 = scmp.eq.s32.totalorder %s26, 0
      %p79 = por %p77, %p78
      %s81 = sadd.s32 %s80, 1
      %p84 = scmp.eq.s32.totalorder %s20, 7
      %p85 = scmp.ne.s32.totalorder %s80, %s82
      %p86 = scmp.eq.s32.totalorder %s20, 0
      %p87 = por %p85, %p86
      %p88 = scmp.ne.s32.totalorder %s80, %s82
      %p89 = scmp.eq.s32.totalorder %s25, 7
      %p90 = por %p88, %p89
      %p91 = scmp.ne.s32.totalorder %s82, %s83
      %p92 = scmp.eq.s32.totalorder %s25, 0
      %p93 = por %p91, %p92
      %p94 = scmp.ne.s32.totalorder %s82, %s83
      %p95 = scmp.eq.s32.totalorder %s26, 7
      %p96 = por %p94, %p95
      %p98 = scmp.ne.s32.totalorder %s83, %s97
      %p99 = scmp.eq.s32.totalorder %s26, 0
      %p100 = por %p98, %p99
      %s102 = sadd.s32 %s101, 1
      %p105 = scmp.eq.s32.totalorder %s20, 7
      %p106 = scmp.ne.s32.totalorder %s101, %s103
      %p107 = scmp.eq.s32.totalorder %s20, 0
      %p108 = por %p106, %p107
      %p109 = scmp.ne.s32.totalorder %s101, %s103
      %p110 = scmp.eq.s32.totalorder %s25, 7
      %p111 = por %p109, %p110
      %p112 = scmp.ne.s32.totalorder %s103, %s104
      %p113 = scmp.eq.s32.totalorder %s25, 0
      %p114 = por %p112, %p113
      %p115 = scmp.ne.s32.totalorder %s103, %s104
      %p116 = scmp.eq.s32.totalorder %s26, 7
      %p117 = por %p115, %p116
      %p119 = scmp.ne.s32.totalorder %s104, %s118
      %p120 = scmp.eq.s32.totalorder %s26, 0
      %p121 = por %p119, %p120
      %s122 = ssub.s32 %s20, %s27
      %p123 = scmp.eq.s32.totalorder %s122, 0
      %s125 = sadd.s32 %s124, 1
      %s126 = scalar_select %p123, %s124, %s125
      %p129 = pneg %p123
      %p130 = scmp.eq.s32.totalorder %s20, 7
      %p131 = por %p129, %p130
      %p132 = scmp.ne.s32.totalorder %s124, %s127
      %p133 = scmp.eq.s32.totalorder %s20, 0
      %p134 = por %p132, %p133
      %p135 = scmp.ne.s32.totalorder %s124, %s127
      %p136 = scmp.eq.s32.totalorder %s25, 7
      %p137 = por %p135, %p136
      %p138 = scmp.ne.s32.totalorder %s127, %s128
      %p139 = scmp.eq.s32.totalorder %s25, 0
      %p140 = por %p138, %p139
      %p141 = scmp.ne.s32.totalorder %s127, %s128
      %p142 = scmp.eq.s32.totalorder %s26, 7
      %p143 = por %p141, %p142
      %p145 = scmp.ne.s32.totalorder %s128, %s144
      %p146 = scmp.eq.s32.totalorder %s26, 0
      %p147 = por %p145, %p146
      %p148 = scmp.le.s32.totalorder 1, %s20
      %p149 = scmp.lt.s32.totalorder %s20, 9
      %p150 = pnand %p148, %p149
      %p151 = pneg %p150
      // Predicated region
      $region9: #{tpu_custom_call.1} parent=5 // pred_check
        _
      $region10: #{tpu_custom_call.1} parent=5 // pred_check_branch
        %153 = sbr.rel (%p150) target = $region12
      $region11: #{tpu_custom_call.1} parent=5 // pred_region
        %s154 = ssub.s32 %s20, 1
        // Predicated region
        $region13: #{tpu_custom_call.1} parent=11 // pred_check
          %p155 = pneg %p93
        $region14: #{tpu_custom_call.1} parent=11 // pred_check_branch
          %157 = sbr.rel (%p155) target = $region16
        $region15: #{tpu_custom_call.1} parent=11 // pred_region
          %s159 = ssub.s32 256, 256
          %160 = vsyncadd [#allocation7], %s159
          %s161 = sshll.u32 [#allocation8], 4
          %s162 = int_to_ptr.vmem [resolvable:$true] %s161
          %167 = dma.hbm_to_vmem [thread:$0]  %s2, 256, %s162, [#allocation7], 128, 128, 8
        $region16: #{tpu_custom_call.1} parent=11 // pred_fallthru
          _
        // Predicated region
        $region17: #{tpu_custom_call.1} parent=11 // pred_check
          %p168 = pneg %p114
        $region18: #{tpu_custom_call.1} parent=11 // pred_check_branch
          %170 = sbr.rel (%p168) target = $region20
        $region19: #{tpu_custom_call.1} parent=11 // pred_region
          %s172 = ssub.s32 256, 256
          %173 = vsyncadd [#allocation10], %s172
          %s174 = sshll.u32 [#allocation9], 4
          %s175 = int_to_ptr.vmem [resolvable:$true] %s174
          %180 = dma.hbm_to_vmem [thread:$0]  %s3, 256, %s175, [#allocation10], 128, 128, 8
        $region20: #{tpu_custom_call.1} parent=11 // pred_fallthru
          _
      $region12: #{tpu_custom_call.1} parent=5 // pred_fallthru
        _
      %p181 = scmp.lt.s32.totalorder %s20, 8
      // Predicated region
      $region21: #{tpu_custom_call.1} parent=5 // pred_check
        %p182 = pneg %p181
      $region22: #{tpu_custom_call.1} parent=5 // pred_check_branch
        %184 = sbr.rel (%p182) target = $region24
      $region23: #{tpu_custom_call.1} parent=5 // pred_region
        // Predicated region
        $region25: #{tpu_custom_call.1} parent=23 // pred_check
          %p185 = pneg %p40
        $region26: #{tpu_custom_call.1} parent=23 // pred_check_branch
          %187 = sbr.rel (%p185) target = $region28
        $region27: #{tpu_custom_call.1} parent=23 // pred_region
          %s188 = sand.u32 %s30, 1
          %s189 = scalar_lea.sflag [#allocation4], %s188
          %s190 = sand.u32 %s30, 1
          %s191 = smul.addr %s190, 16
          %s192 = scalar_lea.vmem [#allocation3], %s191
          %s194 = ssub.s32 256, 256
          %195 = vsyncadd %s189, %s194
          %s196 = smul.addr %s20, 2
          %s197 = smul.addr %s196, 128
          %s198 = scalar_lea.hbm %s0, %s197
          %s199 = sshll.u32 %s192, 4
          %s200 = int_to_ptr.vmem [resolvable:$true] %s199
          %205 = dma.hbm_to_vmem [thread:$0]  %s198, 256, %s200, %s189, 128, 128, 8
        $region28: #{tpu_custom_call.1} parent=23 // pred_fallthru
          _
        // Predicated region
        $region29: #{tpu_custom_call.1} parent=23 // pred_check
          %p206 = pneg %p66
        $region30: #{tpu_custom_call.1} parent=23 // pred_check_branch
          %208 = sbr.rel (%p206) target = $region32
        $region31: #{tpu_custom_call.1} parent=23 // pred_region
          %s209 = sand.u32 %s20, 1
          %s210 = scalar_lea.sflag [#allocation7], %s209
          %s211 = sand.u32 %s56, 1
          %s212 = smul.addr %s211, 16
          %s213 = scalar_lea.vmem [#allocation6], %s212
          %s215 = ssub.s32 256, 256
          %216 = vsyncadd %s210, %s215
          %s217 = smul.addr %s20, 2
          %s218 = smul.addr %s217, 128
          %s219 = scalar_lea.hbm %s1, %s218
          %s220 = sshll.u32 %s213, 4
          %s221 = int_to_ptr.vmem [resolvable:$true] %s220
          %226 = dma.hbm_to_vmem [thread:$0]  %s219, 256, %s221, %s210, 128, 128, 8
        $region32: #{tpu_custom_call.1} parent=23 // pred_fallthru
          _
      $region24: #{tpu_custom_call.1} parent=5 // pred_fallthru
        _
      %p227 = scmp.le.s32.totalorder 1, %s20
      %p228 = scmp.lt.s32.totalorder %s20, 9
      %p229 = pnand %p227, %p228
      %p230 = pneg %p229
      // Predicated region
      $region33: #{tpu_custom_call.1} parent=5 // pred_check
        _
      $region34: #{tpu_custom_call.1} parent=5 // pred_check_branch
        %232 = sbr.rel (%p229) target = $region36
      $region35: #{tpu_custom_call.1} parent=5 // pred_region
        %s233 = ssub.s32 %s20, 1
        %s234 = sand.u32 %s33, 1
        %s235 = scalar_lea.sflag [#allocation4], %s234
        %s236 = sand.u32 %s33, 1
        %s237 = smul.addr %s236, 16
        %s238 = scalar_lea.vmem [#allocation3], %s237
        // Predicated region
        $region37: #{tpu_custom_call.1} parent=35 // pred_check
          %p239 = pneg %p46
        $region38: #{tpu_custom_call.1} parent=35 // pred_check_branch
          %241 = sbr.rel (%p239) target = $region40
        $region39: #{tpu_custom_call.1} parent=35 // pred_region
          %242 = dma.done %s235, 256
        $region40: #{tpu_custom_call.1} parent=35 // pred_fallthru
          _
        %s243 = sand.u32 %s25, 1
        %s244 = scalar_lea.sflag [#allocation7], %s243
        %s245 = sand.u32 %s59, 1
        %s246 = smul.addr %s245, 16
        %s247 = scalar_lea.vmem [#allocation6], %s246
        // Predicated region
        $region41: #{tpu_custom_call.1} parent=35 // pred_check
          %p248 = pneg %p72
        $region42: #{tpu_custom_call.1} parent=35 // pred_check_branch
          %250 = sbr.rel (%p248) target = $region44
        $region43: #{tpu_custom_call.1} parent=35 // pred_region
          %251 = dma.done %s244, 256
        $region44: #{tpu_custom_call.1} parent=35 // pred_fallthru
          _
        // Predicated region
        $region45: #{tpu_custom_call.1} parent=35 // pred_check
          %p252 = pneg %p93
        $region46: #{tpu_custom_call.1} parent=35 // pred_check_branch
          %254 = sbr.rel (%p252) target = $region48
        $region47: #{tpu_custom_call.1} parent=35 // pred_region
          %255 = dma.done [#allocation7], 256
        $region48: #{tpu_custom_call.1} parent=35 // pred_fallthru
          _
        // Predicated region
        $region49: #{tpu_custom_call.1} parent=35 // pred_check
          %p256 = pneg %p114
        $region50: #{tpu_custom_call.1} parent=35 // pred_check_branch
          %258 = sbr.rel (%p256) target = $region52
        $region51: #{tpu_custom_call.1} parent=35 // pred_region
          %259 = dma.done [#allocation10], 256
        $region52: #{tpu_custom_call.1} parent=35 // pred_fallthru
          _
        %s260 = sand.u32 %s33, 1
        %s261 = scalar_lea.sflag [#allocation4], %s260
        %s262 = sand.u32 %s33, 1
        %s263 = smul.addr %s262, 16
        %s264 = scalar_lea.vmem [#allocation3], %s263
        %p265 = pneg %p46
        %p266 = pneg %p43
        %s267 = sand.u32 %s25, 1
        %s268 = scalar_lea.sflag [#allocation7], %s267
        %s269 = sand.u32 %s59, 1
        %s270 = smul.addr %s269, 16
        %s271 = scalar_lea.vmem [#allocation6], %s270
        %p272 = pneg %p72
        %p273 = pneg %p69
        %p274 = pneg %p93
        %p275 = pneg %p90
        %p276 = pneg %p114
        %p277 = pneg %p111
        %p278 = pneg %p140
        %p279 = pneg %p137
        %s280 = sand.u32 %s127, 1
        %s281 = scalar_lea.sflag [#allocation5], %s280
        %s282 = sand.u32 %s127, 1
        %s283 = smul.addr %s282, 8
        %s284 = scalar_lea.vmem [#allocation11], %s283
        %v285 = vld [vmem:[%s238] sm:$0xff]
        %v286 = vld [vmem:[%s238 + $0x8] sm:$0xff]
        %v287 = vld [vmem:[%s247] sm:$0xff]
        %v288 = vld [vmem:[%s247 + $0x8] sm:$0xff]
        %vm289 = vcmask 130048
        %290 = vst.msk [vmem:[#allocation2] sm:$0xff] %vm289, %v285
        %291 = vst.msk [vmem:[#allocation2 + $0x8] sm:$0xff] %vm289, %v286
        %294 = vrot.lane.b32.xlu0 %v287, 16
        %v295 = vpop.permute.xlu0 %294
        %296 = vrot.lane.b32.xlu0 %v288, 16
        %v297 = vpop.permute.xlu0 %296
        %vm300 = vcmask 261248
        %301 = vst.msk [vmem:[#allocation2] sm:$0xff] %vm300, %v295
        %302 = vst.msk [vmem:[#allocation2 + $0x8] sm:$0xff] %vm300, %v297
        %v303 = vmul.f32 %v285, %v285
        %v304 = vmul.f32 %v286, %v286
        %307 = vrot.lane.b32.xlu0 %v303, 32
        %v308 = vpop.permute.xlu0 %307
        %309 = vrot.lane.b32.xlu0 %v304, 32
        %v310 = vpop.permute.xlu0 %309
        %vm313 = vcmask 392448
        %314 = vst.msk [vmem:[#allocation2] sm:$0xff] %vm313, %v308
        %315 = vst.msk [vmem:[#allocation2 + $0x8] sm:$0xff] %vm313, %v310
        %v316 = vmul.f32 %v287, %v287
        %v317 = vmul.f32 %v288, %v288
        %320 = vrot.lane.b32.xlu0 %v316, 48
        %v321 = vpop.permute.xlu0 %320
        %322 = vrot.lane.b32.xlu0 %v317, 48
        %v323 = vpop.permute.xlu0 %322
        %vm326 = vcmask 523648
        %327 = vst.msk [vmem:[#allocation2] sm:$0xff] %vm326, %v321
        %328 = vst.msk [vmem:[#allocation2 + $0x8] sm:$0xff] %vm326, %v323
        %v329 = vmul.f32 %v285, %v287
        %v330 = vmul.f32 %v286, %v288
        %333 = vrot.lane.b32.xlu0 %v329, 64
        %v334 = vpop.permute.xlu0 %333
        %335 = vrot.lane.b32.xlu0 %v330, 64
        %v336 = vpop.permute.xlu0 %335
        %vm339 = vcmask 654848
        %340 = vst.msk [vmem:[#allocation2] sm:$0xff] %vm339, %v334
        %341 = vst.msk [vmem:[#allocation2 + $0x8] sm:$0xff] %vm339, %v336
        %v342 = vld [vmem:[#allocation8] sm:$0xff]
        %v343 = vld [vmem:[#allocation8 + $0x8] sm:$0xff]
        %v344 = vld [vmem:[#allocation2] sm:$0xff]
        %v345 = vld [vmem:[#allocation2 + $0x8] sm:$0xff]
        %v347 = vsel %vm289, %v342, 0
        %v350 = vsel %vm289, %v343, 0
        %352 = vmatprep.subr.mxu0 0.0
        %v353 = vand.u32 %v344, 4294901760
        %354 = vmatpush1.msra.mxu0 %v353
        %355 = vmatprep.subr.mxu0 0.0
        %v356 = vand.u32 %v345, 4294901760
        %357 = vmatpush1.msra.mxu0 %v356
        %358 = vmatprep.subr.mxu0 0.0
        %359 = vmatpush1.msra.mxu0 0.0
        %360 = vmatprep.subr.mxu0 0.0
        %361 = vmatpush1.msra.mxu0 0.0
        %362 = vmatprep.subr.mxu0 0.0
        %363 = vmatpush1.msra.mxu0 0.0
        %364 = vmatprep.subr.mxu0 0.0
        %365 = vmatpush1.msra.mxu0 0.0
        %366 = vmatprep.subr.mxu0 0.0
        %367 = vmatpush1.msra.mxu0 0.0
        %368 = vmatprep.subr.mxu0 0.0
        %369 = vmatpush1.msra.mxu0 0.0
        %370 = vmatprep.subr.mxu0 0.0
        %371 = vmatpush1.msra.mxu0 0.0
        %372 = vmatprep.subr.mxu0 0.0
        %373 = vmatpush1.msra.mxu0 0.0
        %374 = vmatprep.subr.mxu0 0.0
        %375 = vmatpush1.msra.mxu0 0.0
        %376 = vmatprep.subr.mxu0 0.0
        %377 = vmatpush1.msra.mxu0 0.0
        %378 = vmatprep.subr.mxu0 0.0
        %379 = vmatpush1.msra.mxu0 0.0
        %380 = vmatprep.subr.mxu0 0.0
        %381 = vmatpush1.msra.mxu0 0.0
        %382 = vmatprep.subr.mxu0 0.0
        %383 = vmatpush1.msra.mxu0 0.0
        %384 = vmatprep.subr.mxu0 0.0
        %385 = vmatpush1.msra.mxu0 0.0
        %386 = vmatprep.subr.mxu0 0.0
        %387 = vmatpush1.msra.mxu0 0.0
        %388 = vmatprep.subr.mxu0 0.0
        %389 = vmatpush1.msra.mxu0 0.0
        %390 = vmatprep.subr.mxu0 0.0
        %391 = vmatpush1.msra.mxu0 0.0
        %392 = vmatprep.subr.mxu0 0.0
        %393 = vmatpush1.msra.mxu0 0.0
        %394 = vmatprep.subr.mxu0 0.0
        %395 = vmatpush1.msra.mxu0 0.0
        %396 = vmatprep.subr.mxu0 0.0
        %397 = vmatpush1.msra.mxu0 0.0
        %398 = vmatprep.subr.mxu0 0.0
        %399 = vmatpush1.msra.mxu0 0.0
        %400 = vmatprep.subr.mxu0 0.0
        %401 = vmatpush1.msra.mxu0 0.0
        %402 = vmatprep.subr.mxu0 0.0
        %403 = vmatpush1.msra.mxu0 0.0
        %404 = vmatprep.subr.mxu0 0.0
        %405 = vmatpush1.msra.mxu0 0.0
        %406 = vmatprep.subr.mxu0 0.0
        %407 = vmatpush1.msra.mxu0 0.0
        %408 = vmatprep.subr.mxu0 0.0
        %409 = vmatpush1.msra.mxu0 0.0
        %410 = vmatprep.subr.mxu0 0.0
        %411 = vmatpush1.msra.mxu0 0.0
        %412 = vmatprep.subr.mxu0 0.0
        %413 = vmatpush1.msra.mxu0 0.0
        %414 = vmatprep.subr.mxu0 0.0
        %415 = vmatpush1.msra.mxu0 0.0
        %416 = vmatprep.subr.mxu0 0.0
        %417 = vmatpush1.msra.mxu0 0.0
        %418 = vmatprep.mubr.f32.mxu0 0.0
        %v419 = vand.u32 %v347, 4294901760
        %v420 = vsub.f32 %v347, %v419
        %v421 = vand.u32 %v420, 4294901760
        %v422 = vsub.f32 %v420, %v421
        %v423 = vand.u32 %v422, 4294901760
        %424 = vmatmul.mubr.f32.gmra.mrb[0].mxu0 %v423
        %v425 = vpop.f32.mrb[0].mxu0
        %v426 = vadd.f32 0.0, %v425
        %v427 = vpop.f32.mrb[0].mxu0
        %428 = vmatprep.mubr.f32.mxu0 0.0
        %v429 = vand.u32 %v350, 4294901760
        %v430 = vsub.f32 %v350, %v429
        %v431 = vand.u32 %v430, 4294901760
        %v432 = vsub.f32 %v430, %v431
        %v433 = vand.u32 %v432, 4294901760
        %434 = vmatmul.mubr.f32.gmra.mrb[0].mxu0 %v433
        %v435 = vpop.f32.mrb[0].mxu0
        %v436 = vadd.f32 0.0, %v435
        %v437 = vpop.f32.mrb[0].mxu0
        %438 = vdwg.mxu0
        %439 = vmatprep.subr.mxu0 0.0
        %v440 = vand.u32 %v344, 4294901760
        %v441 = vsub.f32 %v344, %v440
        %v442 = vand.u32 %v441, 4294901760
        %v443 = vsub.f32 %v441, %v442
        %v444 = vand.u32 %v443, 4294901760
        %445 = vmatpush1.msra.mxu0 %v444
        %446 = vmatprep.subr.mxu0 0.0
        %v447 = vand.u32 %v345, 4294901760
        %v448 = vsub.f32 %v345, %v447
        %v449 = vand.u32 %v448, 4294901760
        %v450 = vsub.f32 %v448, %v449
        %v451 = vand.u32 %v450, 4294901760
        %452 = vmatpush1.msra.mxu0 %v451
        %453 = vmatprep.subr.mxu0 0.0
        %454 = vmatpush1.msra.mxu0 0.0
        %455 = vmatprep.subr.mxu0 0.0
        %456 = vmatpush1.msra.mxu0 0.0
        %457 = vmatprep.subr.mxu0 0.0
        %458 = vmatpush1.msra.mxu0 0.0
        %459 = vmatprep.subr.mxu0 0.0
        %460 = vmatpush1.msra.mxu0 0.0
        %461 = vmatprep.subr.mxu0 0.0
        %462 = vmatpush1.msra.mxu0 0.0
        %463 = vmatprep.subr.mxu0 0.0
        %464 = vmatpush1.msra.mxu0 0.0
        %465 = vmatprep.subr.mxu0 0.0
        %466 = vmatpush1.msra.mxu0 0.0
        %467 = vmatprep.subr.mxu0 0.0
        %468 = vmatpush1.msra.mxu0 0.0
        %469 = vmatprep.subr.mxu0 0.0
        %470 = vmatpush1.msra.mxu0 0.0
        %471 = vmatprep.subr.mxu0 0.0
        %472 = vmatpush1.msra.mxu0 0.0
        %473 = vmatprep.subr.mxu0 0.0
        %474 = vmatpush1.msra.mxu0 0.0
        %475 = vmatprep.subr.mxu0 0.0
        %476 = vmatpush1.msra.mxu0 0.0
        %477 = vmatprep.subr.mxu0 0.0
        %478 = vmatpush1.msra.mxu0 0.0
        %479 = vmatprep.subr.mxu0 0.0
        %480 = vmatpush1.msra.mxu0 0.0
        %481 = vmatprep.subr.mxu0 0.0
        %482 = vmatpush1.msra.mxu0 0.0
        %483 = vmatprep.subr.mxu0 0.0
        %484 = vmatpush1.msra.mxu0 0.0
        %485 = vmatprep.subr.mxu0 0.0
        %486 = vmatpush1.msra.mxu0 0.0
        %487 = vmatprep.subr.mxu0 0.0
        %488 = vmatpush1.msra.mxu0 0.0
        %489 = vmatprep.subr.mxu0 0.0
        %490 = vmatpush1.msra.mxu0 0.0
        %491 = vmatprep.subr.mxu0 0.0
        %492 = vmatpush1.msra.mxu0 0.0
        %493 = vmatprep.subr.mxu0 0.0
        %494 = vmatpush1.msra.mxu0 0.0
        %495 = vmatprep.subr.mxu0 0.0
        %496 = vmatpush1.msra.mxu0 0.0
        %497 = vmatprep.subr.mxu0 0.0
        %498 = vmatpush1.msra.mxu0 0.0
        %499 = vmatprep.subr.mxu0 0.0
        %500 = vmatpush1.msra.mxu0 0.0
        %501 = vmatprep.subr.mxu0 0.0
        %502 = vmatpush1.msra.mxu0 0.0
        %503 = vmatprep.subr.mxu0 0.0
        %504 = vmatpush1.msra.mxu0 0.0
        %505 = vmatprep.subr.mxu0 0.0
        %506 = vmatpush1.msra.mxu0 0.0
        %507 = vmatprep.subr.mxu0 0.0
        %508 = vmatpush1.msra.mxu0 0.0
        %509 = vmatprep.subr.mxu0 0.0
        %510 = vmatpush1.msra.mxu0 0.0
        %511 = vmatprep.subr.mxu0 0.0
        %512 = vmatpush1.msra.mxu0 0.0
        %513 = vmatprep.mubr.f32.mxu0 0.0
        %v514 = vand.u32 %v347, 4294901760
        %515 = vmatmul.mubr.f32.gmra.mrb[0].mxu0 %v514
        %v516 = vpop.f32.mrb[0].mxu0
        %v517 = vadd.f32 %v426, %v516
        %v518 = vpop.f32.mrb[0].mxu0
        %519 = vmatprep.mubr.f32.mxu0 0.0
        %v520 = vand.u32 %v350, 4294901760
        %521 = vmatmul.mubr.f32.gmra.mrb[0].mxu0 %v520
        %v522 = vpop.f32.mrb[0].mxu0
        %v523 = vadd.f32 %v436, %v522
        %v524 = vpop.f32.mrb[0].mxu0
        %525 = vdwg.mxu0
        %526 = vmatprep.subr.mxu0 0.0
        %v527 = vand.u32 %v344, 4294901760
        %v528 = vsub.f32 %v344, %v527
        %529 = vmatpush1.msra.mxu0 %v528
        %530 = vmatprep.subr.mxu0 0.0
        %v531 = vand.u32 %v345, 4294901760
        %v532 = vsub.f32 %v345, %v531
        %533 = vmatpush1.msra.mxu0 %v532
        %534 = vmatprep.subr.mxu0 0.0
        %535 = vmatpush1.msra.mxu0 0.0
        %536 = vmatprep.subr.mxu0 0.0
        %537 = vmatpush1.msra.mxu0 0.0
        %538 = vmatprep.subr.mxu0 0.0
        %539 = vmatpush1.msra.mxu0 0.0
        %540 = vmatprep.subr.mxu0 0.0
        %541 = vmatpush1.msra.mxu0 0.0
        %542 = vmatprep.subr.mxu0 0.0
        %543 = vmatpush1.msra.mxu0 0.0
        %544 = vmatprep.subr.mxu0 0.0
        %545 = vmatpush1.msra.mxu0 0.0
        %546 = vmatprep.subr.mxu0 0.0
        %547 = vmatpush1.msra.mxu0 0.0
        %548 = vmatprep.subr.mxu0 0.0
        %549 = vmatpush1.msra.mxu0 0.0
        %550 = vmatprep.subr.mxu0 0.0
        %551 = vmatpush1.msra.mxu0 0.0
        %552 = vmatprep.subr.mxu0 0.0
        %553 = vmatpush1.msra.mxu0 0.0
        %554 = vmatprep.subr.mxu0 0.0
        %555 = vmatpush1.msra.mxu0 0.0
        %556 = vmatprep.subr.mxu0 0.0
        %557 = vmatpush1.msra.mxu0 0.0
        %558 = vmatprep.subr.mxu0 0.0
        %559 = vmatpush1.msra.mxu0 0.0
        %560 = vmatprep.subr.mxu0 0.0
        %561 = vmatpush1.msra.mxu0 0.0
        %562 = vmatprep.subr.mxu0 0.0
        %563 = vmatpush1.msra.mxu0 0.0
        %564 = vmatprep.subr.mxu0 0.0
        %565 = vmatpush1.msra.mxu0 0.0
        %566 = vmatprep.subr.mxu0 0.0
        %567 = vmatpush1.msra.mxu0 0.0
        %568 = vmatprep.subr.mxu0 0.0
        %569 = vmatpush1.msra.mxu0 0.0
        %570 = vmatprep.subr.mxu0 0.0
        %571 = vmatpush1.msra.mxu0 0.0
        %572 = vmatprep.subr.mxu0 0.0
        %573 = vmatpush1.msra.mxu0 0.0
        %574 = vmatprep.subr.mxu0 0.0
        %575 = vmatpush1.msra.mxu0 0.0
        %576 = vmatprep.subr.mxu0 0.0
        %577 = vmatpush1.msra.mxu0 0.0
        %578 = vmatprep.subr.mxu0 0.0
        %579 = vmatpush1.msra.mxu0 0.0
        %580 = vmatprep.subr.mxu0 0.0
        %581 = vmatpush1.msra.mxu0 0.0
        %582 = vmatprep.subr.mxu0 0.0
        %583 = vmatpush1.msra.mxu0 0.0
        %584 = vmatprep.subr.mxu0 0.0
        %585 = vmatpush1.msra.mxu0 0.0
        %586 = vmatprep.subr.mxu0 0.0
        %587 = vmatpush1.msra.mxu0 0.0
        %588 = vmatprep.subr.mxu0 0.0
        %589 = vmatpush1.msra.mxu0 0.0
        %590 = vmatprep.subr.mxu0 0.0
        %591 = vmatpush1.msra.mxu0 0.0
        %592 = vmatprep.subr.mxu0 0.0
        %593 = vmatpush1.msra.mxu0 0.0
        %594 = vmatprep.mubr.f32.mxu0 0.0
        %v595 = vand.u32 %v347, 4294901760
        %v596 = vsub.f32 %v347, %v595
        %597 = vmatmul.mubr.f32.gmra.mrb[0].mxu0 %v596
        %v598 = vpop.f32.mrb[0].mxu0
        %v599 = vadd.f32 %v517, %v598
        %v600 = vpop.f32.mrb[0].mxu0
        %601 = vmatprep.mubr.f32.mxu0 0.0
        %v602 = vand.u32 %v350, 4294901760
        %v603 = vsub.f32 %v350, %v602
        %604 = vmatmul.mubr.f32.gmra.mrb[0].mxu0 %v603
        %v605 = vpop.f32.mrb[0].mxu0
        %v606 = vadd.f32 %v523, %v605
        %v607 = vpop.f32.mrb[0].mxu0
        %608 = vdwg.mxu0
        %609 = vmatprep.subr.mxu0 0.0
        %v610 = vand.u32 %v344, 4294901760
        %611 = vmatpush1.msra.mxu0 %v610
        %612 = vmatprep.subr.mxu0 0.0
        %v613 = vand.u32 %v345, 4294901760
        %614 = vmatpush1.msra.mxu0 %v613
        %615 = vmatprep.subr.mxu0 0.0
        %616 = vmatpush1.msra.mxu0 0.0
        %617 = vmatprep.subr.mxu0 0.0
        %618 = vmatpush1.msra.mxu0 0.0
        %619 = vmatprep.subr.mxu0 0.0
        %620 = vmatpush1.msra.mxu0 0.0
        %621 = vmatprep.subr.mxu0 0.0
        %622 = vmatpush1.msra.mxu0 0.0
        %623 = vmatprep.subr.mxu0 0.0
        %624 = vmatpush1.msra.mxu0 0.0
        %625 = vmatprep.subr.mxu0 0.0
        %626 = vmatpush1.msra.mxu0 0.0
        %627 = vmatprep.subr.mxu0 0.0
        %628 = vmatpush1.msra.mxu0 0.0
        %629 = vmatprep.subr.mxu0 0.0
        %630 = vmatpush1.msra.mxu0 0.0
        %631 = vmatprep.subr.mxu0 0.0
        %632 = vmatpush1.msra.mxu0 0.0
        %633 = vmatprep.subr.mxu0 0.0
        %634 = vmatpush1.msra.mxu0 0.0
        %635 = vmatprep.subr.mxu0 0.0
        %636 = vmatpush1.msra.mxu0 0.0
        %637 = vmatprep.subr.mxu0 0.0
        %638 = vmatpush1.msra.mxu0 0.0
        %639 = vmatprep.subr.mxu0 0.0
        %640 = vmatpush1.msra.mxu0 0.0
        %641 = vmatprep.subr.mxu0 0.0
        %642 = vmatpush1.msra.mxu0 0.0
        %643 = vmatprep.subr.mxu0 0.0
        %644 = vmatpush1.msra.mxu0 0.0
        %645 = vmatprep.subr.mxu0 0.0
        %646 = vmatpush1.msra.mxu0 0.0
        %647 = vmatprep.subr.mxu0 0.0
        %648 = vmatpush1.msra.mxu0 0.0
        %649 = vmatprep.subr.mxu0 0.0
        %650 = vmatpush1.msra.mxu0 0.0
        %651 = vmatprep.subr.mxu0 0.0
        %652 = vmatpush1.msra.mxu0 0.0
        %653 = vmatprep.subr.mxu0 0.0
        %654 = vmatpush1.msra.mxu0 0.0
        %655 = vmatprep.subr.mxu0 0.0
        %656 = vmatpush1.msra.mxu0 0.0
        %657 = vmatprep.subr.mxu0 0.0
        %658 = vmatpush1.msra.mxu0 0.0
        %659 = vmatprep.subr.mxu0 0.0
        %660 = vmatpush1.msra.mxu0 0.0
        %661 = vmatprep.subr.mxu0 0.0
        %662 = vmatpush1.msra.mxu0 0.0
        %663 = vmatprep.subr.mxu0 0.0
        %664 = vmatpush1.msra.mxu0 0.0
        %665 = vmatprep.subr.mxu0 0.0
        %666 = vmatpush1.msra.mxu0 0.0
        %667 = vmatprep.subr.mxu0 0.0
        %668 = vmatpush1.msra.mxu0 0.0
        %669 = vmatprep.subr.mxu0 0.0
        %670 = vmatpush1.msra.mxu0 0.0
        %671 = vmatprep.subr.mxu0 0.0
        %672 = vmatpush1.msra.mxu0 0.0
        %673 = vmatprep.subr.mxu0 0.0
        %674 = vmatpush1.msra.mxu0 0.0
        %675 = vmatprep.mubr.f32.mxu0 0.0
        %v676 = vand.u32 %v347, 4294901760
        %v677 = vsub.f32 %v347, %v676
        %v678 = vand.u32 %v677, 4294901760
        %679 = vmatmul.mubr.f32.gmra.mrb[0].mxu0 %v678
        %v680 = vpop.f32.mrb[0].mxu0
        %v681 = vadd.f32 %v599, %v680
        %v682 = vpop.f32.mrb[0].mxu0
        %683 = vmatprep.mubr.f32.mxu0 0.0
        %v684 = vand.u32 %v350, 4294901760
        %v685 = vsub.f32 %v350, %v684
        %v686 = vand.u32 %v685, 4294901760
        %687 = vmatmul.mubr.f32.gmra.mrb[0].mxu0 %v686
        %v688 = vpop.f32.mrb[0].mxu0
        %v689 = vadd.f32 %v606, %v688
        %v690 = vpop.f32.mrb[0].mxu0
        %691 = vdwg.mxu0
        %692 = vmatprep.subr.mxu0 0.0
        %v693 = vand.u32 %v344, 4294901760
        %v694 = vsub.f32 %v344, %v693
        %v695 = vand.u32 %v694, 4294901760
        %696 = vmatpush1.msra.mxu0 %v695
        %697 = vmatprep.subr.mxu0 0.0
        %v698 = vand.u32 %v345, 4294901760
        %v699 = vsub.f32 %v345, %v698
        %v700 = vand.u32 %v699, 4294901760
        %701 = vmatpush1.msra.mxu0 %v700
        %702 = vmatprep.subr.mxu0 0.0
        %703 = vmatpush1.msra.mxu0 0.0
        %704 = vmatprep.subr.mxu0 0.0
        %705 = vmatpush1.msra.mxu0 0.0
        %706 = vmatprep.subr.mxu0 0.0
        %707 = vmatpush1.msra.mxu0 0.0
        %708 = vmatprep.subr.mxu0 0.0
        %709 = vmatpush1.msra.mxu0 0.0
        %710 = vmatprep.subr.mxu0 0.0
        %711 = vmatpush1.msra.mxu0 0.0
        %712 = vmatprep.subr.mxu0 0.0
        %713 = vmatpush1.msra.mxu0 0.0
        %714 = vmatprep.subr.mxu0 0.0
        %715 = vmatpush1.msra.mxu0 0.0
        %716 = vmatprep.subr.mxu0 0.0
        %717 = vmatpush1.msra.mxu0 0.0
        %718 = vmatprep.subr.mxu0 0.0
        %719 = vmatpush1.msra.mxu0 0.0
        %720 = vmatprep.subr.mxu0 0.0
        %721 = vmatpush1.msra.mxu0 0.0
        %722 = vmatprep.subr.mxu0 0.0
        %723 = vmatpush1.msra.mxu0 0.0
        %724 = vmatprep.subr.mxu0 0.0
        %725 = vmatpush1.msra.mxu0 0.0
        %726 = vmatprep.subr.mxu0 0.0
        %727 = vmatpush1.msra.mxu0 0.0
        %728 = vmatprep.subr.mxu0 0.0
        %729 = vmatpush1.msra.mxu0 0.0
        %730 = vmatprep.subr.mxu0 0.0
        %731 = vmatpush1.msra.mxu0 0.0
        %732 = vmatprep.subr.mxu0 0.0
        %733 = vmatpush1.msra.mxu0 0.0
        %734 = vmatprep.subr.mxu0 0.0
        %735 = vmatpush1.msra.mxu0 0.0
        %736 = vmatprep.subr.mxu0 0.0
        %737 = vmatpush1.msra.mxu0 0.0
        %738 = vmatprep.subr.mxu0 0.0
        %739 = vmatpush1.msra.mxu0 0.0
        %740 = vmatprep.subr.mxu0 0.0
        %741 = vmatpush1.msra.mxu0 0.0
        %742 = vmatprep.subr.mxu0 0.0
        %743 = vmatpush1.msra.mxu0 0.0
        %744 = vmatprep.subr.mxu0 0.0
        %745 = vmatpush1.msra.mxu0 0.0
        %746 = vmatprep.subr.mxu0 0.0
        %747 = vmatpush1.msra.mxu0 0.0
        %748 = vmatprep.subr.mxu0 0.0
        %749 = vmatpush1.msra.mxu0 0.0
        %750 = vmatprep.subr.mxu0 0.0
        %751 = vmatpush1.msra.mxu0 0.0
        %752 = vmatprep.subr.mxu0 0.0
        %753 = vmatpush1.msra.mxu0 0.0
        %754 = vmatprep.subr.mxu0 0.0
        %755 = vmatpush1.msra.mxu0 0.0
        %756 = vmatprep.subr.mxu0 0.0
        %757 = vmatpush1.msra.mxu0 0.0
        %758 = vmatprep.subr.mxu0 0.0
        %759 = vmatpush1.msra.mxu0 0.0
        %760 = vmatprep.subr.mxu0 0.0
        %761 = vmatpush1.msra.mxu0 0.0
        %762 = vmatprep.mubr.f32.mxu0 0.0
        %v763 = vand.u32 %v347, 4294901760
        %764 = vmatmul.mubr.f32.gmra.mrb[0].mxu0 %v763
        %v765 = vpop.f32.mrb[0].mxu0
        %v766 = vadd.f32 %v681, %v765
        %v767 = vpop.f32.mrb[0].mxu0
        %768 = vmatprep.mubr.f32.mxu0 0.0
        %v769 = vand.u32 %v350, 4294901760
        %770 = vmatmul.mubr.f32.gmra.mrb[0].mxu0 %v769
        %v771 = vpop.f32.mrb[0].mxu0
        %v772 = vadd.f32 %v689, %v771
        %v773 = vpop.f32.mrb[0].mxu0
        %774 = vdwg.mxu0
        %775 = vmatprep.subr.mxu0 0.0
        %v776 = vand.u32 %v344, 4294901760
        %777 = vmatpush1.msra.mxu0 %v776
        %778 = vmatprep.subr.mxu0 0.0
        %v779 = vand.u32 %v345, 4294901760
        %780 = vmatpush1.msra.mxu0 %v779
        %781 = vmatprep.subr.mxu0 0.0
        %782 = vmatpush1.msra.mxu0 0.0
        %783 = vmatprep.subr.mxu0 0.0
        %784 = vmatpush1.msra.mxu0 0.0
        %785 = vmatprep.subr.mxu0 0.0
        %786 = vmatpush1.msra.mxu0 0.0
        %787 = vmatprep.subr.mxu0 0.0
        %788 = vmatpush1.msra.mxu0 0.0
        %789 = vmatprep.subr.mxu0 0.0
        %790 = vmatpush1.msra.mxu0 0.0
        %791 = vmatprep.subr.mxu0 0.0
        %792 = vmatpush1.msra.mxu0 0.0
        %793 = vmatprep.subr.mxu0 0.0
        %794 = vmatpush1.msra.mxu0 0.0
        %795 = vmatprep.subr.mxu0 0.0
        %796 = vmatpush1.msra.mxu0 0.0
        %797 = vmatprep.subr.mxu0 0.0
        %798 = vmatpush1.msra.mxu0 0.0
        %799 = vmatprep.subr.mxu0 0.0
        %800 = vmatpush1.msra.mxu0 0.0
        %801 = vmatprep.subr.mxu0 0.0
        %802 = vmatpush1.msra.mxu0 0.0
        %803 = vmatprep.subr.mxu0 0.0
        %804 = vmatpush1.msra.mxu0 0.0
        %805 = vmatprep.subr.mxu0 0.0
        %806 = vmatpush1.msra.mxu0 0.0
        %807 = vmatprep.subr.mxu0 0.0
        %808 = vmatpush1.msra.mxu0 0.0
        %809 = vmatprep.subr.mxu0 0.0
        %810 = vmatpush1.msra.mxu0 0.0
        %811 = vmatprep.subr.mxu0 0.0
        %812 = vmatpush1.msra.mxu0 0.0
        %813 = vmatprep.subr.mxu0 0.0
        %814 = vmatpush1.msra.mxu0 0.0
        %815 = vmatprep.subr.mxu0 0.0
        %816 = vmatpush1.msra.mxu0 0.0
        %817 = vmatprep.subr.mxu0 0.0
        %818 = vmatpush1.msra.mxu0 0.0
        %819 = vmatprep.subr.mxu0 0.0
        %820 = vmatpush1.msra.mxu0 0.0
        %821 = vmatprep.subr.mxu0 0.0
        %822 = vmatpush1.msra.mxu0 0.0
        %823 = vmatprep.subr.mxu0 0.0
        %824 = vmatpush1.msra.mxu0 0.0
        %825 = vmatprep.subr.mxu0 0.0
        %826 = vmatpush1.msra.mxu0 0.0
        %827 = vmatprep.subr.mxu0 0.0
        %828 = vmatpush1.msra.mxu0 0.0
        %829 = vmatprep.subr.mxu0 0.0
        %830 = vmatpush1.msra.mxu0 0.0
        %831 = vmatprep.subr.mxu0 0.0
        %832 = vmatpush1.msra.mxu0 0.0
        %833 = vmatprep.subr.mxu0 0.0
        %834 = vmatpush1.msra.mxu0 0.0
        %835 = vmatprep.subr.mxu0 0.0
        %836 = vmatpush1.msra.mxu0 0.0
        %837 = vmatprep.subr.mxu0 0.0
        %838 = vmatpush1.msra.mxu0 0.0
        %839 = vmatprep.subr.mxu0 0.0
        %840 = vmatpush1.msra.mxu0 0.0
        %841 = vmatprep.mubr.f32.mxu0 0.0
        %v842 = vand.u32 %v347, 4294901760
        %843 = vmatmul.mubr.f32.gmra.mrb[0].mxu0 %v842
        %v844 = vpop.f32.mrb[0].mxu0
        %v845 = vadd.f32 %v766, %v844
        %v846 = vpop.f32.mrb[0].mxu0
        %847 = vmatprep.mubr.f32.mxu0 0.0
        %v848 = vand.u32 %v350, 4294901760
        %849 = vmatmul.mubr.f32.gmra.mrb[0].mxu0 %v848
        %v850 = vpop.f32.mrb[0].mxu0
        %v851 = vadd.f32 %v772, %v850
        %v852 = vpop.f32.mrb[0].mxu0
        %853 = vdwg.mxu0
        %v854 = vld [vmem:[#allocation9] sm:$0xff]
        %v855 = vld [vmem:[#allocation9 + $0x8] sm:$0xff]
        %v857 = vsel %vm289, %v845, 0
        %v860 = vsel %vm289, %v851, 0
        %862 = vmatprep.subr.mxu0 0.0
        %v863 = vand.u32 %v854, 4294901760
        %864 = vmatpush1.msra.mxu0 %v863
        %865 = vmatprep.subr.mxu0 0.0
        %v866 = vand.u32 %v855, 4294901760
        %867 = vmatpush1.msra.mxu0 %v866
        %868 = vmatprep.subr.mxu0 0.0
        %869 = vmatpush1.msra.mxu0 0.0
        %870 = vmatprep.subr.mxu0 0.0
        %871 = vmatpush1.msra.mxu0 0.0
        %872 = vmatprep.subr.mxu0 0.0
        %873 = vmatpush1.msra.mxu0 0.0
        %874 = vmatprep.subr.mxu0 0.0
        %875 = vmatpush1.msra.mxu0 0.0
        %876 = vmatprep.subr.mxu0 0.0
        %877 = vmatpush1.msra.mxu0 0.0
        %878 = vmatprep.subr.mxu0 0.0
        %879 = vmatpush1.msra.mxu0 0.0
        %880 = vmatprep.subr.mxu0 0.0
        %881 = vmatpush1.msra.mxu0 0.0
        %882 = vmatprep.subr.mxu0 0.0
        %883 = vmatpush1.msra.mxu0 0.0
        %884 = vmatprep.subr.mxu0 0.0
        %885 = vmatpush1.msra.mxu0 0.0
        %886 = vmatprep.subr.mxu0 0.0
        %887 = vmatpush1.msra.mxu0 0.0
        %888 = vmatprep.subr.mxu0 0.0
        %889 = vmatpush1.msra.mxu0 0.0
        %890 = vmatprep.subr.mxu0 0.0
        %891 = vmatpush1.msra.mxu0 0.0
        %892 = vmatprep.subr.mxu0 0.0
        %893 = vmatpush1.msra.mxu0 0.0
        %894 = vmatprep.subr.mxu0 0.0
        %895 = vmatpush1.msra.mxu0 0.0
        %896 = vmatprep.subr.mxu0 0.0
        %897 = vmatpush1.msra.mxu0 0.0
        %898 = vmatprep.subr.mxu0 0.0
        %899 = vmatpush1.msra.mxu0 0.0
        %900 = vmatprep.subr.mxu0 0.0
        %901 = vmatpush1.msra.mxu0 0.0
        %902 = vmatprep.subr.mxu0 0.0
        %903 = vmatpush1.msra.mxu0 0.0
        %904 = vmatprep.subr.mxu0 0.0
        %905 = vmatpush1.msra.mxu0 0.0
        %906 = vmatprep.subr.mxu0 0.0
        %907 = vmatpush1.msra.mxu0 0.0
        %908 = vmatprep.subr.mxu0 0.0
        %909 = vmatpush1.msra.mxu0 0.0
        %910 = vmatprep.subr.mxu0 0.0
        %911 = vmatpush1.msra.mxu0 0.0
        %912 = vmatprep.subr.mxu0 0.0
        %913 = vmatpush1.msra.mxu0 0.0
        %914 = vmatprep.subr.mxu0 0.0
        %915 = vmatpush1.msra.mxu0 0.0
        %916 = vmatprep.subr.mxu0 0.0
        %917 = vmatpush1.msra.mxu0 0.0
        %918 = vmatprep.subr.mxu0 0.0
        %919 = vmatpush1.msra.mxu0 0.0
        %920 = vmatprep.subr.mxu0 0.0
        %921 = vmatpush1.msra.mxu0 0.0
        %922 = vmatprep.subr.mxu0 0.0
        %923 = vmatpush1.msra.mxu0 0.0
        %924 = vmatprep.subr.mxu0 0.0
        %925 = vmatpush1.msra.mxu0 0.0
        %926 = vmatprep.subr.mxu0 0.0
        %927 = vmatpush1.msra.mxu0 0.0
        %928 = vmatprep.mubr.f32.mxu0 0.0
        %v929 = vand.u32 %v857, 4294901760
        %v930 = vsub.f32 %v857, %v929
        %v931 = vand.u32 %v930, 4294901760
        %v932 = vsub.f32 %v930, %v931
        %v933 = vand.u32 %v932, 4294901760
        %934 = vmatmul.mubr.f32.gmra.mrb[0].mxu0 %v933
        %v935 = vpop.f32.mrb[0].mxu0
        %v936 = vadd.f32 0.0, %v935
        %v937 = vpop.f32.mrb[0].mxu0
        %938 = vmatprep.mubr.f32.mxu0 0.0
        %v939 = vand.u32 %v860, 4294901760
        %v940 = vsub.f32 %v860, %v939
        %v941 = vand.u32 %v940, 4294901760
        %v942 = vsub.f32 %v940, %v941
        %v943 = vand.u32 %v942, 4294901760
        %944 = vmatmul.mubr.f32.gmra.mrb[0].mxu0 %v943
        %v945 = vpop.f32.mrb[0].mxu0
        %v946 = vadd.f32 0.0, %v945
        %v947 = vpop.f32.mrb[0].mxu0
        %948 = vdwg.mxu0
        %949 = vmatprep.subr.mxu0 0.0
        %v950 = vand.u32 %v854, 4294901760
        %v951 = vsub.f32 %v854, %v950
        %v952 = vand.u32 %v951, 4294901760
        %v953 = vsub.f32 %v951, %v952
        %v954 = vand.u32 %v953, 4294901760
        %955 = vmatpush1.msra.mxu0 %v954
        %956 = vmatprep.subr.mxu0 0.0
        %v957 = vand.u32 %v855, 4294901760
        %v958 = vsub.f32 %v855, %v957
        %v959 = vand.u32 %v958, 4294901760
        %v960 = vsub.f32 %v958, %v959
        %v961 = vand.u32 %v960, 4294901760
        %962 = vmatpush1.msra.mxu0 %v961
        %963 = vmatprep.subr.mxu0 0.0
        %964 = vmatpush1.msra.mxu0 0.0
        %965 = vmatprep.subr.mxu0 0.0
        %966 = vmatpush1.msra.mxu0 0.0
        %967 = vmatprep.subr.mxu0 0.0
        %968 = vmatpush1.msra.mxu0 0.0
        %969 = vmatprep.subr.mxu0 0.0
        %970 = vmatpush1.msra.mxu0 0.0
        %971 = vmatprep.subr.mxu0 0.0
        %972 = vmatpush1.msra.mxu0 0.0
        %973 = vmatprep.subr.mxu0 0.0
        %974 = vmatpush1.msra.mxu0 0.0
        %975 = vmatprep.subr.mxu0 0.0
        %976 = vmatpush1.msra.mxu0 0.0
        %977 = vmatprep.subr.mxu0 0.0
        %978 = vmatpush1.msra.mxu0 0.0
        %979 = vmatprep.subr.mxu0 0.0
        %980 = vmatpush1.msra.mxu0 0.0
        %981 = vmatprep.subr.mxu0 0.0
        %982 = vmatpush1.msra.mxu0 0.0
        %983 = vmatprep.subr.mxu0 0.0
        %984 = vmatpush1.msra.mxu0 0.0
        %985 = vmatprep.subr.mxu0 0.0
        %986 = vmatpush1.msra.mxu0 0.0
        %987 = vmatprep.subr.mxu0 0.0
        %988 = vmatpush1.msra.mxu0 0.0
        %989 = vmatprep.subr.mxu0 0.0
        %990 = vmatpush1.msra.mxu0 0.0
        %991 = vmatprep.subr.mxu0 0.0
        %992 = vmatpush1.msra.mxu0 0.0
        %993 = vmatprep.subr.mxu0 0.0
        %994 = vmatpush1.msra.mxu0 0.0
        %995 = vmatprep.subr.mxu0 0.0
        %996 = vmatpush1.msra.mxu0 0.0
        %997 = vmatprep.subr.mxu0 0.0
        %998 = vmatpush1.msra.mxu0 0.0
        %999 = vmatprep.subr.mxu0 0.0
        %1000 = vmatpush1.msra.mxu0 0.0
        %1001 = vmatprep.subr.mxu0 0.0
        %1002 = vmatpush1.msra.mxu0 0.0
        %1003 = vmatprep.subr.mxu0 0.0
        %1004 = vmatpush1.msra.mxu0 0.0
        %1005 = vmatprep.subr.mxu0 0.0
        %1006 = vmatpush1.msra.mxu0 0.0
        %1007 = vmatprep.subr.mxu0 0.0
        %1008 = vmatpush1.msra.mxu0 0.0
        %1009 = vmatprep.subr.mxu0 0.0
        %1010 = vmatpush1.msra.mxu0 0.0
        %1011 = vmatprep.subr.mxu0 0.0
        %1012 = vmatpush1.msra.mxu0 0.0
        %1013 = vmatprep.subr.mxu0 0.0
        %1014 = vmatpush1.msra.mxu0 0.0
        %1015 = vmatprep.subr.mxu0 0.0
        %1016 = vmatpush1.msra.mxu0 0.0
        %1017 = vmatprep.subr.mxu0 0.0
        %1018 = vmatpush1.msra.mxu0 0.0
        %1019 = vmatprep.subr.mxu0 0.0
        %1020 = vmatpush1.msra.mxu0 0.0
        %1021 = vmatprep.subr.mxu0 0.0
        %1022 = vmatpush1.msra.mxu0 0.0
        %1023 = vmatprep.mubr.f32.mxu0 0.0
        %v1024 = vand.u32 %v857, 4294901760
        %1025 = vmatmul.mubr.f32.gmra.mrb[0].mxu0 %v1024
        %v1026 = vpop.f32.mrb[0].mxu0
        %v1027 = vadd.f32 %v936, %v1026
        %v1028 = vpop.f32.mrb[0].mxu0
        %1029 = vmatprep.mubr.f32.mxu0 0.0
        %v1030 = vand.u32 %v860, 4294901760
        %1031 = vmatmul.mubr.f32.gmra.mrb[0].mxu0 %v1030
        %v1032 = vpop.f32.mrb[0].mxu0
        %v1033 = vadd.f32 %v946, %v1032
        %v1034 = vpop.f32.mrb[0].mxu0
        %1035 = vdwg.mxu0
        %1036 = vmatprep.subr.mxu0 0.0
        %v1037 = vand.u32 %v854, 4294901760
        %v1038 = vsub.f32 %v854, %v1037
        %1039 = vmatpush1.msra.mxu0 %v1038
        %1040 = vmatprep.subr.mxu0 0.0
        %v1041 = vand.u32 %v855, 4294901760
        %v1042 = vsub.f32 %v855, %v1041
        %1043 = vmatpush1.msra.mxu0 %v1042
        %1044 = vmatprep.subr.mxu0 0.0
        %1045 = vmatpush1.msra.mxu0 0.0
        %1046 = vmatprep.subr.mxu0 0.0
        %1047 = vmatpush1.msra.mxu0 0.0
        %1048 = vmatprep.subr.mxu0 0.0
        %1049 = vmatpush1.msra.mxu0 0.0
        %1050 = vmatprep.subr.mxu0 0.0
        %1051 = vmatpush1.msra.mxu0 0.0
        %1052 = vmatprep.subr.mxu0 0.0
        %1053 = vmatpush1.msra.mxu0 0.0
        %1054 = vmatprep.subr.mxu0 0.0
        %1055 = vmatpush1.msra.mxu0 0.0
        %1056 = vmatprep.subr.mxu0 0.0
        %1057 = vmatpush1.msra.mxu0 0.0
        %1058 = vmatprep.subr.mxu0 0.0
        %1059 = vmatpush1.msra.mxu0 0.0
        %1060 = vmatprep.subr.mxu0 0.0
        %1061 = vmatpush1.msra.mxu0 0.0
        %1062 = vmatprep.subr.mxu0 0.0
        %1063 = vmatpush1.msra.mxu0 0.0
        %1064 = vmatprep.subr.mxu0 0.0
        %1065 = vmatpush1.msra.mxu0 0.0
        %1066 = vmatprep.subr.mxu0 0.0
        %1067 = vmatpush1.msra.mxu0 0.0
        %1068 = vmatprep.subr.mxu0 0.0
        %1069 = vmatpush1.msra.mxu0 0.0
        %1070 = vmatprep.subr.mxu0 0.0
        %1071 = vmatpush1.msra.mxu0 0.0
        %1072 = vmatprep.subr.mxu0 0.0
        %1073 = vmatpush1.msra.mxu0 0.0
        %1074 = vmatprep.subr.mxu0 0.0
        %1075 = vmatpush1.msra.mxu0 0.0
        %1076 = vmatprep.subr.mxu0 0.0
        %1077 = vmatpush1.msra.mxu0 0.0
        %1078 = vmatprep.subr.mxu0 0.0
        %1079 = vmatpush1.msra.mxu0 0.0
        %1080 = vmatprep.subr.mxu0 0.0
        %1081 = vmatpush1.msra.mxu0 0.0
        %1082 = vmatprep.subr.mxu0 0.0
        %1083 = vmatpush1.msra.mxu0 0.0
        %1084 = vmatprep.subr.mxu0 0.0
        %1085 = vmatpush1.msra.mxu0 0.0
        %1086 = vmatprep.subr.mxu0 0.0
        %1087 = vmatpush1.msra.mxu0 0.0
        %1088 = vmatprep.subr.mxu0 0.0
        %1089 = vmatpush1.msra.mxu0 0.0
        %1090 = vmatprep.subr.mxu0 0.0
        %1091 = vmatpush1.msra.mxu0 0.0
        %1092 = vmatprep.subr.mxu0 0.0
        %1093 = vmatpush1.msra.mxu0 0.0
        %1094 = vmatprep.subr.mxu0 0.0
        %1095 = vmatpush1.msra.mxu0 0.0
        %1096 = vmatprep.subr.mxu0 0.0
        %1097 = vmatpush1.msra.mxu0 0.0
        %1098 = vmatprep.subr.mxu0 0.0
        %1099 = vmatpush1.msra.mxu0 0.0
        %1100 = vmatprep.subr.mxu0 0.0
        %1101 = vmatpush1.msra.mxu0 0.0
        %1102 = vmatprep.subr.mxu0 0.0
        %1103 = vmatpush1.msra.mxu0 0.0
        %1104 = vmatprep.mubr.f32.mxu0 0.0
        %v1105 = vand.u32 %v857, 4294901760
        %v1106 = vsub.f32 %v857, %v1105
        %1107 = vmatmul.mubr.f32.gmra.mrb[0].mxu0 %v1106
        %v1108 = vpop.f32.mrb[0].mxu0
        %v1109 = vadd.f32 %v1027, %v1108
        %v1110 = vpop.f32.mrb[0].mxu0
        %1111 = vmatprep.mubr.f32.mxu0 0.0
        %v1112 = vand.u32 %v860, 4294901760
        %v1113 = vsub.f32 %v860, %v1112
        %1114 = vmatmul.mubr.f32.gmra.mrb[0].mxu0 %v1113
        %v1115 = vpop.f32.mrb[0].mxu0
        %v1116 = vadd.f32 %v1033, %v1115
        %v1117 = vpop.f32.mrb[0].mxu0
        %1118 = vdwg.mxu0
        %1119 = vmatprep.subr.mxu0 0.0
        %v1120 = vand.u32 %v854, 4294901760
        %1121 = vmatpush1.msra.mxu0 %v1120
        %1122 = vmatprep.subr.mxu0 0.0
        %v1123 = vand.u32 %v855, 4294901760
        %1124 = vmatpush1.msra.mxu0 %v1123
        %1125 = vmatprep.subr.mxu0 0.0
        %1126 = vmatpush1.msra.mxu0 0.0
        %1127 = vmatprep.subr.mxu0 0.0
        %1128 = vmatpush1.msra.mxu0 0.0
        %1129 = vmatprep.subr.mxu0 0.0
        %1130 = vmatpush1.msra.mxu0 0.0
        %1131 = vmatprep.subr.mxu0 0.0
        %1132 = vmatpush1.msra.mxu0 0.0
        %1133 = vmatprep.subr.mxu0 0.0
        %1134 = vmatpush1.msra.mxu0 0.0
        %1135 = vmatprep.subr.mxu0 0.0
        %1136 = vmatpush1.msra.mxu0 0.0
        %1137 = vmatprep.subr.mxu0 0.0
        %1138 = vmatpush1.msra.mxu0 0.0
        %1139 = vmatprep.subr.mxu0 0.0
        %1140 = vmatpush1.msra.mxu0 0.0
        %1141 = vmatprep.subr.mxu0 0.0
        %1142 = vmatpush1.msra.mxu0 0.0
        %1143 = vmatprep.subr.mxu0 0.0
        %1144 = vmatpush1.msra.mxu0 0.0
        %1145 = vmatprep.subr.mxu0 0.0
        %1146 = vmatpush1.msra.mxu0 0.0
        %1147 = vmatprep.subr.mxu0 0.0
        %1148 = vmatpush1.msra.mxu0 0.0
        %1149 = vmatprep.subr.mxu0 0.0
        %1150 = vmatpush1.msra.mxu0 0.0
        %1151 = vmatprep.subr.mxu0 0.0
        %1152 = vmatpush1.msra.mxu0 0.0
        %1153 = vmatprep.subr.mxu0 0.0
        %1154 = vmatpush1.msra.mxu0 0.0
        %1155 = vmatprep.subr.mxu0 0.0
        %1156 = vmatpush1.msra.mxu0 0.0
        %1157 = vmatprep.subr.mxu0 0.0
        %1158 = vmatpush1.msra.mxu0 0.0
        %1159 = vmatprep.subr.mxu0 0.0
        %1160 = vmatpush1.msra.mxu0 0.0
        %1161 = vmatprep.subr.mxu0 0.0
        %1162 = vmatpush1.msra.mxu0 0.0
        %1163 = vmatprep.subr.mxu0 0.0
        %1164 = vmatpush1.msra.mxu0 0.0
        %1165 = vmatprep.subr.mxu0 0.0
        %1166 = vmatpush1.msra.mxu0 0.0
        %1167 = vmatprep.subr.mxu0 0.0
        %1168 = vmatpush1.msra.mxu0 0.0
        %1169 = vmatprep.subr.mxu0 0.0
        %1170 = vmatpush1.msra.mxu0 0.0
        %1171 = vmatprep.subr.mxu0 0.0
        %1172 = vmatpush1.msra.mxu0 0.0
        %1173 = vmatprep.subr.mxu0 0.0
        %1174 = vmatpush1.msra.mxu0 0.0
        %1175 = vmatprep.subr.mxu0 0.0
        %1176 = vmatpush1.msra.mxu0 0.0
        %1177 = vmatprep.subr.mxu0 0.0
        %1178 = vmatpush1.msra.mxu0 0.0
        %1179 = vmatprep.subr.mxu0 0.0
        %1180 = vmatpush1.msra.mxu0 0.0
        %1181 = vmatprep.subr.mxu0 0.0
        %1182 = vmatpush1.msra.mxu0 0.0
        %1183 = vmatprep.subr.mxu0 0.0
        %1184 = vmatpush1.msra.mxu0 0.0
        %1185 = vmatprep.mubr.f32.mxu0 0.0
        %v1186 = vand.u32 %v857, 4294901760
        %v1187 = vsub.f32 %v857, %v1186
        %v1188 = vand.u32 %v1187, 4294901760
        %1189 = vmatmul.mubr.f32.gmra.mrb[0].mxu0 %v1188
        %v1190 = vpop.f32.mrb[0].mxu0
        %v1191 = vadd.f32 %v1109, %v1190
        %v1192 = vpop.f32.mrb[0].mxu0
        %1193 = vmatprep.mubr.f32.mxu0 0.0
        %v1194 = vand.u32 %v860, 4294901760
        %v1195 = vsub.f32 %v860, %v1194
        %v1196 = vand.u32 %v1195, 4294901760
        %1197 = vmatmul.mubr.f32.gmra.mrb[0].mxu0 %v1196
        %v1198 = vpop.f32.mrb[0].mxu0
        %v1199 = vadd.f32 %v1116, %v1198
        %v1200 = vpop.f32.mrb[0].mxu0
        %1201 = vdwg.mxu0
        %1202 = vmatprep.subr.mxu0 0.0
        %v1203 = vand.u32 %v854, 4294901760
        %v1204 = vsub.f32 %v854, %v1203
        %v1205 = vand.u32 %v1204, 4294901760
        %1206 = vmatpush1.msra.mxu0 %v1205
        %1207 = vmatprep.subr.mxu0 0.0
        %v1208 = vand.u32 %v855, 4294901760
        %v1209 = vsub.f32 %v855, %v1208
        %v1210 = vand.u32 %v1209, 4294901760
        %1211 = vmatpush1.msra.mxu0 %v1210
        %1212 = vmatprep.subr.mxu0 0.0
        %1213 = vmatpush1.msra.mxu0 0.0
        %1214 = vmatprep.subr.mxu0 0.0
        %1215 = vmatpush1.msra.mxu0 0.0
        %1216 = vmatprep.subr.mxu0 0.0
        %1217 = vmatpush1.msra.mxu0 0.0
        %1218 = vmatprep.subr.mxu0 0.0
        %1219 = vmatpush1.msra.mxu0 0.0
        %1220 = vmatprep.subr.mxu0 0.0
        %1221 = vmatpush1.msra.mxu0 0.0
        %1222 = vmatprep.subr.mxu0 0.0
        %1223 = vmatpush1.msra.mxu0 0.0
        %1224 = vmatprep.subr.mxu0 0.0
        %1225 = vmatpush1.msra.mxu0 0.0
        %1226 = vmatprep.subr.mxu0 0.0
        %1227 = vmatpush1.msra.mxu0 0.0
        %1228 = vmatprep.subr.mxu0 0.0
        %1229 = vmatpush1.msra.mxu0 0.0
        %1230 = vmatprep.subr.mxu0 0.0
        %1231 = vmatpush1.msra.mxu0 0.0
        %1232 = vmatprep.subr.mxu0 0.0
        %1233 = vmatpush1.msra.mxu0 0.0
        %1234 = vmatprep.subr.mxu0 0.0
        %1235 = vmatpush1.msra.mxu0 0.0
        %1236 = vmatprep.subr.mxu0 0.0
        %1237 = vmatpush1.msra.mxu0 0.0
        %1238 = vmatprep.subr.mxu0 0.0
        %1239 = vmatpush1.msra.mxu0 0.0
        %1240 = vmatprep.subr.mxu0 0.0
        %1241 = vmatpush1.msra.mxu0 0.0
        %1242 = vmatprep.subr.mxu0 0.0
        %1243 = vmatpush1.msra.mxu0 0.0
        %1244 = vmatprep.subr.mxu0 0.0
        %1245 = vmatpush1.msra.mxu0 0.0
        %1246 = vmatprep.subr.mxu0 0.0
        %1247 = vmatpush1.msra.mxu0 0.0
        %1248 = vmatprep.subr.mxu0 0.0
        %1249 = vmatpush1.msra.mxu0 0.0
        %1250 = vmatprep.subr.mxu0 0.0
        %1251 = vmatpush1.msra.mxu0 0.0
        %1252 = vmatprep.subr.mxu0 0.0
        %1253 = vmatpush1.msra.mxu0 0.0
        %1254 = vmatprep.subr.mxu0 0.0
        %1255 = vmatpush1.msra.mxu0 0.0
        %1256 = vmatprep.subr.mxu0 0.0
        %1257 = vmatpush1.msra.mxu0 0.0
        %1258 = vmatprep.subr.mxu0 0.0
        %1259 = vmatpush1.msra.mxu0 0.0
        %1260 = vmatprep.subr.mxu0 0.0
        %1261 = vmatpush1.msra.mxu0 0.0
        %1262 = vmatprep.subr.mxu0 0.0
        %1263 = vmatpush1.msra.mxu0 0.0
        %1264 = vmatprep.subr.mxu0 0.0
        %1265 = vmatpush1.msra.mxu0 0.0
        %1266 = vmatprep.subr.mxu0 0.0
        %1267 = vmatpush1.msra.mxu0 0.0
        %1268 = vmatprep.subr.mxu0 0.0
        %1269 = vmatpush1.msra.mxu0 0.0
        %1270 = vmatprep.subr.mxu0 0.0
        %1271 = vmatpush1.msra.mxu0 0.0
        %1272 = vmatprep.mubr.f32.mxu0 0.0
        %v1273 = vand.u32 %v857, 4294901760
        %1274 = vmatmul.mubr.f32.gmra.mrb[0].mxu0 %v1273
        %v1275 = vpop.f32.mrb[0].mxu0
        %v1276 = vadd.f32 %v1191, %v1275
        %v1277 = vpop.f32.mrb[0].mxu0
        %1278 = vmatprep.mubr.f32.mxu0 0.0
        %v1279 = vand.u32 %v860, 4294901760
        %1280 = vmatmul.mubr.f32.gmra.mrb[0].mxu0 %v1279
        %v1281 = vpop.f32.mrb[0].mxu0
        %v1282 = vadd.f32 %v1199, %v1281
        %v1283 = vpop.f32.mrb[0].mxu0
        %1284 = vdwg.mxu0
        %1285 = vmatprep.subr.mxu0 0.0
        %v1286 = vand.u32 %v854, 4294901760
        %1287 = vmatpush1.msra.mxu0 %v1286
        %1288 = vmatprep.subr.mxu0 0.0
        %v1289 = vand.u32 %v855, 4294901760
        %1290 = vmatpush1.msra.mxu0 %v1289
        %1291 = vmatprep.subr.mxu0 0.0
        %1292 = vmatpush1.msra.mxu0 0.0
        %1293 = vmatprep.subr.mxu0 0.0
        %1294 = vmatpush1.msra.mxu0 0.0
        %1295 = vmatprep.subr.mxu0 0.0
        %1296 = vmatpush1.msra.mxu0 0.0
        %1297 = vmatprep.subr.mxu0 0.0
        %1298 = vmatpush1.msra.mxu0 0.0
        %1299 = vmatprep.subr.mxu0 0.0
        %1300 = vmatpush1.msra.mxu0 0.0
        %1301 = vmatprep.subr.mxu0 0.0
        %1302 = vmatpush1.msra.mxu0 0.0
        %1303 = vmatprep.subr.mxu0 0.0
        %1304 = vmatpush1.msra.mxu0 0.0
        %1305 = vmatprep.subr.mxu0 0.0
        %1306 = vmatpush1.msra.mxu0 0.0
        %1307 = vmatprep.subr.mxu0 0.0
        %1308 = vmatpush1.msra.mxu0 0.0
        %1309 = vmatprep.subr.mxu0 0.0
        %1310 = vmatpush1.msra.mxu0 0.0
        %1311 = vmatprep.subr.mxu0 0.0
        %1312 = vmatpush1.msra.mxu0 0.0
        %1313 = vmatprep.subr.mxu0 0.0
        %1314 = vmatpush1.msra.mxu0 0.0
        %1315 = vmatprep.subr.mxu0 0.0
        %1316 = vmatpush1.msra.mxu0 0.0
        %1317 = vmatprep.subr.mxu0 0.0
        %1318 = vmatpush1.msra.mxu0 0.0
        %1319 = vmatprep.subr.mxu0 0.0
        %1320 = vmatpush1.msra.mxu0 0.0
        %1321 = vmatprep.subr.mxu0 0.0
        %1322 = vmatpush1.msra.mxu0 0.0
        %1323 = vmatprep.subr.mxu0 0.0
        %1324 = vmatpush1.msra.mxu0 0.0
        %1325 = vmatprep.subr.mxu0 0.0
        %1326 = vmatpush1.msra.mxu0 0.0
        %1327 = vmatprep.subr.mxu0 0.0
        %1328 = vmatpush1.msra.mxu0 0.0
        %1329 = vmatprep.subr.mxu0 0.0
        %1330 = vmatpush1.msra.mxu0 0.0
        %1331 = vmatprep.subr.mxu0 0.0
        %1332 = vmatpush1.msra.mxu0 0.0
        %1333 = vmatprep.subr.mxu0 0.0
        %1334 = vmatpush1.msra.mxu0 0.0
        %1335 = vmatprep.subr.mxu0 0.0
        %1336 = vmatpush1.msra.mxu0 0.0
        %1337 = vmatprep.subr.mxu0 0.0
        %1338 = vmatpush1.msra.mxu0 0.0
        %1339 = vmatprep.subr.mxu0 0.0
        %1340 = vmatpush1.msra.mxu0 0.0
        %1341 = vmatprep.subr.mxu0 0.0
        %1342 = vmatpush1.msra.mxu0 0.0
        %1343 = vmatprep.subr.mxu0 0.0
        %1344 = vmatpush1.msra.mxu0 0.0
        %1345 = vmatprep.subr.mxu0 0.0
        %1346 = vmatpush1.msra.mxu0 0.0
        %1347 = vmatprep.subr.mxu0 0.0
        %1348 = vmatpush1.msra.mxu0 0.0
        %1349 = vmatprep.subr.mxu0 0.0
        %1350 = vmatpush1.msra.mxu0 0.0
        %1351 = vmatprep.mubr.f32.mxu0 0.0
        %v1352 = vand.u32 %v857, 4294901760
        %1353 = vmatmul.mubr.f32.gmra.mrb[0].mxu0 %v1352
        %v1354 = vpop.f32.mrb[0].mxu0
        %v1355 = vadd.f32 %v1276, %v1354
        %v1356 = vpop.f32.mrb[0].mxu0
        %1357 = vmatprep.mubr.f32.mxu0 0.0
        %v1358 = vand.u32 %v860, 4294901760
        %1359 = vmatmul.mubr.f32.gmra.mrb[0].mxu0 %v1358
        %v1360 = vpop.f32.mrb[0].mxu0
        %v1361 = vadd.f32 %v1282, %v1360
        %v1362 = vpop.f32.mrb[0].mxu0
        %1363 = vdwg.mxu0
        %1364 = vrot.lane.b32.xlu0 %v845, 112
        %v1365 = vpop.permute.xlu0 %1364
        %1366 = vrot.lane.b32.xlu0 %v851, 112
        %v1367 = vpop.permute.xlu0 %1366
        %v1368 = vsel %vm289, %v1365, 0
        %v1370 = vsel %vm289, %v1367, 0
        %1372 = vmatprep.subr.mxu0 0.0
        %v1373 = vand.u32 %v854, 4294901760
        %1374 = vmatpush1.msra.mxu0 %v1373
        %1375 = vmatprep.subr.mxu0 0.0
        %v1376 = vand.u32 %v855, 4294901760
        %1377 = vmatpush1.msra.mxu0 %v1376
        %1378 = vmatprep.subr.mxu0 0.0
        %1379 = vmatpush1.msra.mxu0 0.0
        %1380 = vmatprep.subr.mxu0 0.0
        %1381 = vmatpush1.msra.mxu0 0.0
        %1382 = vmatprep.subr.mxu0 0.0
        %1383 = vmatpush1.msra.mxu0 0.0
        %1384 = vmatprep.subr.mxu0 0.0
        %1385 = vmatpush1.msra.mxu0 0.0
        %1386 = vmatprep.subr.mxu0 0.0
        %1387 = vmatpush1.msra.mxu0 0.0
        %1388 = vmatprep.subr.mxu0 0.0
        %1389 = vmatpush1.msra.mxu0 0.0
        %1390 = vmatprep.subr.mxu0 0.0
        %1391 = vmatpush1.msra.mxu0 0.0
        %1392 = vmatprep.subr.mxu0 0.0
        %1393 = vmatpush1.msra.mxu0 0.0
        %1394 = vmatprep.subr.mxu0 0.0
        %1395 = vmatpush1.msra.mxu0 0.0
        %1396 = vmatprep.subr.mxu0 0.0
        %1397 = vmatpush1.msra.mxu0 0.0
        %1398 = vmatprep.subr.mxu0 0.0
        %1399 = vmatpush1.msra.mxu0 0.0
        %1400 = vmatprep.subr.mxu0 0.0
        %1401 = vmatpush1.msra.mxu0 0.0
        %1402 = vmatprep.subr.mxu0 0.0
        %1403 = vmatpush1.msra.mxu0 0.0
        %1404 = vmatprep.subr.mxu0 0.0
        %1405 = vmatpush1.msra.mxu0 0.0
        %1406 = vmatprep.subr.mxu0 0.0
        %1407 = vmatpush1.msra.mxu0 0.0
        %1408 = vmatprep.subr.mxu0 0.0
        %1409 = vmatpush1.msra.mxu0 0.0
        %1410 = vmatprep.subr.mxu0 0.0
        %1411 = vmatpush1.msra.mxu0 0.0
        %1412 = vmatprep.subr.mxu0 0.0
        %1413 = vmatpush1.msra.mxu0 0.0
        %1414 = vmatprep.subr.mxu0 0.0
        %1415 = vmatpush1.msra.mxu0 0.0
        %1416 = vmatprep.subr.mxu0 0.0
        %1417 = vmatpush1.msra.mxu0 0.0
        %1418 = vmatprep.subr.mxu0 0.0
        %1419 = vmatpush1.msra.mxu0 0.0
        %1420 = vmatprep.subr.mxu0 0.0
        %1421 = vmatpush1.msra.mxu0 0.0
        %1422 = vmatprep.subr.mxu0 0.0
        %1423 = vmatpush1.msra.mxu0 0.0
        %1424 = vmatprep.subr.mxu0 0.0
        %1425 = vmatpush1.msra.mxu0 0.0
        %1426 = vmatprep.subr.mxu0 0.0
        %1427 = vmatpush1.msra.mxu0 0.0
        %1428 = vmatprep.subr.mxu0 0.0
        %1429 = vmatpush1.msra.mxu0 0.0
        %1430 = vmatprep.subr.mxu0 0.0
        %1431 = vmatpush1.msra.mxu0 0.0
        %1432 = vmatprep.subr.mxu0 0.0
        %1433 = vmatpush1.msra.mxu0 0.0
        %1434 = vmatprep.subr.mxu0 0.0
        %1435 = vmatpush1.msra.mxu0 0.0
        %1436 = vmatprep.subr.mxu0 0.0
        %1437 = vmatpush1.msra.mxu0 0.0
        %1438 = vmatprep.mubr.f32.mxu0 0.0
        %v1439 = vand.u32 %v1368, 4294901760
        %v1440 = vsub.f32 %v1368, %v1439
        %v1441 = vand.u32 %v1440, 4294901760
        %v1442 = vsub.f32 %v1440, %v1441
        %v1443 = vand.u32 %v1442, 4294901760
        %1444 = vmatmul.mubr.f32.gmra.mrb[0].mxu0 %v1443
        %v1445 = vpop.f32.mrb[0].mxu0
        %v1446 = vadd.f32 0.0, %v1445
        %v1447 = vpop.f32.mrb[0].mxu0
        %1448 = vmatprep.mubr.f32.mxu0 0.0
        %v1449 = vand.u32 %v1370, 4294901760
        %v1450 = vsub.f32 %v1370, %v1449
        %v1451 = vand.u32 %v1450, 4294901760
        %v1452 = vsub.f32 %v1450, %v1451
        %v1453 = vand.u32 %v1452, 4294901760
        %1454 = vmatmul.mubr.f32.gmra.mrb[0].mxu0 %v1453
        %v1455 = vpop.f32.mrb[0].mxu0
        %v1456 = vadd.f32 0.0, %v1455
        %v1457 = vpop.f32.mrb[0].mxu0
        %1458 = vdwg.mxu0
        %1459 = vmatprep.subr.mxu0 0.0
        %v1460 = vand.u32 %v854, 4294901760
        %v1461 = vsub.f32 %v854, %v1460
        %v1462 = vand.u32 %v1461, 4294901760
        %v1463 = vsub.f32 %v1461, %v1462
        %v1464 = vand.u32 %v1463, 4294901760
        %1465 = vmatpush1.msra.mxu0 %v1464
        %1466 = vmatprep.subr.mxu0 0.0
        %v1467 = vand.u32 %v855, 4294901760
        %v1468 = vsub.f32 %v855, %v1467
        %v1469 = vand.u32 %v1468, 4294901760
        %v1470 = vsub.f32 %v1468, %v1469
        %v1471 = vand.u32 %v1470, 4294901760
        %1472 = vmatpush1.msra.mxu0 %v1471
        %1473 = vmatprep.subr.mxu0 0.0
        %1474 = vmatpush1.msra.mxu0 0.0
        %1475 = vmatprep.subr.mxu0 0.0
        %1476 = vmatpush1.msra.mxu0 0.0
        %1477 = vmatprep.subr.mxu0 0.0
        %1478 = vmatpush1.msra.mxu0 0.0
        %1479 = vmatprep.subr.mxu0 0.0
        %1480 = vmatpush1.msra.mxu0 0.0
        %1481 = vmatprep.subr.mxu0 0.0
        %1482 = vmatpush1.msra.mxu0 0.0
        %1483 = vmatprep.subr.mxu0 0.0
        %1484 = vmatpush1.msra.mxu0 0.0
        %1485 = vmatprep.subr.mxu0 0.0
        %1486 = vmatpush1.msra.mxu0 0.0
        %1487 = vmatprep.subr.mxu0 0.0
        %1488 = vmatpush1.msra.mxu0 0.0
        %1489 = vmatprep.subr.mxu0 0.0
        %1490 = vmatpush1.msra.mxu0 0.0
        %1491 = vmatprep.subr.mxu0 0.0
        %1492 = vmatpush1.msra.mxu0 0.0
        %1493 = vmatprep.subr.mxu0 0.0
        %1494 = vmatpush1.msra.mxu0 0.0
        %1495 = vmatprep.subr.mxu0 0.0
        %1496 = vmatpush1.msra.mxu0 0.0
        %1497 = vmatprep.subr.mxu0 0.0
        %1498 = vmatpush1.msra.mxu0 0.0
        %1499 = vmatprep.subr.mxu0 0.0
        %1500 = vmatpush1.msra.mxu0 0.0
        %1501 = vmatprep.subr.mxu0 0.0
        %1502 = vmatpush1.msra.mxu0 0.0
        %1503 = vmatprep.subr.mxu0 0.0
        %1504 = vmatpush1.msra.mxu0 0.0
        %1505 = vmatprep.subr.mxu0 0.0
        %1506 = vmatpush1.msra.mxu0 0.0
        %1507 = vmatprep.subr.mxu0 0.0
        %1508 = vmatpush1.msra.mxu0 0.0
        %1509 = vmatprep.subr.mxu0 0.0
        %1510 = vmatpush1.msra.mxu0 0.0
        %1511 = vmatprep.subr.mxu0 0.0
        %1512 = vmatpush1.msra.mxu0 0.0
        %1513 = vmatprep.subr.mxu0 0.0
        %1514 = vmatpush1.msra.mxu0 0.0
        %1515 = vmatprep.subr.mxu0 0.0
        %1516 = vmatpush1.msra.mxu0 0.0
        %1517 = vmatprep.subr.mxu0 0.0
        %1518 = vmatpush1.msra.mxu0 0.0
        %1519 = vmatprep.subr.mxu0 0.0
        %1520 = vmatpush1.msra.mxu0 0.0
        %1521 = vmatprep.subr.mxu0 0.0
        %1522 = vmatpush1.msra.mxu0 0.0
        %1523 = vmatprep.subr.mxu0 0.0
        %1524 = vmatpush1.msra.mxu0 0.0
        %1525 = vmatprep.subr.mxu0 0.0
        %1526 = vmatpush1.msra.mxu0 0.0
        %1527 = vmatprep.subr.mxu0 0.0
        %1528 = vmatpush1.msra.mxu0 0.0
        %1529 = vmatprep.subr.mxu0 0.0
        %1530 = vmatpush1.msra.mxu0 0.0
        %1531 = vmatprep.subr.mxu0 0.0
        %1532 = vmatpush1.msra.mxu0 0.0
        %1533 = vmatprep.mubr.f32.mxu0 0.0
        %v1534 = vand.u32 %v1368, 4294901760
        %1535 = vmatmul.mubr.f32.gmra.mrb[0].mxu0 %v1534
        %v1536 = vpop.f32.mrb[0].mxu0
        %v1537 = vadd.f32 %v1446, %v1536
        %v1538 = vpop.f32.mrb[0].mxu0
        %1539 = vmatprep.mubr.f32.mxu0 0.0
        %v1540 = vand.u32 %v1370, 4294901760
        %1541 = vmatmul.mubr.f32.gmra.mrb[0].mxu0 %v1540
        %v1542 = vpop.f32.mrb[0].mxu0
        %v1543 = vadd.f32 %v1456, %v1542
        %v1544 = vpop.f32.mrb[0].mxu0
        %1545 = vdwg.mxu0
        %1546 = vmatprep.subr.mxu0 0.0
        %v1547 = vand.u32 %v854, 4294901760
        %v1548 = vsub.f32 %v854, %v1547
        %1549 = vmatpush1.msra.mxu0 %v1548
        %1550 = vmatprep.subr.mxu0 0.0
        %v1551 = vand.u32 %v855, 4294901760
        %v1552 = vsub.f32 %v855, %v1551
        %1553 = vmatpush1.msra.mxu0 %v1552
        %1554 = vmatprep.subr.mxu0 0.0
        %1555 = vmatpush1.msra.mxu0 0.0
        %1556 = vmatprep.subr.mxu0 0.0
        %1557 = vmatpush1.msra.mxu0 0.0
        %1558 = vmatprep.subr.mxu0 0.0
        %1559 = vmatpush1.msra.mxu0 0.0
        %1560 = vmatprep.subr.mxu0 0.0
        %1561 = vmatpush1.msra.mxu0 0.0
        %1562 = vmatprep.subr.mxu0 0.0
        %1563 = vmatpush1.msra.mxu0 0.0
        %1564 = vmatprep.subr.mxu0 0.0
        %1565 = vmatpush1.msra.mxu0 0.0
        %1566 = vmatprep.subr.mxu0 0.0
        %1567 = vmatpush1.msra.mxu0 0.0
        %1568 = vmatprep.subr.mxu0 0.0
        %1569 = vmatpush1.msra.mxu0 0.0
        %1570 = vmatprep.subr.mxu0 0.0
        %1571 = vmatpush1.msra.mxu0 0.0
        %1572 = vmatprep.subr.mxu0 0.0
        %1573 = vmatpush1.msra.mxu0 0.0
        %1574 = vmatprep.subr.mxu0 0.0
        %1575 = vmatpush1.msra.mxu0 0.0
        %1576 = vmatprep.subr.mxu0 0.0
        %1577 = vmatpush1.msra.mxu0 0.0
        %1578 = vmatprep.subr.mxu0 0.0
        %1579 = vmatpush1.msra.mxu0 0.0
        %1580 = vmatprep.subr.mxu0 0.0
        %1581 = vmatpush1.msra.mxu0 0.0
        %1582 = vmatprep.subr.mxu0 0.0
        %1583 = vmatpush1.msra.mxu0 0.0
        %1584 = vmatprep.subr.mxu0 0.0
        %1585 = vmatpush1.msra.mxu0 0.0
        %1586 = vmatprep.subr.mxu0 0.0
        %1587 = vmatpush1.msra.mxu0 0.0
        %1588 = vmatprep.subr.mxu0 0.0
        %1589 = vmatpush1.msra.mxu0 0.0
        %1590 = vmatprep.subr.mxu0 0.0
        %1591 = vmatpush1.msra.mxu0 0.0
        %1592 = vmatprep.subr.mxu0 0.0
        %1593 = vmatpush1.msra.mxu0 0.0
        %1594 = vmatprep.subr.mxu0 0.0
        %1595 = vmatpush1.msra.mxu0 0.0
        %1596 = vmatprep.subr.mxu0 0.0
        %1597 = vmatpush1.msra.mxu0 0.0
        %1598 = vmatprep.subr.mxu0 0.0
        %1599 = vmatpush1.msra.mxu0 0.0
        %1600 = vmatprep.subr.mxu0 0.0
        %1601 = vmatpush1.msra.mxu0 0.0
        %1602 = vmatprep.subr.mxu0 0.0
        %1603 = vmatpush1.msra.mxu0 0.0
        %1604 = vmatprep.subr.mxu0 0.0
        %1605 = vmatpush1.msra.mxu0 0.0
        %1606 = vmatprep.subr.mxu0 0.0
        %1607 = vmatpush1.msra.mxu0 0.0
        %1608 = vmatprep.subr.mxu0 0.0
        %1609 = vmatpush1.msra.mxu0 0.0
        %1610 = vmatprep.subr.mxu0 0.0
        %1611 = vmatpush1.msra.mxu0 0.0
        %1612 = vmatprep.subr.mxu0 0.0
        %1613 = vmatpush1.msra.mxu0 0.0
        %1614 = vmatprep.mubr.f32.mxu0 0.0
        %v1615 = vand.u32 %v1368, 4294901760
        %v1616 = vsub.f32 %v1368, %v1615
        %1617 = vmatmul.mubr.f32.gmra.mrb[0].mxu0 %v1616
        %v1618 = vpop.f32.mrb[0].mxu0
        %v1619 = vadd.f32 %v1537, %v1618
        %v1620 = vpop.f32.mrb[0].mxu0
        %1621 = vmatprep.mubr.f32.mxu0 0.0
        %v1622 = vand.u32 %v1370, 4294901760
        %v1623 = vsub.f32 %v1370, %v1622
        %1624 = vmatmul.mubr.f32.gmra.mrb[0].mxu0 %v1623
        %v1625 = vpop.f32.mrb[0].mxu0
        %v1626 = vadd.f32 %v1543, %v1625
        %v1627 = vpop.f32.mrb[0].mxu0
        %1628 = vdwg.mxu0
        %1629 = vmatprep.subr.mxu0 0.0
        %v1630 = vand.u32 %v854, 4294901760
        %1631 = vmatpush1.msra.mxu0 %v1630
        %1632 = vmatprep.subr.mxu0 0.0
        %v1633 = vand.u32 %v855, 4294901760
        %1634 = vmatpush1.msra.mxu0 %v1633
        %1635 = vmatprep.subr.mxu0 0.0
        %1636 = vmatpush1.msra.mxu0 0.0
        %1637 = vmatprep.subr.mxu0 0.0
        %1638 = vmatpush1.msra.mxu0 0.0
        %1639 = vmatprep.subr.mxu0 0.0
        %1640 = vmatpush1.msra.mxu0 0.0
        %1641 = vmatprep.subr.mxu0 0.0
        %1642 = vmatpush1.msra.mxu0 0.0
        %1643 = vmatprep.subr.mxu0 0.0
        %1644 = vmatpush1.msra.mxu0 0.0
        %1645 = vmatprep.subr.mxu0 0.0
        %1646 = vmatpush1.msra.mxu0 0.0
        %1647 = vmatprep.subr.mxu0 0.0
        %1648 = vmatpush1.msra.mxu0 0.0
        %1649 = vmatprep.subr.mxu0 0.0
        %1650 = vmatpush1.msra.mxu0 0.0
        %1651 = vmatprep.subr.mxu0 0.0
        %1652 = vmatpush1.msra.mxu0 0.0
        %1653 = vmatprep.subr.mxu0 0.0
        %1654 = vmatpush1.msra.mxu0 0.0
        %1655 = vmatprep.subr.mxu0 0.0
        %1656 = vmatpush1.msra.mxu0 0.0
        %1657 = vmatprep.subr.mxu0 0.0
        %1658 = vmatpush1.msra.mxu0 0.0
        %1659 = vmatprep.subr.mxu0 0.0
        %1660 = vmatpush1.msra.mxu0 0.0
        %1661 = vmatprep.subr.mxu0 0.0
        %1662 = vmatpush1.msra.mxu0 0.0
        %1663 = vmatprep.subr.mxu0 0.0
        %1664 = vmatpush1.msra.mxu0 0.0
        %1665 = vmatprep.subr.mxu0 0.0
        %1666 = vmatpush1.msra.mxu0 0.0
        %1667 = vmatprep.subr.mxu0 0.0
        %1668 = vmatpush1.msra.mxu0 0.0
        %1669 = vmatprep.subr.mxu0 0.0
        %1670 = vmatpush1.msra.mxu0 0.0
        %1671 = vmatprep.subr.mxu0 0.0
        %1672 = vmatpush1.msra.mxu0 0.0
        %1673 = vmatprep.subr.mxu0 0.0
        %1674 = vmatpush1.msra.mxu0 0.0
        %1675 = vmatprep.subr.mxu0 0.0
        %1676 = vmatpush1.msra.mxu0 0.0
        %1677 = vmatprep.subr.mxu0 0.0
        %1678 = vmatpush1.msra.mxu0 0.0
        %1679 = vmatprep.subr.mxu0 0.0
        %1680 = vmatpush1.msra.mxu0 0.0
        %1681 = vmatprep.subr.mxu0 0.0
        %1682 = vmatpush1.msra.mxu0 0.0
        %1683 = vmatprep.subr.mxu0 0.0
        %1684 = vmatpush1.msra.mxu0 0.0
        %1685 = vmatprep.subr.mxu0 0.0
        %1686 = vmatpush1.msra.mxu0 0.0
        %1687 = vmatprep.subr.mxu0 0.0
        %1688 = vmatpush1.msra.mxu0 0.0
        %1689 = vmatprep.subr.mxu0 0.0
        %1690 = vmatpush1.msra.mxu0 0.0
        %1691 = vmatprep.subr.mxu0 0.0
        %1692 = vmatpush1.msra.mxu0 0.0
        %1693 = vmatprep.subr.mxu0 0.0
        %1694 = vmatpush1.msra.mxu0 0.0
        %1695 = vmatprep.mubr.f32.mxu0 0.0
        %v1696 = vand.u32 %v1368, 4294901760
        %v1697 = vsub.f32 %v1368, %v1696
        %v1698 = vand.u32 %v1697, 4294901760
        %1699 = vmatmul.mubr.f32.gmra.mrb[0].mxu0 %v1698
        %v1700 = vpop.f32.mrb[0].mxu0
        %v1701 = vadd.f32 %v1619, %v1700
        %v1702 = vpop.f32.mrb[0].mxu0
        %1703 = vmatprep.mubr.f32.mxu0 0.0
        %v1704 = vand.u32 %v1370, 4294901760
        %v1705 = vsub.f32 %v1370, %v1704
        %v1706 = vand.u32 %v1705, 4294901760
        %1707 = vmatmul.mubr.f32.gmra.mrb[0].mxu0 %v1706
        %v1708 = vpop.f32.mrb[0].mxu0
        %v1709 = vadd.f32 %v1626, %v1708
        %v1710 = vpop.f32.mrb[0].mxu0
        %1711 = vdwg.mxu0
        %1712 = vmatprep.subr.mxu0 0.0
        %v1713 = vand.u32 %v854, 4294901760
        %v1714 = vsub.f32 %v854, %v1713
        %v1715 = vand.u32 %v1714, 4294901760
        %1716 = vmatpush1.msra.mxu0 %v1715
        %1717 = vmatprep.subr.mxu0 0.0
        %v1718 = vand.u32 %v855, 4294901760
        %v1719 = vsub.f32 %v855, %v1718
        %v1720 = vand.u32 %v1719, 4294901760
        %1721 = vmatpush1.msra.mxu0 %v1720
        %1722 = vmatprep.subr.mxu0 0.0
        %1723 = vmatpush1.msra.mxu0 0.0
        %1724 = vmatprep.subr.mxu0 0.0
        %1725 = vmatpush1.msra.mxu0 0.0
        %1726 = vmatprep.subr.mxu0 0.0
        %1727 = vmatpush1.msra.mxu0 0.0
        %1728 = vmatprep.subr.mxu0 0.0
        %1729 = vmatpush1.msra.mxu0 0.0
        %1730 = vmatprep.subr.mxu0 0.0
        %1731 = vmatpush1.msra.mxu0 0.0
        %1732 = vmatprep.subr.mxu0 0.0
        %1733 = vmatpush1.msra.mxu0 0.0
        %1734 = vmatprep.subr.mxu0 0.0
        %1735 = vmatpush1.msra.mxu0 0.0
        %1736 = vmatprep.subr.mxu0 0.0
        %1737 = vmatpush1.msra.mxu0 0.0
        %1738 = vmatprep.subr.mxu0 0.0
        %1739 = vmatpush1.msra.mxu0 0.0
        %1740 = vmatprep.subr.mxu0 0.0
        %1741 = vmatpush1.msra.mxu0 0.0
        %1742 = vmatprep.subr.mxu0 0.0
        %1743 = vmatpush1.msra.mxu0 0.0
        %1744 = vmatprep.subr.mxu0 0.0
        %1745 = vmatpush1.msra.mxu0 0.0
        %1746 = vmatprep.subr.mxu0 0.0
        %1747 = vmatpush1.msra.mxu0 0.0
        %1748 = vmatprep.subr.mxu0 0.0
        %1749 = vmatpush1.msra.mxu0 0.0
        %1750 = vmatprep.subr.mxu0 0.0
        %1751 = vmatpush1.msra.mxu0 0.0
        %1752 = vmatprep.subr.mxu0 0.0
        %1753 = vmatpush1.msra.mxu0 0.0
        %1754 = vmatprep.subr.mxu0 0.0
        %1755 = vmatpush1.msra.mxu0 0.0
        %1756 = vmatprep.subr.mxu0 0.0
        %1757 = vmatpush1.msra.mxu0 0.0
        %1758 = vmatprep.subr.mxu0 0.0
        %1759 = vmatpush1.msra.mxu0 0.0
        %1760 = vmatprep.subr.mxu0 0.0
        %1761 = vmatpush1.msra.mxu0 0.0
        %1762 = vmatprep.subr.mxu0 0.0
        %1763 = vmatpush1.msra.mxu0 0.0
        %1764 = vmatprep.subr.mxu0 0.0
        %1765 = vmatpush1.msra.mxu0 0.0
        %1766 = vmatprep.subr.mxu0 0.0
        %1767 = vmatpush1.msra.mxu0 0.0
        %1768 = vmatprep.subr.mxu0 0.0
        %1769 = vmatpush1.msra.mxu0 0.0
        %1770 = vmatprep.subr.mxu0 0.0
        %1771 = vmatpush1.msra.mxu0 0.0
        %1772 = vmatprep.subr.mxu0 0.0
        %1773 = vmatpush1.msra.mxu0 0.0
        %1774 = vmatprep.subr.mxu0 0.0
        %1775 = vmatpush1.msra.mxu0 0.0
        %1776 = vmatprep.subr.mxu0 0.0
        %1777 = vmatpush1.msra.mxu0 0.0
        %1778 = vmatprep.subr.mxu0 0.0
        %1779 = vmatpush1.msra.mxu0 0.0
        %1780 = vmatprep.subr.mxu0 0.0
        %1781 = vmatpush1.msra.mxu0 0.0
        %1782 = vmatprep.mubr.f32.mxu0 0.0
        %v1783 = vand.u32 %v1368, 4294901760
        %1784 = vmatmul.mubr.f32.gmra.mrb[0].mxu0 %v1783
        %v1785 = vpop.f32.mrb[0].mxu0
        %v1786 = vadd.f32 %v1701, %v1785
        %v1787 = vpop.f32.mrb[0].mxu0
        %1788 = vmatprep.mubr.f32.mxu0 0.0
        %v1789 = vand.u32 %v1370, 4294901760
        %1790 = vmatmul.mubr.f32.gmra.mrb[0].mxu0 %v1789
        %v1791 = vpop.f32.mrb[0].mxu0
        %v1792 = vadd.f32 %v1709, %v1791
        %v1793 = vpop.f32.mrb[0].mxu0
        %1794 = vdwg.mxu0
        %1795 = vmatprep.subr.mxu0 0.0
        %v1796 = vand.u32 %v854, 4294901760
        %1797 = vmatpush1.msra.mxu0 %v1796
        %1798 = vmatprep.subr.mxu0 0.0
        %v1799 = vand.u32 %v855, 4294901760
        %1800 = vmatpush1.msra.mxu0 %v1799
        %1801 = vmatprep.subr.mxu0 0.0
        %1802 = vmatpush1.msra.mxu0 0.0
        %1803 = vmatprep.subr.mxu0 0.0
        %1804 = vmatpush1.msra.mxu0 0.0
        %1805 = vmatprep.subr.mxu0 0.0
        %1806 = vmatpush1.msra.mxu0 0.0
        %1807 = vmatprep.subr.mxu0 0.0
        %1808 = vmatpush1.msra.mxu0 0.0
        %1809 = vmatprep.subr.mxu0 0.0
        %1810 = vmatpush1.msra.mxu0 0.0
        %1811 = vmatprep.subr.mxu0 0.0
        %1812 = vmatpush1.msra.mxu0 0.0
        %1813 = vmatprep.subr.mxu0 0.0
        %1814 = vmatpush1.msra.mxu0 0.0
        %1815 = vmatprep.subr.mxu0 0.0
        %1816 = vmatpush1.msra.mxu0 0.0
        %1817 = vmatprep.subr.mxu0 0.0
        %1818 = vmatpush1.msra.mxu0 0.0
        %1819 = vmatprep.subr.mxu0 0.0
        %1820 = vmatpush1.msra.mxu0 0.0
        %1821 = vmatprep.subr.mxu0 0.0
        %1822 = vmatpush1.msra.mxu0 0.0
        %1823 = vmatprep.subr.mxu0 0.0
        %1824 = vmatpush1.msra.mxu0 0.0
        %1825 = vmatprep.subr.mxu0 0.0
        %1826 = vmatpush1.msra.mxu0 0.0
        %1827 = vmatprep.subr.mxu0 0.0
        %1828 = vmatpush1.msra.mxu0 0.0
        %1829 = vmatprep.subr.mxu0 0.0
        %1830 = vmatpush1.msra.mxu0 0.0
        %1831 = vmatprep.subr.mxu0 0.0
        %1832 = vmatpush1.msra.mxu0 0.0
        %1833 = vmatprep.subr.mxu0 0.0
        %1834 = vmatpush1.msra.mxu0 0.0
        %1835 = vmatprep.subr.mxu0 0.0
        %1836 = vmatpush1.msra.mxu0 0.0
        %1837 = vmatprep.subr.mxu0 0.0
        %1838 = vmatpush1.msra.mxu0 0.0
        %1839 = vmatprep.subr.mxu0 0.0
        %1840 = vmatpush1.msra.mxu0 0.0
        %1841 = vmatprep.subr.mxu0 0.0
        %1842 = vmatpush1.msra.mxu0 0.0
        %1843 = vmatprep.subr.mxu0 0.0
        %1844 = vmatpush1.msra.mxu0 0.0
        %1845 = vmatprep.subr.mxu0 0.0
        %1846 = vmatpush1.msra.mxu0 0.0
        %1847 = vmatprep.subr.mxu0 0.0
        %1848 = vmatpush1.msra.mxu0 0.0
        %1849 = vmatprep.subr.mxu0 0.0
        %1850 = vmatpush1.msra.mxu0 0.0
        %1851 = vmatprep.subr.mxu0 0.0
        %1852 = vmatpush1.msra.mxu0 0.0
        %1853 = vmatprep.subr.mxu0 0.0
        %1854 = vmatpush1.msra.mxu0 0.0
        %1855 = vmatprep.subr.mxu0 0.0
        %1856 = vmatpush1.msra.mxu0 0.0
        %1857 = vmatprep.subr.mxu0 0.0
        %1858 = vmatpush1.msra.mxu0 0.0
        %1859 = vmatprep.subr.mxu0 0.0
        %1860 = vmatpush1.msra.mxu0 0.0
        %1861 = vmatprep.mubr.f32.mxu0 0.0
        %v1862 = vand.u32 %v1368, 4294901760
        %1863 = vmatmul.mubr.f32.gmra.mrb[0].mxu0 %v1862
        %v1864 = vpop.f32.mrb[0].mxu0
        %v1865 = vadd.f32 %v1786, %v1864
        %v1866 = vpop.f32.mrb[0].mxu0
        %1867 = vmatprep.mubr.f32.mxu0 0.0
        %v1868 = vand.u32 %v1370, 4294901760
        %1869 = vmatmul.mubr.f32.gmra.mrb[0].mxu0 %v1868
        %v1870 = vpop.f32.mrb[0].mxu0
        %v1871 = vadd.f32 %v1792, %v1870
        %v1872 = vpop.f32.mrb[0].mxu0
        %1873 = vdwg.mxu0
        %1874 = vrot.lane.b32.xlu0 %v845, 96
        %v1875 = vpop.permute.xlu0 %1874
        %1876 = vrot.lane.b32.xlu0 %v851, 96
        %v1877 = vpop.permute.xlu0 %1876
        %v1878 = vsel %vm289, %v1875, 0
        %v1880 = vsel %vm289, %v1877, 0
        %1882 = vmatprep.subr.mxu0 0.0
        %v1883 = vand.u32 %v854, 4294901760
        %1884 = vmatpush1.msra.mxu0 %v1883
        %1885 = vmatprep.subr.mxu0 0.0
        %v1886 = vand.u32 %v855, 4294901760
        %1887 = vmatpush1.msra.mxu0 %v1886
        %1888 = vmatprep.subr.mxu0 0.0
        %1889 = vmatpush1.msra.mxu0 0.0
        %1890 = vmatprep.subr.mxu0 0.0
        %1891 = vmatpush1.msra.mxu0 0.0
        %1892 = vmatprep.subr.mxu0 0.0
        %1893 = vmatpush1.msra.mxu0 0.0
        %1894 = vmatprep.subr.mxu0 0.0
        %1895 = vmatpush1.msra.mxu0 0.0
        %1896 = vmatprep.subr.mxu0 0.0
        %1897 = vmatpush1.msra.mxu0 0.0
        %1898 = vmatprep.subr.mxu0 0.0
        %1899 = vmatpush1.msra.mxu0 0.0
        %1900 = vmatprep.subr.mxu0 0.0
        %1901 = vmatpush1.msra.mxu0 0.0
        %1902 = vmatprep.subr.mxu0 0.0
        %1903 = vmatpush1.msra.mxu0 0.0
        %1904 = vmatprep.subr.mxu0 0.0
        %1905 = vmatpush1.msra.mxu0 0.0
        %1906 = vmatprep.subr.mxu0 0.0
        %1907 = vmatpush1.msra.mxu0 0.0
        %1908 = vmatprep.subr.mxu0 0.0
        %1909 = vmatpush1.msra.mxu0 0.0
        %1910 = vmatprep.subr.mxu0 0.0
        %1911 = vmatpush1.msra.mxu0 0.0
        %1912 = vmatprep.subr.mxu0 0.0
        %1913 = vmatpush1.msra.mxu0 0.0
        %1914 = vmatprep.subr.mxu0 0.0
        %1915 = vmatpush1.msra.mxu0 0.0
        %1916 = vmatprep.subr.mxu0 0.0
        %1917 = vmatpush1.msra.mxu0 0.0
        %1918 = vmatprep.subr.mxu0 0.0
        %1919 = vmatpush1.msra.mxu0 0.0
        %1920 = vmatprep.subr.mxu0 0.0
        %1921 = vmatpush1.msra.mxu0 0.0
        %1922 = vmatprep.subr.mxu0 0.0
        %1923 = vmatpush1.msra.mxu0 0.0
        %1924 = vmatprep.subr.mxu0 0.0
        %1925 = vmatpush1.msra.mxu0 0.0
        %1926 = vmatprep.subr.mxu0 0.0
        %1927 = vmatpush1.msra.mxu0 0.0
        %1928 = vmatprep.subr.mxu0 0.0
        %1929 = vmatpush1.msra.mxu0 0.0
        %1930 = vmatprep.subr.mxu0 0.0
        %1931 = vmatpush1.msra.mxu0 0.0
        %1932 = vmatprep.subr.mxu0 0.0
        %1933 = vmatpush1.msra.mxu0 0.0
        %1934 = vmatprep.subr.mxu0 0.0
        %1935 = vmatpush1.msra.mxu0 0.0
        %1936 = vmatprep.subr.mxu0 0.0
        %1937 = vmatpush1.msra.mxu0 0.0
        %1938 = vmatprep.subr.mxu0 0.0
        %1939 = vmatpush1.msra.mxu0 0.0
        %1940 = vmatprep.subr.mxu0 0.0
        %1941 = vmatpush1.msra.mxu0 0.0
        %1942 = vmatprep.subr.mxu0 0.0
        %1943 = vmatpush1.msra.mxu0 0.0
        %1944 = vmatprep.subr.mxu0 0.0
        %1945 = vmatpush1.msra.mxu0 0.0
        %1946 = vmatprep.subr.mxu0 0.0
        %1947 = vmatpush1.msra.mxu0 0.0
        %1948 = vmatprep.mubr.f32.mxu0 0.0
        %v1949 = vand.u32 %v1878, 4294901760
        %v1950 = vsub.f32 %v1878, %v1949
        %v1951 = vand.u32 %v1950, 4294901760
        %v1952 = vsub.f32 %v1950, %v1951
        %v1953 = vand.u32 %v1952, 4294901760
        %1954 = vmatmul.mubr.f32.gmra.mrb[0].mxu0 %v1953
        %v1955 = vpop.f32.mrb[0].mxu0
        %v1956 = vadd.f32 0.0, %v1955
        %v1957 = vpop.f32.mrb[0].mxu0
        %1958 = vmatprep.mubr.f32.mxu0 0.0
        %v1959 = vand.u32 %v1880, 4294901760
        %v1960 = vsub.f32 %v1880, %v1959
        %v1961 = vand.u32 %v1960, 4294901760
        %v1962 = vsub.f32 %v1960, %v1961
        %v1963 = vand.u32 %v1962, 4294901760
        %1964 = vmatmul.mubr.f32.gmra.mrb[0].mxu0 %v1963
        %v1965 = vpop.f32.mrb[0].mxu0
        %v1966 = vadd.f32 0.0, %v1965
        %v1967 = vpop.f32.mrb[0].mxu0
        %1968 = vdwg.mxu0
        %1969 = vmatprep.subr.mxu0 0.0
        %v1970 = vand.u32 %v854, 4294901760
        %v1971 = vsub.f32 %v854, %v1970
        %v1972 = vand.u32 %v1971, 4294901760
        %v1973 = vsub.f32 %v1971, %v1972
        %v1974 = vand.u32 %v1973, 4294901760
        %1975 = vmatpush1.msra.mxu0 %v1974
        %1976 = vmatprep.subr.mxu0 0.0
        %v1977 = vand.u32 %v855, 4294901760
        %v1978 = vsub.f32 %v855, %v1977
        %v1979 = vand.u32 %v1978, 4294901760
        %v1980 = vsub.f32 %v1978, %v1979
        %v1981 = vand.u32 %v1980, 4294901760
        %1982 = vmatpush1.msra.mxu0 %v1981
        %1983 = vmatprep.subr.mxu0 0.0
        %1984 = vmatpush1.msra.mxu0 0.0
        %1985 = vmatprep.subr.mxu0 0.0
        %1986 = vmatpush1.msra.mxu0 0.0
        %1987 = vmatprep.subr.mxu0 0.0
        %1988 = vmatpush1.msra.mxu0 0.0
        %1989 = vmatprep.subr.mxu0 0.0
        %1990 = vmatpush1.msra.mxu0 0.0
        %1991 = vmatprep.subr.mxu0 0.0
        %1992 = vmatpush1.msra.mxu0 0.0
        %1993 = vmatprep.subr.mxu0 0.0
        %1994 = vmatpush1.msra.mxu0 0.0
        %1995 = vmatprep.subr.mxu0 0.0
        %1996 = vmatpush1.msra.mxu0 0.0
        %1997 = vmatprep.subr.mxu0 0.0
        %1998 = vmatpush1.msra.mxu0 0.0
        %1999 = vmatprep.subr.mxu0 0.0
        %2000 = vmatpush1.msra.mxu0 0.0
        %2001 = vmatprep.subr.mxu0 0.0
        %2002 = vmatpush1.msra.mxu0 0.0
        %2003 = vmatprep.subr.mxu0 0.0
        %2004 = vmatpush1.msra.mxu0 0.0
        %2005 = vmatprep.subr.mxu0 0.0
        %2006 = vmatpush1.msra.mxu0 0.0
        %2007 = vmatprep.subr.mxu0 0.0
        %2008 = vmatpush1.msra.mxu0 0.0
        %2009 = vmatprep.subr.mxu0 0.0
        %2010 = vmatpush1.msra.mxu0 0.0
        %2011 = vmatprep.subr.mxu0 0.0
        %2012 = vmatpush1.msra.mxu0 0.0
        %2013 = vmatprep.subr.mxu0 0.0
        %2014 = vmatpush1.msra.mxu0 0.0
        %2015 = vmatprep.subr.mxu0 0.0
        %2016 = vmatpush1.msra.mxu0 0.0
        %2017 = vmatprep.subr.mxu0 0.0
        %2018 = vmatpush1.msra.mxu0 0.0
        %2019 = vmatprep.subr.mxu0 0.0
        %2020 = vmatpush1.msra.mxu0 0.0
        %2021 = vmatprep.subr.mxu0 0.0
        %2022 = vmatpush1.msra.mxu0 0.0
        %2023 = vmatprep.subr.mxu0 0.0
        %2024 = vmatpush1.msra.mxu0 0.0
        %2025 = vmatprep.subr.mxu0 0.0
        %2026 = vmatpush1.msra.mxu0 0.0
        %2027 = vmatprep.subr.mxu0 0.0
        %2028 = vmatpush1.msra.mxu0 0.0
        %2029 = vmatprep.subr.mxu0 0.0
        %2030 = vmatpush1.msra.mxu0 0.0
        %2031 = vmatprep.subr.mxu0 0.0
        %2032 = vmatpush1.msra.mxu0 0.0
        %2033 = vmatprep.subr.mxu0 0.0
        %2034 = vmatpush1.msra.mxu0 0.0
        %2035 = vmatprep.subr.mxu0 0.0
        %2036 = vmatpush1.msra.mxu0 0.0
        %2037 = vmatprep.subr.mxu0 0.0
        %2038 = vmatpush1.msra.mxu0 0.0
        %2039 = vmatprep.subr.mxu0 0.0
        %2040 = vmatpush1.msra.mxu0 0.0
        %2041 = vmatprep.subr.mxu0 0.0
        %2042 = vmatpush1.msra.mxu0 0.0
        %2043 = vmatprep.mubr.f32.mxu0 0.0
        %v2044 = vand.u32 %v1878, 4294901760
        %2045 = vmatmul.mubr.f32.gmra.mrb[0].mxu0 %v2044
        %v2046 = vpop.f32.mrb[0].mxu0
        %v2047 = vadd.f32 %v1956, %v2046
        %v2048 = vpop.f32.mrb[0].mxu0
        %2049 = vmatprep.mubr.f32.mxu0 0.0
        %v2050 = vand.u32 %v1880, 4294901760
        %2051 = vmatmul.mubr.f32.gmra.mrb[0].mxu0 %v2050
        %v2052 = vpop.f32.mrb[0].mxu0
        %v2053 = vadd.f32 %v1966, %v2052
        %v2054 = vpop.f32.mrb[0].mxu0
        %2055 = vdwg.mxu0
        %2056 = vmatprep.subr.mxu0 0.0
        %v2057 = vand.u32 %v854, 4294901760
        %v2058 = vsub.f32 %v854, %v2057
        %2059 = vmatpush1.msra.mxu0 %v2058
        %2060 = vmatprep.subr.mxu0 0.0
        %v2061 = vand.u32 %v855, 4294901760
        %v2062 = vsub.f32 %v855, %v2061
        %2063 = vmatpush1.msra.mxu0 %v2062
        %2064 = vmatprep.subr.mxu0 0.0
        %2065 = vmatpush1.msra.mxu0 0.0
        %2066 = vmatprep.subr.mxu0 0.0
        %2067 = vmatpush1.msra.mxu0 0.0
        %2068 = vmatprep.subr.mxu0 0.0
        %2069 = vmatpush1.msra.mxu0 0.0
        %2070 = vmatprep.subr.mxu0 0.0
        %2071 = vmatpush1.msra.mxu0 0.0
        %2072 = vmatprep.subr.mxu0 0.0
        %2073 = vmatpush1.msra.mxu0 0.0
        %2074 = vmatprep.subr.mxu0 0.0
        %2075 = vmatpush1.msra.mxu0 0.0
        %2076 = vmatprep.subr.mxu0 0.0
        %2077 = vmatpush1.msra.mxu0 0.0
        %2078 = vmatprep.subr.mxu0 0.0
        %2079 = vmatpush1.msra.mxu0 0.0
        %2080 = vmatprep.subr.mxu0 0.0
        %2081 = vmatpush1.msra.mxu0 0.0
        %2082 = vmatprep.subr.mxu0 0.0
        %2083 = vmatpush1.msra.mxu0 0.0
        %2084 = vmatprep.subr.mxu0 0.0
        %2085 = vmatpush1.msra.mxu0 0.0
        %2086 = vmatprep.subr.mxu0 0.0
        %2087 = vmatpush1.msra.mxu0 0.0
        %2088 = vmatprep.subr.mxu0 0.0
        %2089 = vmatpush1.msra.mxu0 0.0
        %2090 = vmatprep.subr.mxu0 0.0
        %2091 = vmatpush1.msra.mxu0 0.0
        %2092 = vmatprep.subr.mxu0 0.0
        %2093 = vmatpush1.msra.mxu0 0.0
        %2094 = vmatprep.subr.mxu0 0.0
        %2095 = vmatpush1.msra.mxu0 0.0
        %2096 = vmatprep.subr.mxu0 0.0
        %2097 = vmatpush1.msra.mxu0 0.0
        %2098 = vmatprep.subr.mxu0 0.0
        %2099 = vmatpush1.msra.mxu0 0.0
        %2100 = vmatprep.subr.mxu0 0.0
        %2101 = vmatpush1.msra.mxu0 0.0
        %2102 = vmatprep.subr.mxu0 0.0
        %2103 = vmatpush1.msra.mxu0 0.0
        %2104 = vmatprep.subr.mxu0 0.0
        %2105 = vmatpush1.msra.mxu0 0.0
        %2106 = vmatprep.subr.mxu0 0.0
        %2107 = vmatpush1.msra.mxu0 0.0
        %2108 = vmatprep.subr.mxu0 0.0
        %2109 = vmatpush1.msra.mxu0 0.0
        %2110 = vmatprep.subr.mxu0 0.0
        %2111 = vmatpush1.msra.mxu0 0.0
        %2112 = vmatprep.subr.mxu0 0.0
        %2113 = vmatpush1.msra.mxu0 0.0
        %2114 = vmatprep.subr.mxu0 0.0
        %2115 = vmatpush1.msra.mxu0 0.0
        %2116 = vmatprep.subr.mxu0 0.0
        %2117 = vmatpush1.msra.mxu0 0.0
        %2118 = vmatprep.subr.mxu0 0.0
        %2119 = vmatpush1.msra.mxu0 0.0
        %2120 = vmatprep.subr.mxu0 0.0
        %2121 = vmatpush1.msra.mxu0 0.0
        %2122 = vmatprep.subr.mxu0 0.0
        %2123 = vmatpush1.msra.mxu0 0.0
        %2124 = vmatprep.mubr.f32.mxu0 0.0
        %v2125 = vand.u32 %v1878, 4294901760
        %v2126 = vsub.f32 %v1878, %v2125
        %2127 = vmatmul.mubr.f32.gmra.mrb[0].mxu0 %v2126
        %v2128 = vpop.f32.mrb[0].mxu0
        %v2129 = vadd.f32 %v2047, %v2128
        %v2130 = vpop.f32.mrb[0].mxu0
        %2131 = vmatprep.mubr.f32.mxu0 0.0
        %v2132 = vand.u32 %v1880, 4294901760
        %v2133 = vsub.f32 %v1880, %v2132
        %2134 = vmatmul.mubr.f32.gmra.mrb[0].mxu0 %v2133
        %v2135 = vpop.f32.mrb[0].mxu0
        %v2136 = vadd.f32 %v2053, %v2135
        %v2137 = vpop.f32.mrb[0].mxu0
        %2138 = vdwg.mxu0
        %2139 = vmatprep.subr.mxu0 0.0
        %v2140 = vand.u32 %v854, 4294901760
        %2141 = vmatpush1.msra.mxu0 %v2140
        %2142 = vmatprep.subr.mxu0 0.0
        %v2143 = vand.u32 %v855, 4294901760
        %2144 = vmatpush1.msra.mxu0 %v2143
        %2145 = vmatprep.subr.mxu0 0.0
        %2146 = vmatpush1.msra.mxu0 0.0
        %2147 = vmatprep.subr.mxu0 0.0
        %2148 = vmatpush1.msra.mxu0 0.0
        %2149 = vmatprep.subr.mxu0 0.0
        %2150 = vmatpush1.msra.mxu0 0.0
        %2151 = vmatprep.subr.mxu0 0.0
        %2152 = vmatpush1.msra.mxu0 0.0
        %2153 = vmatprep.subr.mxu0 0.0
        %2154 = vmatpush1.msra.mxu0 0.0
        %2155 = vmatprep.subr.mxu0 0.0
        %2156 = vmatpush1.msra.mxu0 0.0
        %2157 = vmatprep.subr.mxu0 0.0
        %2158 = vmatpush1.msra.mxu0 0.0
        %2159 = vmatprep.subr.mxu0 0.0
        %2160 = vmatpush1.msra.mxu0 0.0
        %2161 = vmatprep.subr.mxu0 0.0
        %2162 = vmatpush1.msra.mxu0 0.0
        %2163 = vmatprep.subr.mxu0 0.0
        %2164 = vmatpush1.msra.mxu0 0.0
        %2165 = vmatprep.subr.mxu0 0.0
        %2166 = vmatpush1.msra.mxu0 0.0
        %2167 = vmatprep.subr.mxu0 0.0
        %2168 = vmatpush1.msra.mxu0 0.0
        %2169 = vmatprep.subr.mxu0 0.0
        %2170 = vmatpush1.msra.mxu0 0.0
        %2171 = vmatprep.subr.mxu0 0.0
        %2172 = vmatpush1.msra.mxu0 0.0
        %2173 = vmatprep.subr.mxu0 0.0
        %2174 = vmatpush1.msra.mxu0 0.0
        %2175 = vmatprep.subr.mxu0 0.0
        %2176 = vmatpush1.msra.mxu0 0.0
        %2177 = vmatprep.subr.mxu0 0.0
        %2178 = vmatpush1.msra.mxu0 0.0
        %2179 = vmatprep.subr.mxu0 0.0
        %2180 = vmatpush1.msra.mxu0 0.0
        %2181 = vmatprep.subr.mxu0 0.0
        %2182 = vmatpush1.msra.mxu0 0.0
        %2183 = vmatprep.subr.mxu0 0.0
        %2184 = vmatpush1.msra.mxu0 0.0
        %2185 = vmatprep.subr.mxu0 0.0
        %2186 = vmatpush1.msra.mxu0 0.0
        %2187 = vmatprep.subr.mxu0 0.0
        %2188 = vmatpush1.msra.mxu0 0.0
        %2189 = vmatprep.subr.mxu0 0.0
        %2190 = vmatpush1.msra.mxu0 0.0
        %2191 = vmatprep.subr.mxu0 0.0
        %2192 = vmatpush1.msra.mxu0 0.0
        %2193 = vmatprep.subr.mxu0 0.0
        %2194 = vmatpush1.msra.mxu0 0.0
        %2195 = vmatprep.subr.mxu0 0.0
        %2196 = vmatpush1.msra.mxu0 0.0
        %2197 = vmatprep.subr.mxu0 0.0
        %2198 = vmatpush1.msra.mxu0 0.0
        %2199 = vmatprep.subr.mxu0 0.0
        %2200 = vmatpush1.msra.mxu0 0.0
        %2201 = vmatprep.subr.mxu0 0.0
        %2202 = vmatpush1.msra.mxu0 0.0
        %2203 = vmatprep.subr.mxu0 0.0
        %2204 = vmatpush1.msra.mxu0 0.0
        %2205 = vmatprep.mubr.f32.mxu0 0.0
        %v2206 = vand.u32 %v1878, 4294901760
        %v2207 = vsub.f32 %v1878, %v2206
        %v2208 = vand.u32 %v2207, 4294901760
        %2209 = vmatmul.mubr.f32.gmra.mrb[0].mxu0 %v2208
        %v2210 = vpop.f32.mrb[0].mxu0
        %v2211 = vadd.f32 %v2129, %v2210
        %v2212 = vpop.f32.mrb[0].mxu0
        %2213 = vmatprep.mubr.f32.mxu0 0.0
        %v2214 = vand.u32 %v1880, 4294901760
        %v2215 = vsub.f32 %v1880, %v2214
        %v2216 = vand.u32 %v2215, 4294901760
        %2217 = vmatmul.mubr.f32.gmra.mrb[0].mxu0 %v2216
        %v2218 = vpop.f32.mrb[0].mxu0
        %v2219 = vadd.f32 %v2136, %v2218
        %v2220 = vpop.f32.mrb[0].mxu0
        %2221 = vdwg.mxu0
        %2222 = vmatprep.subr.mxu0 0.0
        %v2223 = vand.u32 %v854, 4294901760
        %v2224 = vsub.f32 %v854, %v2223
        %v2225 = vand.u32 %v2224, 4294901760
        %2226 = vmatpush1.msra.mxu0 %v2225
        %2227 = vmatprep.subr.mxu0 0.0
        %v2228 = vand.u32 %v855, 4294901760
        %v2229 = vsub.f32 %v855, %v2228
        %v2230 = vand.u32 %v2229, 4294901760
        %2231 = vmatpush1.msra.mxu0 %v2230
        %2232 = vmatprep.subr.mxu0 0.0
        %2233 = vmatpush1.msra.mxu0 0.0
        %2234 = vmatprep.subr.mxu0 0.0
        %2235 = vmatpush1.msra.mxu0 0.0
        %2236 = vmatprep.subr.mxu0 0.0
        %2237 = vmatpush1.msra.mxu0 0.0
        %2238 = vmatprep.subr.mxu0 0.0
        %2239 = vmatpush1.msra.mxu0 0.0
        %2240 = vmatprep.subr.mxu0 0.0
        %2241 = vmatpush1.msra.mxu0 0.0
        %2242 = vmatprep.subr.mxu0 0.0
        %2243 = vmatpush1.msra.mxu0 0.0
        %2244 = vmatprep.subr.mxu0 0.0
        %2245 = vmatpush1.msra.mxu0 0.0
        %2246 = vmatprep.subr.mxu0 0.0
        %2247 = vmatpush1.msra.mxu0 0.0
        %2248 = vmatprep.subr.mxu0 0.0
        %2249 = vmatpush1.msra.mxu0 0.0
        %2250 = vmatprep.subr.mxu0 0.0
        %2251 = vmatpush1.msra.mxu0 0.0
        %2252 = vmatprep.subr.mxu0 0.0
        %2253 = vmatpush1.msra.mxu0 0.0
        %2254 = vmatprep.subr.mxu0 0.0
        %2255 = vmatpush1.msra.mxu0 0.0
        %2256 = vmatprep.subr.mxu0 0.0
        %2257 = vmatpush1.msra.mxu0 0.0
        %2258 = vmatprep.subr.mxu0 0.0
        %2259 = vmatpush1.msra.mxu0 0.0
        %2260 = vmatprep.subr.mxu0 0.0
        %2261 = vmatpush1.msra.mxu0 0.0
        %2262 = vmatprep.subr.mxu0 0.0
        %2263 = vmatpush1.msra.mxu0 0.0
        %2264 = vmatprep.subr.mxu0 0.0
        %2265 = vmatpush1.msra.mxu0 0.0
        %2266 = vmatprep.subr.mxu0 0.0
        %2267 = vmatpush1.msra.mxu0 0.0
        %2268 = vmatprep.subr.mxu0 0.0
        %2269 = vmatpush1.msra.mxu0 0.0
        %2270 = vmatprep.subr.mxu0 0.0
        %2271 = vmatpush1.msra.mxu0 0.0
        %2272 = vmatprep.subr.mxu0 0.0
        %2273 = vmatpush1.msra.mxu0 0.0
        %2274 = vmatprep.subr.mxu0 0.0
        %2275 = vmatpush1.msra.mxu0 0.0
        %2276 = vmatprep.subr.mxu0 0.0
        %2277 = vmatpush1.msra.mxu0 0.0
        %2278 = vmatprep.subr.mxu0 0.0
        %2279 = vmatpush1.msra.mxu0 0.0
        %2280 = vmatprep.subr.mxu0 0.0
        %2281 = vmatpush1.msra.mxu0 0.0
        %2282 = vmatprep.subr.mxu0 0.0
        %2283 = vmatpush1.msra.mxu0 0.0
        %2284 = vmatprep.subr.mxu0 0.0
        %2285 = vmatpush1.msra.mxu0 0.0
        %2286 = vmatprep.subr.mxu0 0.0
        %2287 = vmatpush1.msra.mxu0 0.0
        %2288 = vmatprep.subr.mxu0 0.0
        %2289 = vmatpush1.msra.mxu0 0.0
        %2290 = vmatprep.subr.mxu0 0.0
        %2291 = vmatpush1.msra.mxu0 0.0
        %2292 = vmatprep.mubr.f32.mxu0 0.0
        %v2293 = vand.u32 %v1878, 4294901760
        %2294 = vmatmul.mubr.f32.gmra.mrb[0].mxu0 %v2293
        %v2295 = vpop.f32.mrb[0].mxu0
        %v2296 = vadd.f32 %v2211, %v2295
        %v2297 = vpop.f32.mrb[0].mxu0
        %2298 = vmatprep.mubr.f32.mxu0 0.0
        %v2299 = vand.u32 %v1880, 4294901760
        %2300 = vmatmul.mubr.f32.gmra.mrb[0].mxu0 %v2299
        %v2301 = vpop.f32.mrb[0].mxu0
        %v2302 = vadd.f32 %v2219, %v2301
        %v2303 = vpop.f32.mrb[0].mxu0
        %2304 = vdwg.mxu0
        %2305 = vmatprep.subr.mxu0 0.0
        %v2306 = vand.u32 %v854, 4294901760
        %2307 = vmatpush1.msra.mxu0 %v2306
        %2308 = vmatprep.subr.mxu0 0.0
        %v2309 = vand.u32 %v855, 4294901760
        %2310 = vmatpush1.msra.mxu0 %v2309
        %2311 = vmatprep.subr.mxu0 0.0
        %2312 = vmatpush1.msra.mxu0 0.0
        %2313 = vmatprep.subr.mxu0 0.0
        %2314 = vmatpush1.msra.mxu0 0.0
        %2315 = vmatprep.subr.mxu0 0.0
        %2316 = vmatpush1.msra.mxu0 0.0
        %2317 = vmatprep.subr.mxu0 0.0
        %2318 = vmatpush1.msra.mxu0 0.0
        %2319 = vmatprep.subr.mxu0 0.0
        %2320 = vmatpush1.msra.mxu0 0.0
        %2321 = vmatprep.subr.mxu0 0.0
        %2322 = vmatpush1.msra.mxu0 0.0
        %2323 = vmatprep.subr.mxu0 0.0
        %2324 = vmatpush1.msra.mxu0 0.0
        %2325 = vmatprep.subr.mxu0 0.0
        %2326 = vmatpush1.msra.mxu0 0.0
        %2327 = vmatprep.subr.mxu0 0.0
        %2328 = vmatpush1.msra.mxu0 0.0
        %2329 = vmatprep.subr.mxu0 0.0
        %2330 = vmatpush1.msra.mxu0 0.0
        %2331 = vmatprep.subr.mxu0 0.0
        %2332 = vmatpush1.msra.mxu0 0.0
        %2333 = vmatprep.subr.mxu0 0.0
        %2334 = vmatpush1.msra.mxu0 0.0
        %2335 = vmatprep.subr.mxu0 0.0
        %2336 = vmatpush1.msra.mxu0 0.0
        %2337 = vmatprep.subr.mxu0 0.0
        %2338 = vmatpush1.msra.mxu0 0.0
        %2339 = vmatprep.subr.mxu0 0.0
        %2340 = vmatpush1.msra.mxu0 0.0
        %2341 = vmatprep.subr.mxu0 0.0
        %2342 = vmatpush1.msra.mxu0 0.0
        %2343 = vmatprep.subr.mxu0 0.0
        %2344 = vmatpush1.msra.mxu0 0.0
        %2345 = vmatprep.subr.mxu0 0.0
        %2346 = vmatpush1.msra.mxu0 0.0
        %2347 = vmatprep.subr.mxu0 0.0
        %2348 = vmatpush1.msra.mxu0 0.0
        %2349 = vmatprep.subr.mxu0 0.0
        %2350 = vmatpush1.msra.mxu0 0.0
        %2351 = vmatprep.subr.mxu0 0.0
        %2352 = vmatpush1.msra.mxu0 0.0
        %2353 = vmatprep.subr.mxu0 0.0
        %2354 = vmatpush1.msra.mxu0 0.0
        %2355 = vmatprep.subr.mxu0 0.0
        %2356 = vmatpush1.msra.mxu0 0.0
        %2357 = vmatprep.subr.mxu0 0.0
        %2358 = vmatpush1.msra.mxu0 0.0
        %2359 = vmatprep.subr.mxu0 0.0
        %2360 = vmatpush1.msra.mxu0 0.0
        %2361 = vmatprep.subr.mxu0 0.0
        %2362 = vmatpush1.msra.mxu0 0.0
        %2363 = vmatprep.subr.mxu0 0.0
        %2364 = vmatpush1.msra.mxu0 0.0
        %2365 = vmatprep.subr.mxu0 0.0
        %2366 = vmatpush1.msra.mxu0 0.0
        %2367 = vmatprep.subr.mxu0 0.0
        %2368 = vmatpush1.msra.mxu0 0.0
        %2369 = vmatprep.subr.mxu0 0.0
        %2370 = vmatpush1.msra.mxu0 0.0
        %2371 = vmatprep.mubr.f32.mxu0 0.0
        %v2372 = vand.u32 %v1878, 4294901760
        %2373 = vmatmul.mubr.f32.gmra.mrb[0].mxu0 %v2372
        %v2374 = vpop.f32.mrb[0].mxu0
        %v2375 = vadd.f32 %v2296, %v2374
        %v2376 = vpop.f32.mrb[0].mxu0
        %2377 = vmatprep.mubr.f32.mxu0 0.0
        %v2378 = vand.u32 %v1880, 4294901760
        %2379 = vmatmul.mubr.f32.gmra.mrb[0].mxu0 %v2378
        %v2380 = vpop.f32.mrb[0].mxu0
        %v2381 = vadd.f32 %v2302, %v2380
        %v2382 = vpop.f32.mrb[0].mxu0
        %2383 = vdwg.mxu0
        %2384 = vrot.lane.b32.xlu0 %v845, 80
        %v2385 = vpop.permute.xlu0 %2384
        %2386 = vrot.lane.b32.xlu0 %v851, 80
        %v2387 = vpop.permute.xlu0 %2386
        %v2388 = vsel %vm289, %v2385, 0
        %v2390 = vsel %vm289, %v2387, 0
        %2392 = vmatprep.subr.mxu0 0.0
        %v2393 = vand.u32 %v854, 4294901760
        %2394 = vmatpush1.msra.mxu0 %v2393
        %2395 = vmatprep.subr.mxu0 0.0
        %v2396 = vand.u32 %v855, 4294901760
        %2397 = vmatpush1.msra.mxu0 %v2396
        %2398 = vmatprep.subr.mxu0 0.0
        %2399 = vmatpush1.msra.mxu0 0.0
        %2400 = vmatprep.subr.mxu0 0.0
        %2401 = vmatpush1.msra.mxu0 0.0
        %2402 = vmatprep.subr.mxu0 0.0
        %2403 = vmatpush1.msra.mxu0 0.0
        %2404 = vmatprep.subr.mxu0 0.0
        %2405 = vmatpush1.msra.mxu0 0.0
        %2406 = vmatprep.subr.mxu0 0.0
        %2407 = vmatpush1.msra.mxu0 0.0
        %2408 = vmatprep.subr.mxu0 0.0
        %2409 = vmatpush1.msra.mxu0 0.0
        %2410 = vmatprep.subr.mxu0 0.0
        %2411 = vmatpush1.msra.mxu0 0.0
        %2412 = vmatprep.subr.mxu0 0.0
        %2413 = vmatpush1.msra.mxu0 0.0
        %2414 = vmatprep.subr.mxu0 0.0
        %2415 = vmatpush1.msra.mxu0 0.0
        %2416 = vmatprep.subr.mxu0 0.0
        %2417 = vmatpush1.msra.mxu0 0.0
        %2418 = vmatprep.subr.mxu0 0.0
        %2419 = vmatpush1.msra.mxu0 0.0
        %2420 = vmatprep.subr.mxu0 0.0
        %2421 = vmatpush1.msra.mxu0 0.0
        %2422 = vmatprep.subr.mxu0 0.0
        %2423 = vmatpush1.msra.mxu0 0.0
        %2424 = vmatprep.subr.mxu0 0.0
        %2425 = vmatpush1.msra.mxu0 0.0
        %2426 = vmatprep.subr.mxu0 0.0
        %2427 = vmatpush1.msra.mxu0 0.0
        %2428 = vmatprep.subr.mxu0 0.0
        %2429 = vmatpush1.msra.mxu0 0.0
        %2430 = vmatprep.subr.mxu0 0.0
        %2431 = vmatpush1.msra.mxu0 0.0
        %2432 = vmatprep.subr.mxu0 0.0
        %2433 = vmatpush1.msra.mxu0 0.0
        %2434 = vmatprep.subr.mxu0 0.0
        %2435 = vmatpush1.msra.mxu0 0.0
        %2436 = vmatprep.subr.mxu0 0.0
        %2437 = vmatpush1.msra.mxu0 0.0
        %2438 = vmatprep.subr.mxu0 0.0
        %2439 = vmatpush1.msra.mxu0 0.0
        %2440 = vmatprep.subr.mxu0 0.0
        %2441 = vmatpush1.msra.mxu0 0.0
        %2442 = vmatprep.subr.mxu0 0.0
        %2443 = vmatpush1.msra.mxu0 0.0
        %2444 = vmatprep.subr.mxu0 0.0
        %2445 = vmatpush1.msra.mxu0 0.0
        %2446 = vmatprep.subr.mxu0 0.0
        %2447 = vmatpush1.msra.mxu0 0.0
        %2448 = vmatprep.subr.mxu0 0.0
        %2449 = vmatpush1.msra.mxu0 0.0
        %2450 = vmatprep.subr.mxu0 0.0
        %2451 = vmatpush1.msra.mxu0 0.0
        %2452 = vmatprep.subr.mxu0 0.0
        %2453 = vmatpush1.msra.mxu0 0.0
        %2454 = vmatprep.subr.mxu0 0.0
        %2455 = vmatpush1.msra.mxu0 0.0
        %2456 = vmatprep.subr.mxu0 0.0
        %2457 = vmatpush1.msra.mxu0 0.0
        %2458 = vmatprep.mubr.f32.mxu0 0.0
        %v2459 = vand.u32 %v2388, 4294901760
        %v2460 = vsub.f32 %v2388, %v2459
        %v2461 = vand.u32 %v2460, 4294901760
        %v2462 = vsub.f32 %v2460, %v2461
        %v2463 = vand.u32 %v2462, 4294901760
        %2464 = vmatmul.mubr.f32.gmra.mrb[0].mxu0 %v2463
        %v2465 = vpop.f32.mrb[0].mxu0
        %v2466 = vadd.f32 0.0, %v2465
        %v2467 = vpop.f32.mrb[0].mxu0
        %2468 = vmatprep.mubr.f32.mxu0 0.0
        %v2469 = vand.u32 %v2390, 4294901760
        %v2470 = vsub.f32 %v2390, %v2469
        %v2471 = vand.u32 %v2470, 4294901760
        %v2472 = vsub.f32 %v2470, %v2471
        %v2473 = vand.u32 %v2472, 4294901760
        %2474 = vmatmul.mubr.f32.gmra.mrb[0].mxu0 %v2473
        %v2475 = vpop.f32.mrb[0].mxu0
        %v2476 = vadd.f32 0.0, %v2475
        %v2477 = vpop.f32.mrb[0].mxu0
        %2478 = vdwg.mxu0
        %2479 = vmatprep.subr.mxu0 0.0
        %v2480 = vand.u32 %v854, 4294901760
        %v2481 = vsub.f32 %v854, %v2480
        %v2482 = vand.u32 %v2481, 4294901760
        %v2483 = vsub.f32 %v2481, %v2482
        %v2484 = vand.u32 %v2483, 4294901760
        %2485 = vmatpush1.msra.mxu0 %v2484
        %2486 = vmatprep.subr.mxu0 0.0
        %v2487 = vand.u32 %v855, 4294901760
        %v2488 = vsub.f32 %v855, %v2487
        %v2489 = vand.u32 %v2488, 4294901760
        %v2490 = vsub.f32 %v2488, %v2489
        %v2491 = vand.u32 %v2490, 4294901760
        %2492 = vmatpush1.msra.mxu0 %v2491
        %2493 = vmatprep.subr.mxu0 0.0
        %2494 = vmatpush1.msra.mxu0 0.0
        %2495 = vmatprep.subr.mxu0 0.0
        %2496 = vmatpush1.msra.mxu0 0.0
        %2497 = vmatprep.subr.mxu0 0.0
        %2498 = vmatpush1.msra.mxu0 0.0
        %2499 = vmatprep.subr.mxu0 0.0
        %2500 = vmatpush1.msra.mxu0 0.0
        %2501 = vmatprep.subr.mxu0 0.0
        %2502 = vmatpush1.msra.mxu0 0.0
        %2503 = vmatprep.subr.mxu0 0.0
        %2504 = vmatpush1.msra.mxu0 0.0
        %2505 = vmatprep.subr.mxu0 0.0
        %2506 = vmatpush1.msra.mxu0 0.0
        %2507 = vmatprep.subr.mxu0 0.0
        %2508 = vmatpush1.msra.mxu0 0.0
        %2509 = vmatprep.subr.mxu0 0.0
        %2510 = vmatpush1.msra.mxu0 0.0
        %2511 = vmatprep.subr.mxu0 0.0
        %2512 = vmatpush1.msra.mxu0 0.0
        %2513 = vmatprep.subr.mxu0 0.0
        %2514 = vmatpush1.msra.mxu0 0.0
        %2515 = vmatprep.subr.mxu0 0.0
        %2516 = vmatpush1.msra.mxu0 0.0
        %2517 = vmatprep.subr.mxu0 0.0
        %2518 = vmatpush1.msra.mxu0 0.0
        %2519 = vmatprep.subr.mxu0 0.0
        %2520 = vmatpush1.msra.mxu0 0.0
        %2521 = vmatprep.subr.mxu0 0.0
        %2522 = vmatpush1.msra.mxu0 0.0
        %2523 = vmatprep.subr.mxu0 0.0
        %2524 = vmatpush1.msra.mxu0 0.0
        %2525 = vmatprep.subr.mxu0 0.0
        %2526 = vmatpush1.msra.mxu0 0.0
        %2527 = vmatprep.subr.mxu0 0.0
        %2528 = vmatpush1.msra.mxu0 0.0
        %2529 = vmatprep.subr.mxu0 0.0
        %2530 = vmatpush1.msra.mxu0 0.0
        %2531 = vmatprep.subr.mxu0 0.0
        %2532 = vmatpush1.msra.mxu0 0.0
        %2533 = vmatprep.subr.mxu0 0.0
        %2534 = vmatpush1.msra.mxu0 0.0
        %2535 = vmatprep.subr.mxu0 0.0
        %2536 = vmatpush1.msra.mxu0 0.0
        %2537 = vmatprep.subr.mxu0 0.0
        %2538 = vmatpush1.msra.mxu0 0.0
        %2539 = vmatprep.subr.mxu0 0.0
        %2540 = vmatpush1.msra.mxu0 0.0
        %2541 = vmatprep.subr.mxu0 0.0
        %2542 = vmatpush1.msra.mxu0 0.0
        %2543 = vmatprep.subr.mxu0 0.0
        %2544 = vmatpush1.msra.mxu0 0.0
        %2545 = vmatprep.subr.mxu0 0.0
        %2546 = vmatpush1.msra.mxu0 0.0
        %2547 = vmatprep.subr.mxu0 0.0
        %2548 = vmatpush1.msra.mxu0 0.0
        %2549 = vmatprep.subr.mxu0 0.0
        %2550 = vmatpush1.msra.mxu0 0.0
        %2551 = vmatprep.subr.mxu0 0.0
        %2552 = vmatpush1.msra.mxu0 0.0
        %2553 = vmatprep.mubr.f32.mxu0 0.0
        %v2554 = vand.u32 %v2388, 4294901760
        %2555 = vmatmul.mubr.f32.gmra.mrb[0].mxu0 %v2554
        %v2556 = vpop.f32.mrb[0].mxu0
        %v2557 = vadd.f32 %v2466, %v2556
        %v2558 = vpop.f32.mrb[0].mxu0
        %2559 = vmatprep.mubr.f32.mxu0 0.0
        %v2560 = vand.u32 %v2390, 4294901760
        %2561 = vmatmul.mubr.f32.gmra.mrb[0].mxu0 %v2560
        %v2562 = vpop.f32.mrb[0].mxu0
        %v2563 = vadd.f32 %v2476, %v2562
        %v2564 = vpop.f32.mrb[0].mxu0
        %2565 = vdwg.mxu0
        %2566 = vmatprep.subr.mxu0 0.0
        %v2567 = vand.u32 %v854, 4294901760
        %v2568 = vsub.f32 %v854, %v2567
        %2569 = vmatpush1.msra.mxu0 %v2568
        %2570 = vmatprep.subr.mxu0 0.0
        %v2571 = vand.u32 %v855, 4294901760
        %v2572 = vsub.f32 %v855, %v2571
        %2573 = vmatpush1.msra.mxu0 %v2572
        %2574 = vmatprep.subr.mxu0 0.0
        %2575 = vmatpush1.msra.mxu0 0.0
        %2576 = vmatprep.subr.mxu0 0.0
        %2577 = vmatpush1.msra.mxu0 0.0
        %2578 = vmatprep.subr.mxu0 0.0
        %2579 = vmatpush1.msra.mxu0 0.0
        %2580 = vmatprep.subr.mxu0 0.0
        %2581 = vmatpush1.msra.mxu0 0.0
        %2582 = vmatprep.subr.mxu0 0.0
        %2583 = vmatpush1.msra.mxu0 0.0
        %2584 = vmatprep.subr.mxu0 0.0
        %2585 = vmatpush1.msra.mxu0 0.0
        %2586 = vmatprep.subr.mxu0 0.0
        %2587 = vmatpush1.msra.mxu0 0.0
        %2588 = vmatprep.subr.mxu0 0.0
        %2589 = vmatpush1.msra.mxu0 0.0
        %2590 = vmatprep.subr.mxu0 0.0
        %2591 = vmatpush1.msra.mxu0 0.0
        %2592 = vmatprep.subr.mxu0 0.0
        %2593 = vmatpush1.msra.mxu0 0.0
        %2594 = vmatprep.subr.mxu0 0.0
        %2595 = vmatpush1.msra.mxu0 0.0
        %2596 = vmatprep.subr.mxu0 0.0
        %2597 = vmatpush1.msra.mxu0 0.0
        %2598 = vmatprep.subr.mxu0 0.0
        %2599 = vmatpush1.msra.mxu0 0.0
        %2600 = vmatprep.subr.mxu0 0.0
        %2601 = vmatpush1.msra.mxu0 0.0
        %2602 = vmatprep.subr.mxu0 0.0
        %2603 = vmatpush1.msra.mxu0 0.0
        %2604 = vmatprep.subr.mxu0 0.0
        %2605 = vmatpush1.msra.mxu0 0.0
        %2606 = vmatprep.subr.mxu0 0.0
        %2607 = vmatpush1.msra.mxu0 0.0
        %2608 = vmatprep.subr.mxu0 0.0
        %2609 = vmatpush1.msra.mxu0 0.0
        %2610 = vmatprep.subr.mxu0 0.0
        %2611 = vmatpush1.msra.mxu0 0.0
        %2612 = vmatprep.subr.mxu0 0.0
        %2613 = vmatpush1.msra.mxu0 0.0
        %2614 = vmatprep.subr.mxu0 0.0
        %2615 = vmatpush1.msra.mxu0 0.0
        %2616 = vmatprep.subr.mxu0 0.0
        %2617 = vmatpush1.msra.mxu0 0.0
        %2618 = vmatprep.subr.mxu0 0.0
        %2619 = vmatpush1.msra.mxu0 0.0
        %2620 = vmatprep.subr.mxu0 0.0
        %2621 = vmatpush1.msra.mxu0 0.0
        %2622 = vmatprep.subr.mxu0 0.0
        %2623 = vmatpush1.msra.mxu0 0.0
        %2624 = vmatprep.subr.mxu0 0.0
        %2625 = vmatpush1.msra.mxu0 0.0
        %2626 = vmatprep.subr.mxu0 0.0
        %2627 = vmatpush1.msra.mxu0 0.0
        %2628 = vmatprep.subr.mxu0 0.0
        %2629 = vmatpush1.msra.mxu0 0.0
        %2630 = vmatprep.subr.mxu0 0.0
        %2631 = vmatpush1.msra.mxu0 0.0
        %2632 = vmatprep.subr.mxu0 0.0
        %2633 = vmatpush1.msra.mxu0 0.0
        %2634 = vmatprep.mubr.f32.mxu0 0.0
        %v2635 = vand.u32 %v2388, 4294901760
        %v2636 = vsub.f32 %v2388, %v2635
        %2637 = vmatmul.mubr.f32.gmra.mrb[0].mxu0 %v2636
        %v2638 = vpop.f32.mrb[0].mxu0
        %v2639 = vadd.f32 %v2557, %v2638
        %v2640 = vpop.f32.mrb[0].mxu0
        %2641 = vmatprep.mubr.f32.mxu0 0.0
        %v2642 = vand.u32 %v2390, 4294901760
        %v2643 = vsub.f32 %v2390, %v2642
        %2644 = vmatmul.mubr.f32.gmra.mrb[0].mxu0 %v2643
        %v2645 = vpop.f32.mrb[0].mxu0
        %v2646 = vadd.f32 %v2563, %v2645
        %v2647 = vpop.f32.mrb[0].mxu0
        %2648 = vdwg.mxu0
        %2649 = vmatprep.subr.mxu0 0.0
        %v2650 = vand.u32 %v854, 4294901760
        %2651 = vmatpush1.msra.mxu0 %v2650
        %2652 = vmatprep.subr.mxu0 0.0
        %v2653 = vand.u32 %v855, 4294901760
        %2654 = vmatpush1.msra.mxu0 %v2653
        %2655 = vmatprep.subr.mxu0 0.0
        %2656 = vmatpush1.msra.mxu0 0.0
        %2657 = vmatprep.subr.mxu0 0.0
        %2658 = vmatpush1.msra.mxu0 0.0
        %2659 = vmatprep.subr.mxu0 0.0
        %2660 = vmatpush1.msra.mxu0 0.0
        %2661 = vmatprep.subr.mxu0 0.0
        %2662 = vmatpush1.msra.mxu0 0.0
        %2663 = vmatprep.subr.mxu0 0.0
        %2664 = vmatpush1.msra.mxu0 0.0
        %2665 = vmatprep.subr.mxu0 0.0
        %2666 = vmatpush1.msra.mxu0 0.0
        %2667 = vmatprep.subr.mxu0 0.0
        %2668 = vmatpush1.msra.mxu0 0.0
        %2669 = vmatprep.subr.mxu0 0.0
        %2670 = vmatpush1.msra.mxu0 0.0
        %2671 = vmatprep.subr.mxu0 0.0
        %2672 = vmatpush1.msra.mxu0 0.0
        %2673 = vmatprep.subr.mxu0 0.0
        %2674 = vmatpush1.msra.mxu0 0.0
        %2675 = vmatprep.subr.mxu0 0.0
        %2676 = vmatpush1.msra.mxu0 0.0
        %2677 = vmatprep.subr.mxu0 0.0
        %2678 = vmatpush1.msra.mxu0 0.0
        %2679 = vmatprep.subr.mxu0 0.0
        %2680 = vmatpush1.msra.mxu0 0.0
        %2681 = vmatprep.subr.mxu0 0.0
        %2682 = vmatpush1.msra.mxu0 0.0
        %2683 = vmatprep.subr.mxu0 0.0
        %2684 = vmatpush1.msra.mxu0 0.0
        %2685 = vmatprep.subr.mxu0 0.0
        %2686 = vmatpush1.msra.mxu0 0.0
        %2687 = vmatprep.subr.mxu0 0.0
        %2688 = vmatpush1.msra.mxu0 0.0
        %2689 = vmatprep.subr.mxu0 0.0
        %2690 = vmatpush1.msra.mxu0 0.0
        %2691 = vmatprep.subr.mxu0 0.0
        %2692 = vmatpush1.msra.mxu0 0.0
        %2693 = vmatprep.subr.mxu0 0.0
        %2694 = vmatpush1.msra.mxu0 0.0
        %2695 = vmatprep.subr.mxu0 0.0
        %2696 = vmatpush1.msra.mxu0 0.0
        %2697 = vmatprep.subr.mxu0 0.0
        %2698 = vmatpush1.msra.mxu0 0.0
        %2699 = vmatprep.subr.mxu0 0.0
        %2700 = vmatpush1.msra.mxu0 0.0
        %2701 = vmatprep.subr.mxu0 0.0
        %2702 = vmatpush1.msra.mxu0 0.0
        %2703 = vmatprep.subr.mxu0 0.0
        %2704 = vmatpush1.msra.mxu0 0.0
        %2705 = vmatprep.subr.mxu0 0.0
        %2706 = vmatpush1.msra.mxu0 0.0
        %2707 = vmatprep.subr.mxu0 0.0
        %2708 = vmatpush1.msra.mxu0 0.0
        %2709 = vmatprep.subr.mxu0 0.0
        %2710 = vmatpush1.msra.mxu0 0.0
        %2711 = vmatprep.subr.mxu0 0.0
        %2712 = vmatpush1.msra.mxu0 0.0
        %2713 = vmatprep.subr.mxu0 0.0
        %2714 = vmatpush1.msra.mxu0 0.0
        %2715 = vmatprep.mubr.f32.mxu0 0.0
        %v2716 = vand.u32 %v2388, 4294901760
        %v2717 = vsub.f32 %v2388, %v2716
        %v2718 = vand.u32 %v2717, 4294901760
        %2719 = vmatmul.mubr.f32.gmra.mrb[0].mxu0 %v2718
        %v2720 = vpop.f32.mrb[0].mxu0
        %v2721 = vadd.f32 %v2639, %v2720
        %v2722 = vpop.f32.mrb[0].mxu0
        %2723 = vmatprep.mubr.f32.mxu0 0.0
        %v2724 = vand.u32 %v2390, 4294901760
        %v2725 = vsub.f32 %v2390, %v2724
        %v2726 = vand.u32 %v2725, 4294901760
        %2727 = vmatmul.mubr.f32.gmra.mrb[0].mxu0 %v2726
        %v2728 = vpop.f32.mrb[0].mxu0
        %v2729 = vadd.f32 %v2646, %v2728
        %v2730 = vpop.f32.mrb[0].mxu0
        %2731 = vdwg.mxu0
        %2732 = vmatprep.subr.mxu0 0.0
        %v2733 = vand.u32 %v854, 4294901760
        %v2734 = vsub.f32 %v854, %v2733
        %v2735 = vand.u32 %v2734, 4294901760
        %2736 = vmatpush1.msra.mxu0 %v2735
        %2737 = vmatprep.subr.mxu0 0.0
        %v2738 = vand.u32 %v855, 4294901760
        %v2739 = vsub.f32 %v855, %v2738
        %v2740 = vand.u32 %v2739, 4294901760
        %2741 = vmatpush1.msra.mxu0 %v2740
        %2742 = vmatprep.subr.mxu0 0.0
        %2743 = vmatpush1.msra.mxu0 0.0
        %2744 = vmatprep.subr.mxu0 0.0
        %2745 = vmatpush1.msra.mxu0 0.0
        %2746 = vmatprep.subr.mxu0 0.0
        %2747 = vmatpush1.msra.mxu0 0.0
        %2748 = vmatprep.subr.mxu0 0.0
        %2749 = vmatpush1.msra.mxu0 0.0
        %2750 = vmatprep.subr.mxu0 0.0
        %2751 = vmatpush1.msra.mxu0 0.0
        %2752 = vmatprep.subr.mxu0 0.0
        %2753 = vmatpush1.msra.mxu0 0.0
        %2754 = vmatprep.subr.mxu0 0.0
        %2755 = vmatpush1.msra.mxu0 0.0
        %2756 = vmatprep.subr.mxu0 0.0
        %2757 = vmatpush1.msra.mxu0 0.0
        %2758 = vmatprep.subr.mxu0 0.0
        %2759 = vmatpush1.msra.mxu0 0.0
        %2760 = vmatprep.subr.mxu0 0.0
        %2761 = vmatpush1.msra.mxu0 0.0
        %2762 = vmatprep.subr.mxu0 0.0
        %2763 = vmatpush1.msra.mxu0 0.0
        %2764 = vmatprep.subr.mxu0 0.0
        %2765 = vmatpush1.msra.mxu0 0.0
        %2766 = vmatprep.subr.mxu0 0.0
        %2767 = vmatpush1.msra.mxu0 0.0
        %2768 = vmatprep.subr.mxu0 0.0
        %2769 = vmatpush1.msra.mxu0 0.0
        %2770 = vmatprep.subr.mxu0 0.0
        %2771 = vmatpush1.msra.mxu0 0.0
        %2772 = vmatprep.subr.mxu0 0.0
        %2773 = vmatpush1.msra.mxu0 0.0
        %2774 = vmatprep.subr.mxu0 0.0
        %2775 = vmatpush1.msra.mxu0 0.0
        %2776 = vmatprep.subr.mxu0 0.0
        %2777 = vmatpush1.msra.mxu0 0.0
        %2778 = vmatprep.subr.mxu0 0.0
        %2779 = vmatpush1.msra.mxu0 0.0
        %2780 = vmatprep.subr.mxu0 0.0
        %2781 = vmatpush1.msra.mxu0 0.0
        %2782 = vmatprep.subr.mxu0 0.0
        %2783 = vmatpush1.msra.mxu0 0.0
        %2784 = vmatprep.subr.mxu0 0.0
        %2785 = vmatpush1.msra.mxu0 0.0
        %2786 = vmatprep.subr.mxu0 0.0
        %2787 = vmatpush1.msra.mxu0 0.0
        %2788 = vmatprep.subr.mxu0 0.0
        %2789 = vmatpush1.msra.mxu0 0.0
        %2790 = vmatprep.subr.mxu0 0.0
        %2791 = vmatpush1.msra.mxu0 0.0
        %2792 = vmatprep.subr.mxu0 0.0
        %2793 = vmatpush1.msra.mxu0 0.0
        %2794 = vmatprep.subr.mxu0 0.0
        %2795 = vmatpush1.msra.mxu0 0.0
        %2796 = vmatprep.subr.mxu0 0.0
        %2797 = vmatpush1.msra.mxu0 0.0
        %2798 = vmatprep.subr.mxu0 0.0
        %2799 = vmatpush1.msra.mxu0 0.0
        %2800 = vmatprep.subr.mxu0 0.0
        %2801 = vmatpush1.msra.mxu0 0.0
        %2802 = vmatprep.mubr.f32.mxu0 0.0
        %v2803 = vand.u32 %v2388, 4294901760
        %2804 = vmatmul.mubr.f32.gmra.mrb[0].mxu0 %v2803
        %v2805 = vpop.f32.mrb[0].mxu0
        %v2806 = vadd.f32 %v2721, %v2805
        %v2807 = vpop.f32.mrb[0].mxu0
        %2808 = vmatprep.mubr.f32.mxu0 0.0
        %v2809 = vand.u32 %v2390, 4294901760
        %2810 = vmatmul.mubr.f32.gmra.mrb[0].mxu0 %v2809
        %v2811 = vpop.f32.mrb[0].mxu0
        %v2812 = vadd.f32 %v2729, %v2811
        %v2813 = vpop.f32.mrb[0].mxu0
        %2814 = vdwg.mxu0
        %2815 = vmatprep.subr.mxu0 0.0
        %v2816 = vand.u32 %v854, 4294901760
        %2817 = vmatpush1.msra.mxu0 %v2816
        %2818 = vmatprep.subr.mxu0 0.0
        %v2819 = vand.u32 %v855, 4294901760
        %2820 = vmatpush1.msra.mxu0 %v2819
        %2821 = vmatprep.subr.mxu0 0.0
        %2822 = vmatpush1.msra.mxu0 0.0
        %2823 = vmatprep.subr.mxu0 0.0
        %2824 = vmatpush1.msra.mxu0 0.0
        %2825 = vmatprep.subr.mxu0 0.0
        %2826 = vmatpush1.msra.mxu0 0.0
        %2827 = vmatprep.subr.mxu0 0.0
        %2828 = vmatpush1.msra.mxu0 0.0
        %2829 = vmatprep.subr.mxu0 0.0
        %2830 = vmatpush1.msra.mxu0 0.0
        %2831 = vmatprep.subr.mxu0 0.0
        %2832 = vmatpush1.msra.mxu0 0.0
        %2833 = vmatprep.subr.mxu0 0.0
        %2834 = vmatpush1.msra.mxu0 0.0
        %2835 = vmatprep.subr.mxu0 0.0
        %2836 = vmatpush1.msra.mxu0 0.0
        %2837 = vmatprep.subr.mxu0 0.0
        %2838 = vmatpush1.msra.mxu0 0.0
        %2839 = vmatprep.subr.mxu0 0.0
        %2840 = vmatpush1.msra.mxu0 0.0
        %2841 = vmatprep.subr.mxu0 0.0
        %2842 = vmatpush1.msra.mxu0 0.0
        %2843 = vmatprep.subr.mxu0 0.0
        %2844 = vmatpush1.msra.mxu0 0.0
        %2845 = vmatprep.subr.mxu0 0.0
        %2846 = vmatpush1.msra.mxu0 0.0
        %2847 = vmatprep.subr.mxu0 0.0
        %2848 = vmatpush1.msra.mxu0 0.0
        %2849 = vmatprep.subr.mxu0 0.0
        %2850 = vmatpush1.msra.mxu0 0.0
        %2851 = vmatprep.subr.mxu0 0.0
        %2852 = vmatpush1.msra.mxu0 0.0
        %2853 = vmatprep.subr.mxu0 0.0
        %2854 = vmatpush1.msra.mxu0 0.0
        %2855 = vmatprep.subr.mxu0 0.0
        %2856 = vmatpush1.msra.mxu0 0.0
        %2857 = vmatprep.subr.mxu0 0.0
        %2858 = vmatpush1.msra.mxu0 0.0
        %2859 = vmatprep.subr.mxu0 0.0
        %2860 = vmatpush1.msra.mxu0 0.0
        %2861 = vmatprep.subr.mxu0 0.0
        %2862 = vmatpush1.msra.mxu0 0.0
        %2863 = vmatprep.subr.mxu0 0.0
        %2864 = vmatpush1.msra.mxu0 0.0
        %2865 = vmatprep.subr.mxu0 0.0
        %2866 = vmatpush1.msra.mxu0 0.0
        %2867 = vmatprep.subr.mxu0 0.0
        %2868 = vmatpush1.msra.mxu0 0.0
        %2869 = vmatprep.subr.mxu0 0.0
        %2870 = vmatpush1.msra.mxu0 0.0
        %2871 = vmatprep.subr.mxu0 0.0
        %2872 = vmatpush1.msra.mxu0 0.0
        %2873 = vmatprep.subr.mxu0 0.0
        %2874 = vmatpush1.msra.mxu0 0.0
        %2875 = vmatprep.subr.mxu0 0.0
        %2876 = vmatpush1.msra.mxu0 0.0
        %2877 = vmatprep.subr.mxu0 0.0
        %2878 = vmatpush1.msra.mxu0 0.0
        %2879 = vmatprep.subr.mxu0 0.0
        %2880 = vmatpush1.msra.mxu0 0.0
        %2881 = vmatprep.mubr.f32.mxu0 0.0
        %v2882 = vand.u32 %v2388, 4294901760
        %2883 = vmatmul.mubr.f32.gmra.mrb[0].mxu0 %v2882
        %v2884 = vpop.f32.mrb[0].mxu0
        %v2885 = vadd.f32 %v2806, %v2884
        %v2886 = vpop.f32.mrb[0].mxu0
        %2887 = vmatprep.mubr.f32.mxu0 0.0
        %v2888 = vand.u32 %v2390, 4294901760
        %2889 = vmatmul.mubr.f32.gmra.mrb[0].mxu0 %v2888
        %v2890 = vpop.f32.mrb[0].mxu0
        %v2891 = vadd.f32 %v2812, %v2890
        %v2892 = vpop.f32.mrb[0].mxu0
        %2893 = vdwg.mxu0
        %2894 = vrot.lane.b32.xlu0 %v845, 64
        %v2895 = vpop.permute.xlu0 %2894
        %2896 = vrot.lane.b32.xlu0 %v851, 64
        %v2897 = vpop.permute.xlu0 %2896
        %v2898 = vsel %vm289, %v2895, 0
        %v2900 = vsel %vm289, %v2897, 0
        %2902 = vmatprep.subr.mxu0 0.0
        %v2903 = vand.u32 %v854, 4294901760
        %2904 = vmatpush1.msra.mxu0 %v2903
        %2905 = vmatprep.subr.mxu0 0.0
        %v2906 = vand.u32 %v855, 4294901760
        %2907 = vmatpush1.msra.mxu0 %v2906
        %2908 = vmatprep.subr.mxu0 0.0
        %2909 = vmatpush1.msra.mxu0 0.0
        %2910 = vmatprep.subr.mxu0 0.0
        %2911 = vmatpush1.msra.mxu0 0.0
        %2912 = vmatprep.subr.mxu0 0.0
        %2913 = vmatpush1.msra.mxu0 0.0
        %2914 = vmatprep.subr.mxu0 0.0
        %2915 = vmatpush1.msra.mxu0 0.0
        %2916 = vmatprep.subr.mxu0 0.0
        %2917 = vmatpush1.msra.mxu0 0.0
        %2918 = vmatprep.subr.mxu0 0.0
        %2919 = vmatpush1.msra.mxu0 0.0
        %2920 = vmatprep.subr.mxu0 0.0
        %2921 = vmatpush1.msra.mxu0 0.0
        %2922 = vmatprep.subr.mxu0 0.0
        %2923 = vmatpush1.msra.mxu0 0.0
        %2924 = vmatprep.subr.mxu0 0.0
        %2925 = vmatpush1.msra.mxu0 0.0
        %2926 = vmatprep.subr.mxu0 0.0
        %2927 = vmatpush1.msra.mxu0 0.0
        %2928 = vmatprep.subr.mxu0 0.0
        %2929 = vmatpush1.msra.mxu0 0.0
        %2930 = vmatprep.subr.mxu0 0.0
        %2931 = vmatpush1.msra.mxu0 0.0
        %2932 = vmatprep.subr.mxu0 0.0
        %2933 = vmatpush1.msra.mxu0 0.0
        %2934 = vmatprep.subr.mxu0 0.0
        %2935 = vmatpush1.msra.mxu0 0.0
        %2936 = vmatprep.subr.mxu0 0.0
        %2937 = vmatpush1.msra.mxu0 0.0
        %2938 = vmatprep.subr.mxu0 0.0
        %2939 = vmatpush1.msra.mxu0 0.0
        %2940 = vmatprep.subr.mxu0 0.0
        %2941 = vmatpush1.msra.mxu0 0.0
        %2942 = vmatprep.subr.mxu0 0.0
        %2943 = vmatpush1.msra.mxu0 0.0
        %2944 = vmatprep.subr.mxu0 0.0
        %2945 = vmatpush1.msra.mxu0 0.0
        %2946 = vmatprep.subr.mxu0 0.0
        %2947 = vmatpush1.msra.mxu0 0.0
        %2948 = vmatprep.subr.mxu0 0.0
        %2949 = vmatpush1.msra.mxu0 0.0
        %2950 = vmatprep.subr.mxu0 0.0
        %2951 = vmatpush1.msra.mxu0 0.0
        %2952 = vmatprep.subr.mxu0 0.0
        %2953 = vmatpush1.msra.mxu0 0.0
        %2954 = vmatprep.subr.mxu0 0.0
        %2955 = vmatpush1.msra.mxu0 0.0
        %2956 = vmatprep.subr.mxu0 0.0
        %2957 = vmatpush1.msra.mxu0 0.0
        %2958 = vmatprep.subr.mxu0 0.0
        %2959 = vmatpush1.msra.mxu0 0.0
        %2960 = vmatprep.subr.mxu0 0.0
        %2961 = vmatpush1.msra.mxu0 0.0
        %2962 = vmatprep.subr.mxu0 0.0
        %2963 = vmatpush1.msra.mxu0 0.0
        %2964 = vmatprep.subr.mxu0 0.0
        %2965 = vmatpush1.msra.mxu0 0.0
        %2966 = vmatprep.subr.mxu0 0.0
        %2967 = vmatpush1.msra.mxu0 0.0
        %2968 = vmatprep.mubr.f32.mxu0 0.0
        %v2969 = vand.u32 %v2898, 4294901760
        %v2970 = vsub.f32 %v2898, %v2969
        %v2971 = vand.u32 %v2970, 4294901760
        %v2972 = vsub.f32 %v2970, %v2971
        %v2973 = vand.u32 %v2972, 4294901760
        %2974 = vmatmul.mubr.f32.gmra.mrb[0].mxu0 %v2973
        %v2975 = vpop.f32.mrb[0].mxu0
        %v2976 = vadd.f32 0.0, %v2975
        %v2977 = vpop.f32.mrb[0].mxu0
        %2978 = vmatprep.mubr.f32.mxu0 0.0
        %v2979 = vand.u32 %v2900, 4294901760
        %v2980 = vsub.f32 %v2900, %v2979
        %v2981 = vand.u32 %v2980, 4294901760
        %v2982 = vsub.f32 %v2980, %v2981
        %v2983 = vand.u32 %v2982, 4294901760
        %2984 = vmatmul.mubr.f32.gmra.mrb[0].mxu0 %v2983
        %v2985 = vpop.f32.mrb[0].mxu0
        %v2986 = vadd.f32 0.0, %v2985
        %v2987 = vpop.f32.mrb[0].mxu0
        %2988 = vdwg.mxu0
        %2989 = vmatprep.subr.mxu0 0.0
        %v2990 = vand.u32 %v854, 4294901760
        %v2991 = vsub.f32 %v854, %v2990
        %v2992 = vand.u32 %v2991, 4294901760
        %v2993 = vsub.f32 %v2991, %v2992
        %v2994 = vand.u32 %v2993, 4294901760
        %2995 = vmatpush1.msra.mxu0 %v2994
        %2996 = vmatprep.subr.mxu0 0.0
        %v2997 = vand.u32 %v855, 4294901760
        %v2998 = vsub.f32 %v855, %v2997
        %v2999 = vand.u32 %v2998, 4294901760
        %v3000 = vsub.f32 %v2998, %v2999
        %v3001 = vand.u32 %v3000, 4294901760
        %3002 = vmatpush1.msra.mxu0 %v3001
        %3003 = vmatprep.subr.mxu0 0.0
        %3004 = vmatpush1.msra.mxu0 0.0
        %3005 = vmatprep.subr.mxu0 0.0
        %3006 = vmatpush1.msra.mxu0 0.0
        %3007 = vmatprep.subr.mxu0 0.0
        %3008 = vmatpush1.msra.mxu0 0.0
        %3009 = vmatprep.subr.mxu0 0.0
        %3010 = vmatpush1.msra.mxu0 0.0
        %3011 = vmatprep.subr.mxu0 0.0
        %3012 = vmatpush1.msra.mxu0 0.0
        %3013 = vmatprep.subr.mxu0 0.0
        %3014 = vmatpush1.msra.mxu0 0.0
        %3015 = vmatprep.subr.mxu0 0.0
        %3016 = vmatpush1.msra.mxu0 0.0
        %3017 = vmatprep.subr.mxu0 0.0
        %3018 = vmatpush1.msra.mxu0 0.0
        %3019 = vmatprep.subr.mxu0 0.0
        %3020 = vmatpush1.msra.mxu0 0.0
        %3021 = vmatprep.subr.mxu0 0.0
        %3022 = vmatpush1.msra.mxu0 0.0
        %3023 = vmatprep.subr.mxu0 0.0
        %3024 = vmatpush1.msra.mxu0 0.0
        %3025 = vmatprep.subr.mxu0 0.0
        %3026 = vmatpush1.msra.mxu0 0.0
        %3027 = vmatprep.subr.mxu0 0.0
        %3028 = vmatpush1.msra.mxu0 0.0
        %3029 = vmatprep.subr.mxu0 0.0
        %3030 = vmatpush1.msra.mxu0 0.0
        %3031 = vmatprep.subr.mxu0 0.0
        %3032 = vmatpush1.msra.mxu0 0.0
        %3033 = vmatprep.subr.mxu0 0.0
        %3034 = vmatpush1.msra.mxu0 0.0
        %3035 = vmatprep.subr.mxu0 0.0
        %3036 = vmatpush1.msra.mxu0 0.0
        %3037 = vmatprep.subr.mxu0 0.0
        %3038 = vmatpush1.msra.mxu0 0.0
        %3039 = vmatprep.subr.mxu0 0.0
        %3040 = vmatpush1.msra.mxu0 0.0
        %3041 = vmatprep.subr.mxu0 0.0
        %3042 = vmatpush1.msra.mxu0 0.0
        %3043 = vmatprep.subr.mxu0 0.0
        %3044 = vmatpush1.msra.mxu0 0.0
        %3045 = vmatprep.subr.mxu0 0.0
        %3046 = vmatpush1.msra.mxu0 0.0
        %3047 = vmatprep.subr.mxu0 0.0
        %3048 = vmatpush1.msra.mxu0 0.0
        %3049 = vmatprep.subr.mxu0 0.0
        %3050 = vmatpush1.msra.mxu0 0.0
        %3051 = vmatprep.subr.mxu0 0.0
        %3052 = vmatpush1.msra.mxu0 0.0
        %3053 = vmatprep.subr.mxu0 0.0
        %3054 = vmatpush1.msra.mxu0 0.0
        %3055 = vmatprep.subr.mxu0 0.0
        %3056 = vmatpush1.msra.mxu0 0.0
        %3057 = vmatprep.subr.mxu0 0.0
        %3058 = vmatpush1.msra.mxu0 0.0
        %3059 = vmatprep.subr.mxu0 0.0
        %3060 = vmatpush1.msra.mxu0 0.0
        %3061 = vmatprep.subr.mxu0 0.0
        %3062 = vmatpush1.msra.mxu0 0.0
        %3063 = vmatprep.mubr.f32.mxu0 0.0
        %v3064 = vand.u32 %v2898, 4294901760
        %3065 = vmatmul.mubr.f32.gmra.mrb[0].mxu0 %v3064
        %v3066 = vpop.f32.mrb[0].mxu0
        %v3067 = vadd.f32 %v2976, %v3066
        %v3068 = vpop.f32.mrb[0].mxu0
        %3069 = vmatprep.mubr.f32.mxu0 0.0
        %v3070 = vand.u32 %v2900, 4294901760
        %3071 = vmatmul.mubr.f32.gmra.mrb[0].mxu0 %v3070
        %v3072 = vpop.f32.mrb[0].mxu0
        %v3073 = vadd.f32 %v2986, %v3072
        %v3074 = vpop.f32.mrb[0].mxu0
        %3075 = vdwg.mxu0
        %3076 = vmatprep.subr.mxu0 0.0
        %v3077 = vand.u32 %v854, 4294901760
        %v3078 = vsub.f32 %v854, %v3077
        %3079 = vmatpush1.msra.mxu0 %v3078
        %3080 = vmatprep.subr.mxu0 0.0
        %v3081 = vand.u32 %v855, 4294901760
        %v3082 = vsub.f32 %v855, %v3081
        %3083 = vmatpush1.msra.mxu0 %v3082
        %3084 = vmatprep.subr.mxu0 0.0
        %3085 = vmatpush1.msra.mxu0 0.0
        %3086 = vmatprep.subr.mxu0 0.0
        %3087 = vmatpush1.msra.mxu0 0.0
        %3088 = vmatprep.subr.mxu0 0.0
        %3089 = vmatpush1.msra.mxu0 0.0
        %3090 = vmatprep.subr.mxu0 0.0
        %3091 = vmatpush1.msra.mxu0 0.0
        %3092 = vmatprep.subr.mxu0 0.0
        %3093 = vmatpush1.msra.mxu0 0.0
        %3094 = vmatprep.subr.mxu0 0.0
        %3095 = vmatpush1.msra.mxu0 0.0
        %3096 = vmatprep.subr.mxu0 0.0
        %3097 = vmatpush1.msra.mxu0 0.0
        %3098 = vmatprep.subr.mxu0 0.0
        %3099 = vmatpush1.msra.mxu0 0.0
        %3100 = vmatprep.subr.mxu0 0.0
        %3101 = vmatpush1.msra.mxu0 0.0
        %3102 = vmatprep.subr.mxu0 0.0
        %3103 = vmatpush1.msra.mxu0 0.0
        %3104 = vmatprep.subr.mxu0 0.0
        %3105 = vmatpush1.msra.mxu0 0.0
        %3106 = vmatprep.subr.mxu0 0.0
        %3107 = vmatpush1.msra.mxu0 0.0
        %3108 = vmatprep.subr.mxu0 0.0
        %3109 = vmatpush1.msra.mxu0 0.0
        %3110 = vmatprep.subr.mxu0 0.0
        %3111 = vmatpush1.msra.mxu0 0.0
        %3112 = vmatprep.subr.mxu0 0.0
        %3113 = vmatpush1.msra.mxu0 0.0
        %3114 = vmatprep.subr.mxu0 0.0
        %3115 = vmatpush1.msra.mxu0 0.0
        %3116 = vmatprep.subr.mxu0 0.0
        %3117 = vmatpush1.msra.mxu0 0.0
        %3118 = vmatprep.subr.mxu0 0.0
        %3119 = vmatpush1.msra.mxu0 0.0
        %3120 = vmatprep.subr.mxu0 0.0
        %3121 = vmatpush1.msra.mxu0 0.0
        %3122 = vmatprep.subr.mxu0 0.0
        %3123 = vmatpush1.msra.mxu0 0.0
        %3124 = vmatprep.subr.mxu0 0.0
        %3125 = vmatpush1.msra.mxu0 0.0
        %3126 = vmatprep.subr.mxu0 0.0
        %3127 = vmatpush1.msra.mxu0 0.0
        %3128 = vmatprep.subr.mxu0 0.0
        %3129 = vmatpush1.msra.mxu0 0.0
        %3130 = vmatprep.subr.mxu0 0.0
        %3131 = vmatpush1.msra.mxu0 0.0
        %3132 = vmatprep.subr.mxu0 0.0
        %3133 = vmatpush1.msra.mxu0 0.0
        %3134 = vmatprep.subr.mxu0 0.0
        %3135 = vmatpush1.msra.mxu0 0.0
        %3136 = vmatprep.subr.mxu0 0.0
        %3137 = vmatpush1.msra.mxu0 0.0
        %3138 = vmatprep.subr.mxu0 0.0
        %3139 = vmatpush1.msra.mxu0 0.0
        %3140 = vmatprep.subr.mxu0 0.0
        %3141 = vmatpush1.msra.mxu0 0.0
        %3142 = vmatprep.subr.mxu0 0.0
        %3143 = vmatpush1.msra.mxu0 0.0
        %3144 = vmatprep.mubr.f32.mxu0 0.0
        %v3145 = vand.u32 %v2898, 4294901760
        %v3146 = vsub.f32 %v2898, %v3145
        %3147 = vmatmul.mubr.f32.gmra.mrb[0].mxu0 %v3146
        %v3148 = vpop.f32.mrb[0].mxu0
        %v3149 = vadd.f32 %v3067, %v3148
        %v3150 = vpop.f32.mrb[0].mxu0
        %3151 = vmatprep.mubr.f32.mxu0 0.0
        %v3152 = vand.u32 %v2900, 4294901760
        %v3153 = vsub.f32 %v2900, %v3152
        %3154 = vmatmul.mubr.f32.gmra.mrb[0].mxu0 %v3153
        %v3155 = vpop.f32.mrb[0].mxu0
        %v3156 = vadd.f32 %v3073, %v3155
        %v3157 = vpop.f32.mrb[0].mxu0
        %3158 = vdwg.mxu0
        %3159 = vmatprep.subr.mxu0 0.0
        %v3160 = vand.u32 %v854, 4294901760
        %3161 = vmatpush1.msra.mxu0 %v3160
        %3162 = vmatprep.subr.mxu0 0.0
        %v3163 = vand.u32 %v855, 4294901760
        %3164 = vmatpush1.msra.mxu0 %v3163
        %3165 = vmatprep.subr.mxu0 0.0
        %3166 = vmatpush1.msra.mxu0 0.0
        %3167 = vmatprep.subr.mxu0 0.0
        %3168 = vmatpush1.msra.mxu0 0.0
        %3169 = vmatprep.subr.mxu0 0.0
        %3170 = vmatpush1.msra.mxu0 0.0
        %3171 = vmatprep.subr.mxu0 0.0
        %3172 = vmatpush1.msra.mxu0 0.0
        %3173 = vmatprep.subr.mxu0 0.0
        %3174 = vmatpush1.msra.mxu0 0.0
        %3175 = vmatprep.subr.mxu0 0.0
        %3176 = vmatpush1.msra.mxu0 0.0
        %3177 = vmatprep.subr.mxu0 0.0
        %3178 = vmatpush1.msra.mxu0 0.0
        %3179 = vmatprep.subr.mxu0 0.0
        %3180 = vmatpush1.msra.mxu0 0.0
        %3181 = vmatprep.subr.mxu0 0.0
        %3182 = vmatpush1.msra.mxu0 0.0
        %3183 = vmatprep.subr.mxu0 0.0
        %3184 = vmatpush1.msra.mxu0 0.0
        %3185 = vmatprep.subr.mxu0 0.0
        %3186 = vmatpush1.msra.mxu0 0.0
        %3187 = vmatprep.subr.mxu0 0.0
        %3188 = vmatpush1.msra.mxu0 0.0
        %3189 = vmatprep.subr.mxu0 0.0
        %3190 = vmatpush1.msra.mxu0 0.0
        %3191 = vmatprep.subr.mxu0 0.0
        %3192 = vmatpush1.msra.mxu0 0.0
        %3193 = vmatprep.subr.mxu0 0.0
        %3194 = vmatpush1.msra.mxu0 0.0
        %3195 = vmatprep.subr.mxu0 0.0
        %3196 = vmatpush1.msra.mxu0 0.0
        %3197 = vmatprep.subr.mxu0 0.0
        %3198 = vmatpush1.msra.mxu0 0.0
        %3199 = vmatprep.subr.mxu0 0.0
        %3200 = vmatpush1.msra.mxu0 0.0
        %3201 = vmatprep.subr.mxu0 0.0
        %3202 = vmatpush1.msra.mxu0 0.0
        %3203 = vmatprep.subr.mxu0 0.0
        %3204 = vmatpush1.msra.mxu0 0.0
        %3205 = vmatprep.subr.mxu0 0.0
        %3206 = vmatpush1.msra.mxu0 0.0
        %3207 = vmatprep.subr.mxu0 0.0
        %3208 = vmatpush1.msra.mxu0 0.0
        %3209 = vmatprep.subr.mxu0 0.0
        %3210 = vmatpush1.msra.mxu0 0.0
        %3211 = vmatprep.subr.mxu0 0.0
        %3212 = vmatpush1.msra.mxu0 0.0
        %3213 = vmatprep.subr.mxu0 0.0
        %3214 = vmatpush1.msra.mxu0 0.0
        %3215 = vmatprep.subr.mxu0 0.0
        %3216 = vmatpush1.msra.mxu0 0.0
        %3217 = vmatprep.subr.mxu0 0.0
        %3218 = vmatpush1.msra.mxu0 0.0
        %3219 = vmatprep.subr.mxu0 0.0
        %3220 = vmatpush1.msra.mxu0 0.0
        %3221 = vmatprep.subr.mxu0 0.0
        %3222 = vmatpush1.msra.mxu0 0.0
        %3223 = vmatprep.subr.mxu0 0.0
        %3224 = vmatpush1.msra.mxu0 0.0
        %3225 = vmatprep.mubr.f32.mxu0 0.0
        %v3226 = vand.u32 %v2898, 4294901760
        %v3227 = vsub.f32 %v2898, %v3226
        %v3228 = vand.u32 %v3227, 4294901760
        %3229 = vmatmul.mubr.f32.gmra.mrb[0].mxu0 %v3228
        %v3230 = vpop.f32.mrb[0].mxu0
        %v3231 = vadd.f32 %v3149, %v3230
        %v3232 = vpop.f32.mrb[0].mxu0
        %3233 = vmatprep.mubr.f32.mxu0 0.0
        %v3234 = vand.u32 %v2900, 4294901760
        %v3235 = vsub.f32 %v2900, %v3234
        %v3236 = vand.u32 %v3235, 4294901760
        %3237 = vmatmul.mubr.f32.gmra.mrb[0].mxu0 %v3236
        %v3238 = vpop.f32.mrb[0].mxu0
        %v3239 = vadd.f32 %v3156, %v3238
        %v3240 = vpop.f32.mrb[0].mxu0
        %3241 = vdwg.mxu0
        %3242 = vmatprep.subr.mxu0 0.0
        %v3243 = vand.u32 %v854, 4294901760
        %v3244 = vsub.f32 %v854, %v3243
        %v3245 = vand.u32 %v3244, 4294901760
        %3246 = vmatpush1.msra.mxu0 %v3245
        %3247 = vmatprep.subr.mxu0 0.0
        %v3248 = vand.u32 %v855, 4294901760
        %v3249 = vsub.f32 %v855, %v3248
        %v3250 = vand.u32 %v3249, 4294901760
        %3251 = vmatpush1.msra.mxu0 %v3250
        %3252 = vmatprep.subr.mxu0 0.0
        %3253 = vmatpush1.msra.mxu0 0.0
        %3254 = vmatprep.subr.mxu0 0.0
        %3255 = vmatpush1.msra.mxu0 0.0
        %3256 = vmatprep.subr.mxu0 0.0
        %3257 = vmatpush1.msra.mxu0 0.0
        %3258 = vmatprep.subr.mxu0 0.0
        %3259 = vmatpush1.msra.mxu0 0.0
        %3260 = vmatprep.subr.mxu0 0.0
        %3261 = vmatpush1.msra.mxu0 0.0
        %3262 = vmatprep.subr.mxu0 0.0
        %3263 = vmatpush1.msra.mxu0 0.0
        %3264 = vmatprep.subr.mxu0 0.0
        %3265 = vmatpush1.msra.mxu0 0.0
        %3266 = vmatprep.subr.mxu0 0.0
        %3267 = vmatpush1.msra.mxu0 0.0
        %3268 = vmatprep.subr.mxu0 0.0
        %3269 = vmatpush1.msra.mxu0 0.0
        %3270 = vmatprep.subr.mxu0 0.0
        %3271 = vmatpush1.msra.mxu0 0.0
        %3272 = vmatprep.subr.mxu0 0.0
        %3273 = vmatpush1.msra.mxu0 0.0
        %3274 = vmatprep.subr.mxu0 0.0
        %3275 = vmatpush1.msra.mxu0 0.0
        %3276 = vmatprep.subr.mxu0 0.0
        %3277 = vmatpush1.msra.mxu0 0.0
        %3278 = vmatprep.subr.mxu0 0.0
        %3279 = vmatpush1.msra.mxu0 0.0
        %3280 = vmatprep.subr.mxu0 0.0
        %3281 = vmatpush1.msra.mxu0 0.0
        %3282 = vmatprep.subr.mxu0 0.0
        %3283 = vmatpush1.msra.mxu0 0.0
        %3284 = vmatprep.subr.mxu0 0.0
        %3285 = vmatpush1.msra.mxu0 0.0
        %3286 = vmatprep.subr.mxu0 0.0
        %3287 = vmatpush1.msra.mxu0 0.0
        %3288 = vmatprep.subr.mxu0 0.0
        %3289 = vmatpush1.msra.mxu0 0.0
        %3290 = vmatprep.subr.mxu0 0.0
        %3291 = vmatpush1.msra.mxu0 0.0
        %3292 = vmatprep.subr.mxu0 0.0
        %3293 = vmatpush1.msra.mxu0 0.0
        %3294 = vmatprep.subr.mxu0 0.0
        %3295 = vmatpush1.msra.mxu0 0.0
        %3296 = vmatprep.subr.mxu0 0.0
        %3297 = vmatpush1.msra.mxu0 0.0
        %3298 = vmatprep.subr.mxu0 0.0
        %3299 = vmatpush1.msra.mxu0 0.0
        %3300 = vmatprep.subr.mxu0 0.0
        %3301 = vmatpush1.msra.mxu0 0.0
        %3302 = vmatprep.subr.mxu0 0.0
        %3303 = vmatpush1.msra.mxu0 0.0
        %3304 = vmatprep.subr.mxu0 0.0
        %3305 = vmatpush1.msra.mxu0 0.0
        %3306 = vmatprep.subr.mxu0 0.0
        %3307 = vmatpush1.msra.mxu0 0.0
        %3308 = vmatprep.subr.mxu0 0.0
        %3309 = vmatpush1.msra.mxu0 0.0
        %3310 = vmatprep.subr.mxu0 0.0
        %3311 = vmatpush1.msra.mxu0 0.0
        %3312 = vmatprep.mubr.f32.mxu0 0.0
        %v3313 = vand.u32 %v2898, 4294901760
        %3314 = vmatmul.mubr.f32.gmra.mrb[0].mxu0 %v3313
        %v3315 = vpop.f32.mrb[0].mxu0
        %v3316 = vadd.f32 %v3231, %v3315
        %v3317 = vpop.f32.mrb[0].mxu0
        %3318 = vmatprep.mubr.f32.mxu0 0.0
        %v3319 = vand.u32 %v2900, 4294901760
        %3320 = vmatmul.mubr.f32.gmra.mrb[0].mxu0 %v3319
        %v3321 = vpop.f32.mrb[0].mxu0
        %v3322 = vadd.f32 %v3239, %v3321
        %v3323 = vpop.f32.mrb[0].mxu0
        %3324 = vdwg.mxu0
        %3325 = vmatprep.subr.mxu0 0.0
        %v3326 = vand.u32 %v854, 4294901760
        %3327 = vmatpush1.msra.mxu0 %v3326
        %3328 = vmatprep.subr.mxu0 0.0
        %v3329 = vand.u32 %v855, 4294901760
        %3330 = vmatpush1.msra.mxu0 %v3329
        %3331 = vmatprep.subr.mxu0 0.0
        %3332 = vmatpush1.msra.mxu0 0.0
        %3333 = vmatprep.subr.mxu0 0.0
        %3334 = vmatpush1.msra.mxu0 0.0
        %3335 = vmatprep.subr.mxu0 0.0
        %3336 = vmatpush1.msra.mxu0 0.0
        %3337 = vmatprep.subr.mxu0 0.0
        %3338 = vmatpush1.msra.mxu0 0.0
        %3339 = vmatprep.subr.mxu0 0.0
        %3340 = vmatpush1.msra.mxu0 0.0
        %3341 = vmatprep.subr.mxu0 0.0
        %3342 = vmatpush1.msra.mxu0 0.0
        %3343 = vmatprep.subr.mxu0 0.0
        %3344 = vmatpush1.msra.mxu0 0.0
        %3345 = vmatprep.subr.mxu0 0.0
        %3346 = vmatpush1.msra.mxu0 0.0
        %3347 = vmatprep.subr.mxu0 0.0
        %3348 = vmatpush1.msra.mxu0 0.0
        %3349 = vmatprep.subr.mxu0 0.0
        %3350 = vmatpush1.msra.mxu0 0.0
        %3351 = vmatprep.subr.mxu0 0.0
        %3352 = vmatpush1.msra.mxu0 0.0
        %3353 = vmatprep.subr.mxu0 0.0
        %3354 = vmatpush1.msra.mxu0 0.0
        %3355 = vmatprep.subr.mxu0 0.0
        %3356 = vmatpush1.msra.mxu0 0.0
        %3357 = vmatprep.subr.mxu0 0.0
        %3358 = vmatpush1.msra.mxu0 0.0
        %3359 = vmatprep.subr.mxu0 0.0
        %3360 = vmatpush1.msra.mxu0 0.0
        %3361 = vmatprep.subr.mxu0 0.0
        %3362 = vmatpush1.msra.mxu0 0.0
        %3363 = vmatprep.subr.mxu0 0.0
        %3364 = vmatpush1.msra.mxu0 0.0
        %3365 = vmatprep.subr.mxu0 0.0
        %3366 = vmatpush1.msra.mxu0 0.0
        %3367 = vmatprep.subr.mxu0 0.0
        %3368 = vmatpush1.msra.mxu0 0.0
        %3369 = vmatprep.subr.mxu0 0.0
        %3370 = vmatpush1.msra.mxu0 0.0
        %3371 = vmatprep.subr.mxu0 0.0
        %3372 = vmatpush1.msra.mxu0 0.0
        %3373 = vmatprep.subr.mxu0 0.0
        %3374 = vmatpush1.msra.mxu0 0.0
        %3375 = vmatprep.subr.mxu0 0.0
        %3376 = vmatpush1.msra.mxu0 0.0
        %3377 = vmatprep.subr.mxu0 0.0
        %3378 = vmatpush1.msra.mxu0 0.0
        %3379 = vmatprep.subr.mxu0 0.0
        %3380 = vmatpush1.msra.mxu0 0.0
        %3381 = vmatprep.subr.mxu0 0.0
        %3382 = vmatpush1.msra.mxu0 0.0
        %3383 = vmatprep.subr.mxu0 0.0
        %3384 = vmatpush1.msra.mxu0 0.0
        %3385 = vmatprep.subr.mxu0 0.0
        %3386 = vmatpush1.msra.mxu0 0.0
        %3387 = vmatprep.subr.mxu0 0.0
        %3388 = vmatpush1.msra.mxu0 0.0
        %3389 = vmatprep.subr.mxu0 0.0
        %3390 = vmatpush1.msra.mxu0 0.0
        %3391 = vmatprep.mubr.f32.mxu0 0.0
        %v3392 = vand.u32 %v2898, 4294901760
        %3393 = vmatmul.mubr.f32.gmra.mrb[0].mxu0 %v3392
        %v3394 = vpop.f32.mrb[0].mxu0
        %v3395 = vadd.f32 %v3316, %v3394
        %v3396 = vpop.f32.mrb[0].mxu0
        %3397 = vmatprep.mubr.f32.mxu0 0.0
        %v3398 = vand.u32 %v2900, 4294901760
        %3399 = vmatmul.mubr.f32.gmra.mrb[0].mxu0 %v3398
        %v3400 = vpop.f32.mrb[0].mxu0
        %v3401 = vadd.f32 %v3322, %v3400
        %v3402 = vpop.f32.mrb[0].mxu0
        %3403 = vdwg.mxu0
        %v3404 = vmul.f32 %v1355, %v1355
        %v3405 = vmul.f32 %v1361, %v1361
        %v3406 = vmul.f32 %v1865, %v1865
        %v3407 = vmul.f32 %v1871, %v1871
        %v3408 = vmul.f32 %v1355, %v1865
        %v3409 = vmul.f32 %v1361, %v1871
        %v3410 = vsub.f32 %v2375, %v3404
        %v3411 = vsub.f32 %v2381, %v3405
        %v3412 = vsub.f32 %v2885, %v3406
        %v3413 = vsub.f32 %v2891, %v3407
        %v3414 = vsub.f32 %v3395, %v3408
        %v3415 = vsub.f32 %v3401, %v3409
        %v3416 = vmul.f32 %v3408, 2.0
        %v3417 = vmul.f32 %v3409, 2.0
        %v3418 = vadd.f32 %v3416, 0.0001
        %v3419 = vadd.f32 %v3417, 0.0001
        %v3420 = vmul.f32 %v3414, 2.0
        %v3421 = vmul.f32 %v3415, 2.0
        %v3422 = vadd.f32 %v3420, 0.0009
        %v3423 = vadd.f32 %v3421, 0.0009
        %v3424 = vmul.f32 %v3418, %v3422
        %v3425 = vmul.f32 %v3419, %v3423
        %v3426 = vadd.f32 %v3404, %v3406
        %v3427 = vadd.f32 %v3405, %v3407
        %v3428 = vadd.f32 %v3426, 0.0001
        %v3429 = vadd.f32 %v3427, 0.0001
        %v3430 = vadd.f32 %v3410, %v3412
        %v3431 = vadd.f32 %v3411, %v3413
        %v3432 = vadd.f32 %v3430, 0.0009
        %v3433 = vadd.f32 %v3431, 0.0009
        %v3434 = vmul.f32 %v3428, %v3432
        %v3435 = vmul.f32 %v3429, %v3433
        %v3436 = vrcp.pop %v3434
        %v3437 = vmul.f32 %v3424, %v3436
        %v3438 = vrcp.pop %v3435
        %v3439 = vmul.f32 %v3425, %v3438
        %v3440 = vsel %vm289, %v3437, 0.0
        %v3441 = vsel %vm289, %v3439, 0.0
        %v3442 = vadd.f32 %v3440, %v3441
        %3443 = vadd.xlane.f32.xlu0 %v3442
        %v3444 = vpop.xlane.xlu0 %3443
        %v3445 = vrot.slane %v3444, 4
        %v3446 = vadd.f32 %v3444, %v3445
        %v3447 = vrot.slane %v3446, 2
        %v3448 = vadd.f32 %v3446, %v3447
        %v3449 = vrot.slane %v3448, 1
        %v3450 = vadd.f32 %v3448, %v3449
        %s3451 = vtos %v3450
        %v3452 = vstv %s3451
        %3453 = vst [vmem:[%s284] sm:$0xff] %v3452
        %s3454 = sand.u32 %s127, 1
        %s3455 = scalar_lea.sflag [#allocation5], %s3454
        %s3456 = sand.u32 %s127, 1
        %s3457 = smul.addr %s3456, 8
        %s3458 = scalar_lea.vmem [#allocation11], %s3457
        // Predicated region
        $region53: #{tpu_custom_call.1} parent=35 // pred_check
          %p3459 = pneg %p137
        $region54: #{tpu_custom_call.1} parent=35 // pred_check_branch
          %3461 = sbr.rel (%p3459) target = $region56
        $region55: #{tpu_custom_call.1} parent=35 // pred_region
          %s3463 = ssub.s32 128, 128
          %3464 = vsyncadd %s3455, %s3463
          %s3465 = smul.addr %s25, 128
          %s3466 = scalar_lea.hbm %s4, %s3465
          %s3468 = sshll.u32 %s3458, 4
          %s3469 = int_to_ptr.vmem [resolvable:$true] %s3468
          %3471 = dma.vmem_to_hbm [thread:$0]  %s3469, 128, %s3466, %s3455
        $region56: #{tpu_custom_call.1} parent=35 // pred_fallthru
          _
      $region36: #{tpu_custom_call.1} parent=5 // pred_fallthru
        _
      %p3472 = scmp.le.s32.totalorder 2, %s20
      // Predicated region
      $region57: #{tpu_custom_call.1} parent=5 // pred_check
        %p3473 = pneg %p3472
      $region58: #{tpu_custom_call.1} parent=5 // pred_check_branch
        %3475 = sbr.rel (%p3473) target = $region60
      $region59: #{tpu_custom_call.1} parent=5 // pred_region
        %s3476 = ssub.s32 %s20, 2
        // Predicated region
        $region61: #{tpu_custom_call.1} parent=59 // pred_check
          %p3477 = pneg %p143
        $region62: #{tpu_custom_call.1} parent=59 // pred_check_branch
          %3479 = sbr.rel (%p3477) target = $region64
        $region63: #{tpu_custom_call.1} parent=59 // pred_region
          %s3480 = sand.u32 %s128, 1
          %s3481 = scalar_lea.sflag [#allocation5], %s3480
          %s3482 = sand.u32 %s128, 1
          %s3483 = smul.addr %s3482, 8
          %s3484 = scalar_lea.vmem [#allocation11], %s3483
          %3485 = dma.done %s3481, 128
        $region64: #{tpu_custom_call.1} parent=59 // pred_fallthru
          _
      $region60: #{tpu_custom_call.1} parent=5 // pred_fallthru
        _
    $region6: #{tpu_custom_call.1} parent=1 // loop_footer
      %s24 = sadd.s32 1, %s20
    $region7: #{tpu_custom_call.1} parent=1 // loop_footer_branch
      %19 = sbr.rel target = $region3
    $region8: #{tpu_custom_call.1} parent=1 // loop_exit
      _
    %3486 = vsyncpa [#allocation4], 1
    %s3487 = scalar_lea.sflag [#allocation4], 1
    %3488 = vsyncpa %s3487, 1
    %3489 = vsyncpa [#allocation7], 1
    %s3490 = scalar_lea.sflag [#allocation7], 1
    %3491 = vsyncpa %s3490, 1
    %3492 = vsyncpa [#allocation10], 1
    %3493 = vsyncpa [#allocation5], 1
    %s3494 = scalar_lea.sflag [#allocation5], 1
    %3495 = vsyncpa %s3494, 1

</llo_original>
